<compile_context>
chip_gen: v7x
topology: tpu7x:2x2x1
jax: 0.10.0
libtpu: 0.0.40
codegen_flags: <defaults>
</compile_context>

<pallas_src>
import jax
import jax.numpy as jnp
from jax import lax
from jax.experimental import pallas as pl
from jax.experimental.pallas import tpu as pltpu


def _round_up(n, m):
    return ((n + m - 1) // m) * m


def _make_kernel(K, Cin, Cout, W, HW, Pd, XRW, NV, WT, WU):
    def kernel(x_ref, w_ref, b_ref, o_ref, xr_ref):
        # x_ref : (1, Cin, D*H*W)          w_ref : (K*Cout, K*K*Cin)
        # b_ref : (Cout, 1)                o_ref : (1, Pd, Cout, H*W)
        # xr_ref: (K*K*Cin, XRW) VMEM scratch = 9 in-plane shifted copies of x

        # ---- im2col: only the 9 misaligned in-plane (kh, kw) shifts are copied.
        # The 3 depth taps are lane-ALIGNED slices (multiples of HW = 256) of
        # these same rows and are folded into the matmul's M dimension below.
        for kh in range(K):
            for kw in range(K):
                j = kh * K + kw
                sft = kh * W + kw
                xr_ref[pl.ds(j * Cin, Cin), :] = x_ref[0, :, sft:sft + XRW]

        # ---- Conv3d as ONE MXU contraction ---------------------------------
        # (K*Cout, K*K*Cin) @ (K*K*Cin, XRW); row block kd holds the kd-th
        # depth tap's filters.  DEFAULT precision: single bf16 pass, f32 accum.
        p = jnp.dot(w_ref[...], xr_ref[...],
                    preferred_element_type=jnp.float32)        # (K*Cout, XRW)

        # recombine depth taps with lane/sublane-ALIGNED slices (no rolls)
        z = p[0:Cout, 0:NV]
        for kd in range(1, K):
            z = z + p[kd * Cout:(kd + 1) * Cout, kd * HW:kd * HW + NV]
        z = z + b_ref[...]                                     # bias broadcast

        # ---- Softmax over channels (sublane axis) --------------------------
        zmax = jnp.max(z, axis=0, keepdims=True)
        e = jnp.exp(z - zmax)
        denom = jnp.sum(e, axis=0, keepdims=True)
        s = e * pl.reciprocal(denom, approx=True)              # EUP vrcp

        # ---- two MaxPool3d(2) == one 4x4x4 stride-4 max pool ---------------
        # lane index q = d*H*W + h*W + w.  w / h use a log-tree of shifted
        # maxima (2 shifted slabs per axis); d slices are lane-aligned.
        t1 = jnp.maximum(s[:, 0:WT + 2], s[:, 1:WT + 3])
        t = jnp.maximum(t1[:, 0:WT], t1[:, 2:WT + 2])          # max over w..w+3
        u1 = jnp.maximum(t[:, 0:WU + 2 * W], t[:, W:WU + 3 * W])
        u = jnp.maximum(u1[:, 0:WU], u1[:, 2 * W:WU + 2 * W])  # max over h..h+3
        for i in range(Pd):                                    # max over d..d+3
            p_i = u[:, (4 * i) * HW:(4 * i) * HW + HW]
            for dd in range(1, 4):
                p_i = jnp.maximum(
                    p_i, u[:, (4 * i + dd) * HW:(4 * i + dd + 1) * HW])
            # valid pooled values sit at lanes (4j)*W + 4k; compacted in wrapper
            o_ref[0, i, :, :] = p_i

    return kernel


@jax.jit
def conv3d_softmax_maxpool2(x_ncdhw, w_oidhw, bias):
    B, Cin, D, H, W = x_ncdhw.shape
    Cout, Cin2, K, _, _ = w_oidhw.shape
    assert Cin2 == Cin
    Do, Ho, Wo = D - K + 1, H - K + 1, W - K + 1
    Pd, Ph, Pw = Do // 4, Ho // 4, Wo // 4      # two maxpool(2) == 4x4x4 stride 4
    HW, DHW = H * W, D * H * W

    # static in-kernel widths
    WU = 4 * Pd * HW                   # width needed after the (h, w) pooling
    WT = WU + 3 * W                    # width needed after the w pooling
    NV = _round_up(WT + 3, 128)        # conv/softmax width (lane aligned)
    XRW = NV + (K - 1) * HW            # im2col scratch width (covers kd slices)

    # static guards for the flattened-lane shift trick
    assert (K - 1) * (W + 1) + XRW <= DHW
    assert 4 * Pd + K - 1 <= D and 4 * Ph + K - 1 <= H and 4 * Pw + K - 1 <= W

    # ---- layout plumbing (reshapes / transposes only, done in the wrapper) --
    x_l = x_ncdhw.reshape(B, Cin, DHW).astype(jnp.float32)       # contiguous
    # L[kd*Cout + c, (kh*K + kw)*Cin + ci] = w[c, ci, kd, kh, kw]
    w_l = jnp.transpose(w_oidhw, (2, 0, 3, 4, 1)).reshape(K * Cout, K * K * Cin)
    w_l = w_l.astype(jnp.float32)
    b_l = bias.reshape(Cout, 1).astype(jnp.float32)

    kernel = _make_kernel(K, Cin, Cout, W, HW, Pd, XRW, NV, WT, WU)

    out_raw = pl.pallas_call(
        kernel,
        out_shape=jax.ShapeDtypeStruct((B, Pd, Cout, HW), jnp.float32),
        grid=(B,),
        in_specs=[
            pl.BlockSpec((1, Cin, DHW), lambda b: (b, 0, 0)),
            pl.BlockSpec((K * Cout, K * K * Cin), lambda b: (0, 0)),
            pl.BlockSpec((Cout, 1), lambda b: (0, 0)),
        ],
        out_specs=pl.BlockSpec((1, Pd, Cout, HW), lambda b: (b, 0, 0, 0)),
        scratch_shapes=[pltpu.VMEM((K * K * Cin, XRW), jnp.float32)],
        compiler_params=pltpu.CompilerParams(
            dimension_semantics=("parallel",),
            vmem_limit_bytes=32 * 1024 * 1024,
        ),
    )(x_l, w_l, b_l)

    # compact the valid lanes per pooled plane and go back to NCDHW
    out = out_raw.reshape(B, Pd, Cout, H, W)[:, :, :, 0:4 * Ph:4, 0:4 * Pw:4]
    return jnp.transpose(out, (0, 2, 1, 3, 4))           # (B, Cout, Pd, Ph, Pw)


def _reference(x_ncdhw, w_oidhw, bias):
    y = lax.conv_general_dilated(
        x_ncdhw, w_oidhw, window_strides=(1, 1, 1), padding="VALID",
        dimension_numbers=("NCDHW", "OIDHW", "NCDHW"),
        precision=lax.Precision.HIGHEST)
    y = y + bias.reshape(1, -1, 1, 1, 1)
    s = jax.nn.softmax(y, axis=1)

    def mp(t):
        return lax.reduce_window(t, -jnp.inf, lax.max,
                                 (1, 1, 2, 2, 2), (1, 1, 2, 2, 2), "VALID")

    return mp(mp(s))


if __name__ == "__main__":
    in_channels, out_channels, kernel_size = 3, 16, 3
    B, D, H, W = 2, 16, 16, 16

    key = jax.random.PRNGKey(0)
    kx, kw, kb = jax.random.split(key, 3)
    x = jax.random.normal(kx, (B, in_channels, D, H, W), dtype=jnp.float32)
    w = 0.1 * jax.random.normal(
        kw, (out_channels, in_channels, kernel_size, kernel_size, kernel_size),
        dtype=jnp.float32)
    b = 0.1 * jax.random.normal(kb, (out_channels,), dtype=jnp.float32)

    out = conv3d_softmax_maxpool2(x, w, b)
    out = jax.block_until_ready(out)

    assert out.shape == (B, out_channels, 3, 3, 3), out.shape

    ref = _reference(x, w, b)
    err = float(jnp.max(jnp.abs(out - ref)))
    # The kernel contracts on the MXU at DEFAULT precision (bf16 operand
    # rounding, f32 accumulation) and uses the approximate EUP reciprocal in
    # the softmax, while the reference conv runs in full f32: bf16 rounding of
    # O(1) pre-softmax logits bounds the softmax-output error at ~1e-2 worst
    # case, so 2e-2 is a safe-but-meaningful bound (layout/indexing bugs would
    # produce O(0.1-1) errors).
    assert err < 2e-2, f"max abs err {err}"

    print("KERNEL_OK")
</pallas_src>

<mosaic_0001>
module attributes {stable_mosaic.version = 11 : i64} {
  func.func @kernel(%arg0: i32, %arg1: memref<1x3x4096xf32, #tpu.memory_space<vmem>>, %arg2: memref<48x27xf32, #tpu.memory_space<vmem>>, %arg3: memref<16x1xf32, #tpu.memory_space<vmem>>, %arg4: memref<1x3x16x256xf32, #tpu.memory_space<vmem>>, %arg5: memref<27x3712xf32, #tpu.memory_space<vmem>>) attributes {dimension_semantics = [#tpu.dimension_semantics<parallel>], iteration_bounds = array<i64: 2>, scalar_prefetch = 0 : i64, scratch_operands = 1 : i64, tpu.core_type = #tpu.core_type<tc>, window_params = [{transform_indices = @transform_0, window_bounds = array<i64: 1, 3, 4096>}, {pipeline_mode = #tpu.pipeline_mode<synchronous>, transform_indices = @transform_1, window_bounds = array<i64: 48, 27>}, {pipeline_mode = #tpu.pipeline_mode<synchronous>, transform_indices = @transform_2, window_bounds = array<i64: 16, 1>}, {transform_indices = @transform_3, window_bounds = array<i64: 1, 3, 16, 256>}]} {
    %c0 = arith.constant 0 : index
    %c0_0 = arith.constant 0 : index
    %c0_1 = arith.constant 0 : index
    %0 = vector.load %arg1[%c0, %c0_0, %c0_1] : memref<1x3x4096xf32, #tpu.memory_space<vmem>>, vector<1x3x3712xf32>
    %1 = vector.shape_cast %0 : vector<1x3x3712xf32> to vector<3x3712xf32>
    %c0_2 = arith.constant 0 : index
    %c0_3 = arith.constant 0 : index
    %2 = vector.load %arg5[%c0_2, %c0_3] : memref<27x3712xf32, #tpu.memory_space<vmem>>, vector<3x3712xf32>
    tpu.vector_store %arg5[%c0_2, %c0_3], %1 {strides = array<i32>} : memref<27x3712xf32, #tpu.memory_space<vmem>>, vector<3x3712xf32>,
    %c0_4 = arith.constant 0 : index
    %c0_5 = arith.constant 0 : index
    %c1 = arith.constant 1 : index
    %3 = vector.load %arg1[%c0_4, %c0_5, %c1] : memref<1x3x4096xf32, #tpu.memory_space<vmem>>, vector<1x3x3712xf32>
    %4 = vector.shape_cast %3 : vector<1x3x3712xf32> to vector<3x3712xf32>
    %c3 = arith.constant 3 : index
    %c0_6 = arith.constant 0 : index
    %5 = vector.load %arg5[%c3, %c0_6] : memref<27x3712xf32, #tpu.memory_space<vmem>>, vector<3x3712xf32>
    tpu.vector_store %arg5[%c3, %c0_6], %4 {strides = array<i32>} : memref<27x3712xf32, #tpu.memory_space<vmem>>, vector<3x3712xf32>,
    %c0_7 = arith.constant 0 : index
    %c0_8 = arith.constant 0 : index
    %c2 = arith.constant 2 : index
    %6 = vector.load %arg1[%c0_7, %c0_8, %c2] : memref<1x3x4096xf32, #tpu.memory_space<vmem>>, vector<1x3x3712xf32>
    %7 = vector.shape_cast %6 : vector<1x3x3712xf32> to vector<3x3712xf32>
    %c6 = arith.constant 6 : index
    %c0_9 = arith.constant 0 : index
    %8 = vector.load %arg5[%c6, %c0_9] : memref<27x3712xf32, #tpu.memory_space<vmem>>, vector<3x3712xf32>
    tpu.vector_store %arg5[%c6, %c0_9], %7 {strides = array<i32>} : memref<27x3712xf32, #tpu.memory_space<vmem>>, vector<3x3712xf32>,
    %c0_10 = arith.constant 0 : index
    %c0_11 = arith.constant 0 : index
    %c16 = arith.constant 16 : index
    %9 = vector.load %arg1[%c0_10, %c0_11, %c16] : memref<1x3x4096xf32, #tpu.memory_space<vmem>>, vector<1x3x3712xf32>
    %10 = vector.shape_cast %9 : vector<1x3x3712xf32> to vector<3x3712xf32>
    %c9 = arith.constant 9 : index
    %c0_12 = arith.constant 0 : index
    %11 = vector.load %arg5[%c9, %c0_12] : memref<27x3712xf32, #tpu.memory_space<vmem>>, vector<3x3712xf32>
    tpu.vector_store %arg5[%c9, %c0_12], %10 {strides = array<i32>} : memref<27x3712xf32, #tpu.memory_space<vmem>>, vector<3x3712xf32>,
    %c0_13 = arith.constant 0 : index
    %c0_14 = arith.constant 0 : index
    %c17 = arith.constant 17 : index
    %12 = vector.load %arg1[%c0_13, %c0_14, %c17] : memref<1x3x4096xf32, #tpu.memory_space<vmem>>, vector<1x3x3712xf32>
    %13 = vector.shape_cast %12 : vector<1x3x3712xf32> to vector<3x3712xf32>
    %c12 = arith.constant 12 : index
    %c0_15 = arith.constant 0 : index
    %14 = vector.load %arg5[%c12, %c0_15] : memref<27x3712xf32, #tpu.memory_space<vmem>>, vector<3x3712xf32>
    tpu.vector_store %arg5[%c12, %c0_15], %13 {strides = array<i32>} : memref<27x3712xf32, #tpu.memory_space<vmem>>, vector<3x3712xf32>,
    %c0_16 = arith.constant 0 : index
    %c0_17 = arith.constant 0 : index
    %c18 = arith.constant 18 : index
    %15 = vector.load %arg1[%c0_16, %c0_17, %c18] : memref<1x3x4096xf32, #tpu.memory_space<vmem>>, vector<1x3x3712xf32>
    %16 = vector.shape_cast %15 : vector<1x3x3712xf32> to vector<3x3712xf32>
    %c15 = arith.constant 15 : index
    %c0_18 = arith.constant 0 : index
    %17 = vector.load %arg5[%c15, %c0_18] : memref<27x3712xf32, #tpu.memory_space<vmem>>, vector<3x3712xf32>
    tpu.vector_store %arg5[%c15, %c0_18], %16 {strides = array<i32>} : memref<27x3712xf32, #tpu.memory_space<vmem>>, vector<3x3712xf32>,
    %c0_19 = arith.constant 0 : index
    %c0_20 = arith.constant 0 : index
    %c32 = arith.constant 32 : index
    %18 = vector.load %arg1[%c0_19, %c0_20, %c32] : memref<1x3x4096xf32, #tpu.memory_space<vmem>>, vector<1x3x3712xf32>
    %19 = vector.shape_cast %18 : vector<1x3x3712xf32> to vector<3x3712xf32>
    %c18_21 = arith.constant 18 : index
    %c0_22 = arith.constant 0 : index
    %20 = vector.load %arg5[%c18_21, %c0_22] : memref<27x3712xf32, #tpu.memory_space<vmem>>, vector<3x3712xf32>
    tpu.vector_store %arg5[%c18_21, %c0_22], %19 {strides = array<i32>} : memref<27x3712xf32, #tpu.memory_space<vmem>>, vector<3x3712xf32>,
    %c0_23 = arith.constant 0 : index
    %c0_24 = arith.constant 0 : index
    %c33 = arith.constant 33 : index
    %21 = vector.load %arg1[%c0_23, %c0_24, %c33] : memref<1x3x4096xf32, #tpu.memory_space<vmem>>, vector<1x3x3712xf32>
    %22 = vector.shape_cast %21 : vector<1x3x3712xf32> to vector<3x3712xf32>
    %c21 = arith.constant 21 : index
    %c0_25 = arith.constant 0 : index
    %23 = vector.load %arg5[%c21, %c0_25] : memref<27x3712xf32, #tpu.memory_space<vmem>>, vector<3x3712xf32>
    tpu.vector_store %arg5[%c21, %c0_25], %22 {strides = array<i32>} : memref<27x3712xf32, #tpu.memory_space<vmem>>, vector<3x3712xf32>,
    %c0_26 = arith.constant 0 : index
    %c0_27 = arith.constant 0 : index
    %c34 = arith.constant 34 : index
    %24 = vector.load %arg1[%c0_26, %c0_27, %c34] : memref<1x3x4096xf32, #tpu.memory_space<vmem>>, vector<1x3x3712xf32>
    %25 = vector.shape_cast %24 : vector<1x3x3712xf32> to vector<3x3712xf32>
    %c24 = arith.constant 24 : index
    %c0_28 = arith.constant 0 : index
    %26 = vector.load %arg5[%c24, %c0_28] : memref<27x3712xf32, #tpu.memory_space<vmem>>, vector<3x3712xf32>
    tpu.vector_store %arg5[%c24, %c0_28], %25 {strides = array<i32>} : memref<27x3712xf32, #tpu.memory_space<vmem>>, vector<3x3712xf32>,
    %c0_29 = arith.constant 0 : index
    %c0_30 = arith.constant 0 : index
    %27 = vector.load %arg2[%c0_29, %c0_30] : memref<48x27xf32, #tpu.memory_space<vmem>>, vector<48x27xf32>
    %c0_31 = arith.constant 0 : index
    %c0_32 = arith.constant 0 : index
    %28 = vector.load %arg5[%c0_31, %c0_32] : memref<27x3712xf32, #tpu.memory_space<vmem>>, vector<27x3712xf32>
    %cst = arith.constant dense<0.000000e+00> : vector<48x3712xf32>
    %29 = tpu.matmul %27, %28, %cst {dimension_numbers = #tpu.dot_dimension_numbers<[1], [0], [0], [1], [0, 0, 1, 1], [], []>} : vector<48x27xf32>, vector<27x3712xf32>, vector<48x3712xf32> -> vector<48x3712xf32>
    %30 = vector.extract_strided_slice %29 {offsets = [0, 0], sizes = [16, 3200], strides = [1, 1]} : vector<48x3712xf32> to vector<16x3200xf32>
    %31 = vector.extract_strided_slice %29 {offsets = [16, 256], sizes = [16, 3200], strides = [1, 1]} : vector<48x3712xf32> to vector<16x3200xf32>
    %32 = arith.addf %30, %31 : vector<16x3200xf32>
    %33 = vector.extract_strided_slice %29 {offsets = [32, 512], sizes = [16, 3200], strides = [1, 1]} : vector<48x3712xf32> to vector<16x3200xf32>
    %34 = arith.addf %32, %33 : vector<16x3200xf32>
    %c0_33 = arith.constant 0 : index
    %c0_34 = arith.constant 0 : index
    %35 = vector.load %arg3[%c0_33, %c0_34] : memref<16x1xf32, #tpu.memory_space<vmem>>, vector<16x1xf32>
    %36 = vector.broadcast %35 : vector<16x1xf32> to vector<16x3200xf32>
    %37 = arith.addf %34, %36 : vector<16x3200xf32>
    %cst_35 = arith.constant dense<0xFF800000> : vector<3200xf32>
    %38 = vector.multi_reduction <maximumf>, %37, %cst_35 [0] : vector<16x3200xf32> to vector<3200xf32>
    %39 = vector.shape_cast %38 : vector<3200xf32> to vector<1x3200xf32>
    %40 = vector.broadcast %39 : vector<1x3200xf32> to vector<16x3200xf32>
    %41 = arith.subf %37, %40 : vector<16x3200xf32>
    %42 = math.exp %41 : vector<16x3200xf32>
    %cst_36 = arith.constant dense<0.000000e+00> : vector<3200xf32>
    %43 = vector.multi_reduction <add>, %42, %cst_36 [0] : vector<16x3200xf32> to vector<3200xf32>
    %44 = vector.shape_cast %43 : vector<3200xf32> to vector<1x3200xf32>
    %45 = tpu.reciprocal %44 {approx = true} : vector<1x3200xf32> -> vector<1x3200xf32>
    %46 = vector.broadcast %45 : vector<1x3200xf32> to vector<16x3200xf32>
    %47 = arith.mulf %42, %46 : vector<16x3200xf32>
    %48 = vector.extract_strided_slice %47 {offsets = [0, 0], sizes = [16, 3122], strides = [1, 1]} : vector<16x3200xf32> to vector<16x3122xf32>
    %49 = vector.extract_strided_slice %47 {offsets = [0, 1], sizes = [16, 3122], strides = [1, 1]} : vector<16x3200xf32> to vector<16x3122xf32>
    %50 = arith.maximumf %48, %49 : vector<16x3122xf32>
    %51 = vector.extract_strided_slice %50 {offsets = [0, 0], sizes = [16, 3120], strides = [1, 1]} : vector<16x3122xf32> to vector<16x3120xf32>
    %52 = vector.extract_strided_slice %50 {offsets = [0, 2], sizes = [16, 3120], strides = [1, 1]} : vector<16x3122xf32> to vector<16x3120xf32>
    %53 = arith.maximumf %51, %52 : vector<16x3120xf32>
    %54 = vector.extract_strided_slice %53 {offsets = [0, 0], sizes = [16, 3104], strides = [1, 1]} : vector<16x3120xf32> to vector<16x3104xf32>
    %55 = vector.extract_strided_slice %53 {offsets = [0, 16], sizes = [16, 3104], strides = [1, 1]} : vector<16x3120xf32> to vector<16x3104xf32>
    %56 = arith.maximumf %54, %55 : vector<16x3104xf32>
    %57 = vector.extract_strided_slice %56 {offsets = [0, 0], sizes = [16, 3072], strides = [1, 1]} : vector<16x3104xf32> to vector<16x3072xf32>
    %58 = vector.extract_strided_slice %56 {offsets = [0, 32], sizes = [16, 3072], strides = [1, 1]} : vector<16x3104xf32> to vector<16x3072xf32>
    %59 = arith.maximumf %57, %58 : vector<16x3072xf32>
    %60 = vector.extract_strided_slice %59 {offsets = [0, 0], sizes = [16, 256], strides = [1, 1]} : vector<16x3072xf32> to vector<16x256xf32>
    %61 = vector.extract_strided_slice %59 {offsets = [0, 256], sizes = [16, 256], strides = [1, 1]} : vector<16x3072xf32> to vector<16x256xf32>
    %62 = arith.maximumf %60, %61 : vector<16x256xf32>
    %63 = vector.extract_strided_slice %59 {offsets = [0, 512], sizes = [16, 256], strides = [1, 1]} : vector<16x3072xf32> to vector<16x256xf32>
    %64 = arith.maximumf %62, %63 : vector<16x256xf32>
    %65 = vector.extract_strided_slice %59 {offsets = [0, 768], sizes = [16, 256], strides = [1, 1]} : vector<16x3072xf32> to vector<16x256xf32>
    %66 = arith.maximumf %64, %65 : vector<16x256xf32>
    %c0_37 = arith.constant 0 : index
    %c0_38 = arith.constant 0 : index
    %c0_39 = arith.constant 0 : index
    %c0_40 = arith.constant 0 : index
    %67 = vector.load %arg4[%c0_37, %c0_38, %c0_39, %c0_40] : memref<1x3x16x256xf32, #tpu.memory_space<vmem>>, vector<1x1x16x256xf32>
    %68 = vector.shape_cast %67 : vector<1x1x16x256xf32> to vector<16x256xf32>
    %69 = vector.shape_cast %66 : vector<16x256xf32> to vector<1x1x16x256xf32>
    tpu.vector_store %arg4[%c0_37, %c0_38, %c0_39, %c0_40], %69 {strides = array<i32>} : memref<1x3x16x256xf32, #tpu.memory_space<vmem>>, vector<1x1x16x256xf32>,
    %70 = vector.extract_strided_slice %59 {offsets = [0, 1024], sizes = [16, 256], strides = [1, 1]} : vector<16x3072xf32> to vector<16x256xf32>
    %71 = vector.extract_strided_slice %59 {offsets = [0, 1280], sizes = [16, 256], strides = [1, 1]} : vector<16x3072xf32> to vector<16x256xf32>
    %72 = arith.maximumf %70, %71 : vector<16x256xf32>
    %73 = vector.extract_strided_slice %59 {offsets = [0, 1536], sizes = [16, 256], strides = [1, 1]} : vector<16x3072xf32> to vector<16x256xf32>
    %74 = arith.maximumf %72, %73 : vector<16x256xf32>
    %75 = vector.extract_strided_slice %59 {offsets = [0, 1792], sizes = [16, 256], strides = [1, 1]} : vector<16x3072xf32> to vector<16x256xf32>
    %76 = arith.maximumf %74, %75 : vector<16x256xf32>
    %c0_41 = arith.constant 0 : index
    %c1_42 = arith.constant 1 : index
    %c0_43 = arith.constant 0 : index
    %c0_44 = arith.constant 0 : index
    %77 = vector.load %arg4[%c0_41, %c1_42, %c0_43, %c0_44] : memref<1x3x16x256xf32, #tpu.memory_space<vmem>>, vector<1x1x16x256xf32>
    %78 = vector.shape_cast %77 : vector<1x1x16x256xf32> to vector<16x256xf32>
    %79 = vector.shape_cast %76 : vector<16x256xf32> to vector<1x1x16x256xf32>
    tpu.vector_store %arg4[%c0_41, %c1_42, %c0_43, %c0_44], %79 {strides = array<i32>} : memref<1x3x16x256xf32, #tpu.memory_space<vmem>>, vector<1x1x16x256xf32>,
    %80 = vector.extract_strided_slice %59 {offsets = [0, 2048], sizes = [16, 256], strides = [1, 1]} : vector<16x3072xf32> to vector<16x256xf32>
    %81 = vector.extract_strided_slice %59 {offsets = [0, 2304], sizes = [16, 256], strides = [1, 1]} : vector<16x3072xf32> to vector<16x256xf32>
    %82 = arith.maximumf %80, %81 : vector<16x256xf32>
    %83 = vector.extract_strided_slice %59 {offsets = [0, 2560], sizes = [16, 256], strides = [1, 1]} : vector<16x3072xf32> to vector<16x256xf32>
    %84 = arith.maximumf %82, %83 : vector<16x256xf32>
    %85 = vector.extract_strided_slice %59 {offsets = [0, 2816], sizes = [16, 256], strides = [1, 1]} : vector<16x3072xf32> to vector<16x256xf32>
    %86 = arith.maximumf %84, %85 : vector<16x256xf32>
    %c0_45 = arith.constant 0 : index
    %c2_46 = arith.constant 2 : index
    %c0_47 = arith.constant 0 : index
    %c0_48 = arith.constant 0 : index
    %87 = vector.load %arg4[%c0_45, %c2_46, %c0_47, %c0_48] : memref<1x3x16x256xf32, #tpu.memory_space<vmem>>, vector<1x1x16x256xf32>
    %88 = vector.shape_cast %87 : vector<1x1x16x256xf32> to vector<16x256xf32>
    %89 = vector.shape_cast %86 : vector<16x256xf32> to vector<1x1x16x256xf32>
    tpu.vector_store %arg4[%c0_45, %c2_46, %c0_47, %c0_48], %89 {strides = array<i32>} : memref<1x3x16x256xf32, #tpu.memory_space<vmem>>, vector<1x1x16x256xf32>,
    return
  }
  func.func @transform_0(%arg0: i32) -> (i32, i32, i32) {
    %c0_i32 = arith.constant 0 : i32
    %c0_i32_0 = arith.constant 0 : i32
    %c0_i32_1 = arith.constant 0 : i32
    return %arg0, %c0_i32, %c0_i32_0 : i32, i32, i32
  }
  func.func @transform_1(%arg0: i32) -> (i32, i32) {
    %c0_i32 = arith.constant 0 : i32
    %c0_i32_0 = arith.constant 0 : i32
    %c0_i32_1 = arith.constant 0 : i32
    return %c0_i32, %c0_i32_0 : i32, i32
  }
  func.func @transform_2(%arg0: i32) -> (i32, i32) {
    %c0_i32 = arith.constant 0 : i32
    %c0_i32_0 = arith.constant 0 : i32
    %c0_i32_1 = arith.constant 0 : i32
    return %c0_i32, %c0_i32_0 : i32, i32
  }
  func.func @transform_3(%arg0: i32) -> (i32, i32, i32, i32) {
    %c0_i32 = arith.constant 0 : i32
    %c0_i32_0 = arith.constant 0 : i32
    %c0_i32_1 = arith.constant 0 : i32
    %c0_i32_2 = arith.constant 0 : i32
    return %arg0, %c0_i32, %c0_i32_0, %c0_i32_1 : i32, i32, i32, i32
  }
}

</mosaic_0001>

<llo_original>
// kernel: conv3d_softmax_maxpool2.1
$region0: #{conv3d_softmax_maxpool2.1}
  #allocation0 [shape = 'u32[]', space=smem, size = 0x4, offset = 0x4, fixed_abs, tag = 'smem constant byte address 0x4 - core index']
  #allocation1 [shape = 'u32[144,128]{1,0:T(1,128)}', space=vmem, size = 0x12000, scoped, tag = 'internal scratch']
  #allocation2 [shape = 'f32[27,3712]{1,0:T(8,128)}', space=vmem, size = 0x74000, scoped, tag = 'scratch operand']
  %s0 = inlined_call_operand.vmem [shape: f32[2,3,4096], index: 0, kind: input, shape index: {}]
  %s1 = inlined_call_operand.vmem [shape: f32[48,27], index: 1, kind: input, shape index: {}]
  %s2 = inlined_call_operand.vmem [shape: f32[16,1], index: 2, kind: input, shape index: {}]
  %s3 = inlined_call_operand.vmem [shape: f32[2,3,16,256], index: 3, kind: output, shape index: {}]
  %s4 = sld [smem:[#allocation0]]
  $region45: #{conv3d_softmax_maxpool2.1} parent=0
    _
  %s6 = ssub.s32 1, %s4
  %s7 = scalar_select 0, %s6, %s4
  loop: start=0, step=1, limit=4
  $region2: #{conv3d_softmax_maxpool2.1} parent=0 // loop_pre_header
    _
  $region3: #{conv3d_softmax_maxpool2.1} parent=0 // loop_header
    %s9 = sphi 0, %s13
    %p10 = scmp.ge.s32.totalorder %s9, 4
    %s19 = sphi 0, %s21
    %s22 = sphi 0, %s19
    %s23 = sphi 0, %s22
    %s39 = sphi 0, %s23
    %s43 = sphi 0, %s43
    %s45 = sphi 0, %s43
    %s46 = sphi 0, %s45
    %s60 = sphi 0, %s46
    %s64 = sphi 0, %s64
    %s66 = sphi 0, %s64
    %s67 = sphi 0, %s66
    %s81 = sphi 0, %s67
    %s87 = sphi 0, %s89
    %s90 = sphi 0, %s87
    %s91 = sphi 0, %s90
    %s107 = sphi 0, %s91
  $region4: #{conv3d_softmax_maxpool2.1} parent=0 // loop_header_branch
    %12 = sbr.rel (%p10) target = $region8
  $region5: #{conv3d_softmax_maxpool2.1} parent=0 // loop_body
    %s14 = ssub.s32 %s9, 1
    %s15 = ssub.s32 %s9, 2
    %s16 = sadd.s32 %s9, 1
    %s17 = ssub.s32 %s9, %s16
    %p18 = scmp.eq.s32.totalorder %s17, 0
    %s20 = sadd.s32 %s19, 1
    %s21 = scalar_select %p18, %s19, %s20
    %p24 = pneg %p18
    %p25 = scmp.eq.s32.totalorder %s9, 1
    %p26 = por %p24, %p25
    %p27 = scmp.ne.s32.totalorder %s19, %s22
    %p28 = scmp.eq.s32.totalorder %s9, 0
    %p29 = por %p27, %p28
    %p30 = scmp.ne.s32.totalorder %s19, %s22
    %p31 = scmp.eq.s32.totalorder %s14, 1
    %p32 = por %p30, %p31
    %p33 = scmp.ne.s32.totalorder %s22, %s23
    %p34 = scmp.eq.s32.totalorder %s14, 0
    %p35 = por %p33, %p34
    %p36 = scmp.ne.s32.totalorder %s22, %s23
    %p37 = scmp.eq.s32.totalorder %s15, 1
    %p38 = por %p36, %p37
    %p40 = scmp.ne.s32.totalorder %s23, %s39
    %p41 = scmp.eq.s32.totalorder %s15, 0
    %p42 = por %p40, %p41
    %s44 = sadd.s32 %s43, 1
    %p47 = scmp.eq.s32.totalorder %s9, 1
    %p48 = scmp.ne.s32.totalorder %s43, %s45
    %p49 = scmp.eq.s32.totalorder %s9, 0
    %p50 = por %p48, %p49
    %p51 = scmp.ne.s32.totalorder %s43, %s45
    %p52 = scmp.eq.s32.totalorder %s14, 1
    %p53 = por %p51, %p52
    %p54 = scmp.ne.s32.totalorder %s45, %s46
    %p55 = scmp.eq.s32.totalorder %s14, 0
    %p56 = por %p54, %p55
    %p57 = scmp.ne.s32.totalorder %s45, %s46
    %p58 = scmp.eq.s32.totalorder %s15, 1
    %p59 = por %p57, %p58
    %p61 = scmp.ne.s32.totalorder %s46, %s60
    %p62 = scmp.eq.s32.totalorder %s15, 0
    %p63 = por %p61, %p62
    %s65 = sadd.s32 %s64, 1
    %p68 = scmp.eq.s32.totalorder %s9, 1
    %p69 = scmp.ne.s32.totalorder %s64, %s66
    %p70 = scmp.eq.s32.totalorder %s9, 0
    %p71 = por %p69, %p70
    %p72 = scmp.ne.s32.totalorder %s64, %s66
    %p73 = scmp.eq.s32.totalorder %s14, 1
    %p74 = por %p72, %p73
    %p75 = scmp.ne.s32.totalorder %s66, %s67
    %p76 = scmp.eq.s32.totalorder %s14, 0
    %p77 = por %p75, %p76
    %p78 = scmp.ne.s32.totalorder %s66, %s67
    %p79 = scmp.eq.s32.totalorder %s15, 1
    %p80 = por %p78, %p79
    %p82 = scmp.ne.s32.totalorder %s67, %s81
    %p83 = scmp.eq.s32.totalorder %s15, 0
    %p84 = por %p82, %p83
    %s85 = ssub.s32 %s9, %s16
    %p86 = scmp.eq.s32.totalorder %s85, 0
    %s88 = sadd.s32 %s87, 1
    %s89 = scalar_select %p86, %s87, %s88
    %p92 = pneg %p86
    %p93 = scmp.eq.s32.totalorder %s9, 1
    %p94 = por %p92, %p93
    %p95 = scmp.ne.s32.totalorder %s87, %s90
    %p96 = scmp.eq.s32.totalorder %s9, 0
    %p97 = por %p95, %p96
    %p98 = scmp.ne.s32.totalorder %s87, %s90
    %p99 = scmp.eq.s32.totalorder %s14, 1
    %p100 = por %p98, %p99
    %p101 = scmp.ne.s32.totalorder %s90, %s91
    %p102 = scmp.eq.s32.totalorder %s14, 0
    %p103 = por %p101, %p102
    %p104 = scmp.ne.s32.totalorder %s90, %s91
    %p105 = scmp.eq.s32.totalorder %s15, 1
    %p106 = por %p104, %p105
    %p108 = scmp.ne.s32.totalorder %s91, %s107
    %p109 = scmp.eq.s32.totalorder %s15, 0
    %p110 = por %p108, %p109
    %p111 = scmp.le.s32.totalorder 1, %s9
    %p112 = scmp.lt.s32.totalorder %s9, 3
    %p113 = pnand %p111, %p112
    %p114 = pneg %p113
    // Predicated region
    $region9: #{conv3d_softmax_maxpool2.1} parent=5 // pred_check
      _
    $region10: #{conv3d_softmax_maxpool2.1} parent=5 // pred_check_branch
      %116 = sbr.rel (%p113) target = $region12
    $region11: #{conv3d_softmax_maxpool2.1} parent=5 // pred_region
      %s117 = ssub.s32 %s9, 1
      // Predicated region
      $region13: #{conv3d_softmax_maxpool2.1} parent=11 // pred_check
        %p118 = pneg %p56
      $region14: #{conv3d_softmax_maxpool2.1} parent=11 // pred_check_branch
        %120 = sbr.rel (%p118) target = $region16
      $region15: #{conv3d_softmax_maxpool2.1} parent=11 // pred_region
        _
      $region16: #{conv3d_softmax_maxpool2.1} parent=11 // pred_fallthru
        _
      // Predicated region
      $region17: #{conv3d_softmax_maxpool2.1} parent=11 // pred_check
        %p121 = pneg %p77
      $region18: #{conv3d_softmax_maxpool2.1} parent=11 // pred_check_branch
        %123 = sbr.rel (%p121) target = $region20
      $region19: #{conv3d_softmax_maxpool2.1} parent=11 // pred_region
        _
      $region20: #{conv3d_softmax_maxpool2.1} parent=11 // pred_fallthru
        _
    $region12: #{conv3d_softmax_maxpool2.1} parent=5 // pred_fallthru
      _
    %p124 = scmp.lt.s32.totalorder %s9, 2
    // Predicated region
    $region21: #{conv3d_softmax_maxpool2.1} parent=5 // pred_check
      %p125 = pneg %p124
    $region22: #{conv3d_softmax_maxpool2.1} parent=5 // pred_check_branch
      %127 = sbr.rel (%p125) target = $region24
    $region23: #{conv3d_softmax_maxpool2.1} parent=5 // pred_region
      // Predicated region
      $region25: #{conv3d_softmax_maxpool2.1} parent=23 // pred_check
        %p128 = pneg %p29
      $region26: #{conv3d_softmax_maxpool2.1} parent=23 // pred_check_branch
        %130 = sbr.rel (%p128) target = $region28
      $region27: #{conv3d_softmax_maxpool2.1} parent=23 // pred_region
        %p131 = scmp.lt.s32.totalorder %s9, 1
        %s132 = scalar_select %p131, %s9, 1
        %s133 = smul.addr %s132, 32
        %s134 = smul.addr %s133, 4
        %s135 = scalar_lea.vmem %s0, %s134
      $region28: #{conv3d_softmax_maxpool2.1} parent=23 // pred_fallthru
        _
    $region24: #{conv3d_softmax_maxpool2.1} parent=5 // pred_fallthru
      _
    %p136 = scmp.le.s32.totalorder 1, %s9
    %p137 = scmp.lt.s32.totalorder %s9, 3
    %p138 = pnand %p136, %p137
    %p139 = pneg %p138
    // Predicated region
    $region29: #{conv3d_softmax_maxpool2.1} parent=5 // pred_check
      _
    $region30: #{conv3d_softmax_maxpool2.1} parent=5 // pred_check_branch
      %141 = sbr.rel (%p138) target = $region32
    $region31: #{conv3d_softmax_maxpool2.1} parent=5 // pred_region
      %s142 = ssub.s32 %s9, 1
      %p143 = scmp.lt.s32.totalorder %s14, 1
      %s144 = scalar_select %p143, %s14, 1
      %s145 = smul.addr %s144, 32
      %s146 = smul.addr %s145, 4
      %s147 = scalar_lea.vmem %s0, %s146
      %p148 = pneg %p35
      %p149 = pneg %p32
      %p150 = pneg %p56
      %p151 = pneg %p53
      %p152 = pneg %p77
      %p153 = pneg %p74
      %p154 = pneg %p103
      %p155 = pneg %p100
      %p156 = scmp.lt.s32.totalorder %s14, 1
      %s157 = scalar_select %p156, %s14, 1
      %s158 = smul.addr %s157, 12
      %s159 = smul.addr %s158, 8
      %s160 = scalar_lea.vmem %s3, %s159
      %p161 = scmp.lt.s32.totalorder %s14, 1
      %s162 = scalar_select %p161, %s14, 1
      %s163 = smul.addr %s162, 32
      %s164 = smul.addr %s163, 4
      %s165 = scalar_lea.vmem %s0, %s164
      %p166 = scmp.lt.s32.totalorder %s14, 1
      %s167 = scalar_select %p166, %s14, 1
      %s168 = smul.addr %s167, 12
      %s169 = smul.addr %s168, 8
      %s170 = scalar_lea.vmem %s3, %s169
      %v171 = vld [vmem:[%s165] sm:$0x77]
      %v172 = vld [vmem:[%s165 + $0x8] sm:$0x77]
      %v173 = vld [vmem:[%s165 + $0x10] sm:$0x77]
      %v174 = vld [vmem:[%s165 + $0x18] sm:$0x77]
      %v175 = vld [vmem:[%s165 + $0x20] sm:$0x77]
      %v176 = vld [vmem:[%s165 + $0x28] sm:$0x77]
      %v177 = vld [vmem:[%s165 + $0x30] sm:$0x77]
      %v178 = vld [vmem:[%s165 + $0x38] sm:$0x77]
      %v179 = vld [vmem:[%s165 + $0x40] sm:$0x77]
      %v180 = vld [vmem:[%s165 + $0x48] sm:$0x77]
      %v181 = vld [vmem:[%s165 + $0x50] sm:$0x77]
      %v182 = vld [vmem:[%s165 + $0x58] sm:$0x77]
      %v183 = vld [vmem:[%s165 + $0x60] sm:$0x77]
      %v184 = vld [vmem:[%s165 + $0x68] sm:$0x77]
      %v185 = vld [vmem:[%s165 + $0x70] sm:$0x7]
      %v200 = vcombine.high %v171, %v171
      %v201 = vcombine.high %v172, %v172
      %v202 = vcombine.high %v173, %v173
      %v203 = vcombine.high %v174, %v174
      %v204 = vcombine.high %v175, %v175
      %v205 = vcombine.high %v176, %v176
      %v206 = vcombine.high %v177, %v177
      %v207 = vcombine.high %v178, %v178
      %v208 = vcombine.high %v179, %v179
      %v209 = vcombine.high %v180, %v180
      %v210 = vcombine.high %v181, %v181
      %v211 = vcombine.high %v182, %v182
      %v212 = vcombine.high %v183, %v183
      %v213 = vcombine.high %v184, %v184
      %228 = vst [vmem:[#allocation2] sm:$0x7] %v171
      %229 = vst [vmem:[#allocation2 + $0x8] sm:$0x7] %v200
      %230 = vst [vmem:[#allocation2 + $0x10] sm:$0x7] %v172
      %231 = vst [vmem:[#allocation2 + $0x18] sm:$0x7] %v201
      %232 = vst [vmem:[#allocation2 + $0x20] sm:$0x7] %v173
      %233 = vst [vmem:[#allocation2 + $0x28] sm:$0x7] %v202
      %234 = vst [vmem:[#allocation2 + $0x30] sm:$0x7] %v174
      %235 = vst [vmem:[#allocation2 + $0x38] sm:$0x7] %v203
      %236 = vst [vmem:[#allocation2 + $0x40] sm:$0x7] %v175
      %237 = vst [vmem:[#allocation2 + $0x48] sm:$0x7] %v204
      %238 = vst [vmem:[#allocation2 + $0x50] sm:$0x7] %v176
      %239 = vst [vmem:[#allocation2 + $0x58] sm:$0x7] %v205
      %240 = vst [vmem:[#allocation2 + $0x60] sm:$0x7] %v177
      %241 = vst [vmem:[#allocation2 + $0x68] sm:$0x7] %v206
      %242 = vst [vmem:[#allocation2 + $0x70] sm:$0x7] %v178
      %243 = vst [vmem:[#allocation2 + $0x78] sm:$0x7] %v207
      %244 = vst [vmem:[#allocation2 + $0x80] sm:$0x7] %v179
      %245 = vst [vmem:[#allocation2 + $0x88] sm:$0x7] %v208
      %246 = vst [vmem:[#allocation2 + $0x90] sm:$0x7] %v180
      %247 = vst [vmem:[#allocation2 + $0x98] sm:$0x7] %v209
      %248 = vst [vmem:[#allocation2 + $0xa0] sm:$0x7] %v181
      %249 = vst [vmem:[#allocation2 + $0xa8] sm:$0x7] %v210
      %250 = vst [vmem:[#allocation2 + $0xb0] sm:$0x7] %v182
      %251 = vst [vmem:[#allocation2 + $0xb8] sm:$0x7] %v211
      %252 = vst [vmem:[#allocation2 + $0xc0] sm:$0x7] %v183
      %253 = vst [vmem:[#allocation2 + $0xc8] sm:$0x7] %v212
      %254 = vst [vmem:[#allocation2 + $0xd0] sm:$0x7] %v184
      %255 = vst [vmem:[#allocation2 + $0xd8] sm:$0x7] %v213
      %256 = vst [vmem:[#allocation2 + $0xe0] sm:$0x7] %v185
      %v257 = vld [vmem:[%s165] sm:$0x77]
      %v258 = vld [vmem:[%s165 + $0x8] sm:$0x77]
      %v259 = vld [vmem:[%s165 + $0x10] sm:$0x77]
      %v260 = vld [vmem:[%s165 + $0x18] sm:$0x77]
      %v261 = vld [vmem:[%s165 + $0x20] sm:$0x77]
      %v262 = vld [vmem:[%s165 + $0x28] sm:$0x77]
      %v263 = vld [vmem:[%s165 + $0x30] sm:$0x77]
      %v264 = vld [vmem:[%s165 + $0x38] sm:$0x77]
      %v265 = vld [vmem:[%s165 + $0x40] sm:$0x77]
      %v266 = vld [vmem:[%s165 + $0x48] sm:$0x77]
      %v267 = vld [vmem:[%s165 + $0x50] sm:$0x77]
      %v268 = vld [vmem:[%s165 + $0x58] sm:$0x77]
      %v269 = vld [vmem:[%s165 + $0x60] sm:$0x77]
      %v270 = vld [vmem:[%s165 + $0x68] sm:$0x77]
      %v271 = vld [vmem:[%s165 + $0x70] sm:$0x77]
      %v287 = vcombine.high %v257, %v257
      %v288 = vcombine.high %v258, %v258
      %v289 = vcombine.high %v259, %v259
      %v290 = vcombine.high %v260, %v260
      %v291 = vcombine.high %v261, %v261
      %v292 = vcombine.high %v262, %v262
      %v293 = vcombine.high %v263, %v263
      %v294 = vcombine.high %v264, %v264
      %v295 = vcombine.high %v265, %v265
      %v296 = vcombine.high %v266, %v266
      %v297 = vcombine.high %v267, %v267
      %v298 = vcombine.high %v268, %v268
      %v299 = vcombine.high %v269, %v269
      %v300 = vcombine.high %v270, %v270
      %v301 = vcombine.high %v271, %v271
      %v302 = vrot.slane %v257, 5
      %v303 = vrot.slane %v287, 5
      %v304 = vrot.slane %v258, 5
      %v305 = vrot.slane %v288, 5
      %v306 = vrot.slane %v259, 5
      %v307 = vrot.slane %v289, 5
      %v308 = vrot.slane %v260, 5
      %v309 = vrot.slane %v290, 5
      %v310 = vrot.slane %v261, 5
      %v311 = vrot.slane %v291, 5
      %v312 = vrot.slane %v262, 5
      %v313 = vrot.slane %v292, 5
      %v314 = vrot.slane %v263, 5
      %v315 = vrot.slane %v293, 5
      %v316 = vrot.slane %v264, 5
      %v317 = vrot.slane %v294, 5
      %v318 = vrot.slane %v265, 5
      %v319 = vrot.slane %v295, 5
      %v320 = vrot.slane %v266, 5
      %v321 = vrot.slane %v296, 5
      %v322 = vrot.slane %v267, 5
      %v323 = vrot.slane %v297, 5
      %v324 = vrot.slane %v268, 5
      %v325 = vrot.slane %v298, 5
      %v326 = vrot.slane %v269, 5
      %v327 = vrot.slane %v299, 5
      %v328 = vrot.slane %v270, 5
      %v329 = vrot.slane %v300, 5
      %v330 = vrot.slane %v271, 5
      %v331 = vrot.slane %v301, 5
      %332 = vrot.lane.b32.xlu0 %v302, 127
      %v333 = vpop.permute.xlu0 %332
      %334 = vrot.lane.b32.xlu0 %v303, 127
      %v335 = vpop.permute.xlu0 %334
      %336 = vrot.lane.b32.xlu0 %v304, 127
      %v337 = vpop.permute.xlu0 %336
      %338 = vrot.lane.b32.xlu0 %v305, 127
      %v339 = vpop.permute.xlu0 %338
      %340 = vrot.lane.b32.xlu0 %v306, 127
      %v341 = vpop.permute.xlu0 %340
      %342 = vrot.lane.b32.xlu0 %v307, 127
      %v343 = vpop.permute.xlu0 %342
      %344 = vrot.lane.b32.xlu0 %v308, 127
      %v345 = vpop.permute.xlu0 %344
      %346 = vrot.lane.b32.xlu0 %v309, 127
      %v347 = vpop.permute.xlu0 %346
      %348 = vrot.lane.b32.xlu0 %v310, 127
      %v349 = vpop.permute.xlu0 %348
      %350 = vrot.lane.b32.xlu0 %v311, 127
      %v351 = vpop.permute.xlu0 %350
      %352 = vrot.lane.b32.xlu0 %v312, 127
      %v353 = vpop.permute.xlu0 %352
      %354 = vrot.lane.b32.xlu0 %v313, 127
      %v355 = vpop.permute.xlu0 %354
      %356 = vrot.lane.b32.xlu0 %v314, 127
      %v357 = vpop.permute.xlu0 %356
      %358 = vrot.lane.b32.xlu0 %v315, 127
      %v359 = vpop.permute.xlu0 %358
      %360 = vrot.lane.b32.xlu0 %v316, 127
      %v361 = vpop.permute.xlu0 %360
      %362 = vrot.lane.b32.xlu0 %v317, 127
      %v363 = vpop.permute.xlu0 %362
      %364 = vrot.lane.b32.xlu0 %v318, 127
      %v365 = vpop.permute.xlu0 %364
      %366 = vrot.lane.b32.xlu0 %v319, 127
      %v367 = vpop.permute.xlu0 %366
      %368 = vrot.lane.b32.xlu0 %v320, 127
      %v369 = vpop.permute.xlu0 %368
      %370 = vrot.lane.b32.xlu0 %v321, 127
      %v371 = vpop.permute.xlu0 %370
      %372 = vrot.lane.b32.xlu0 %v322, 127
      %v373 = vpop.permute.xlu0 %372
      %374 = vrot.lane.b32.xlu0 %v323, 127
      %v375 = vpop.permute.xlu0 %374
      %376 = vrot.lane.b32.xlu0 %v324, 127
      %v377 = vpop.permute.xlu0 %376
      %378 = vrot.lane.b32.xlu0 %v325, 127
      %v379 = vpop.permute.xlu0 %378
      %380 = vrot.lane.b32.xlu0 %v326, 127
      %v381 = vpop.permute.xlu0 %380
      %382 = vrot.lane.b32.xlu0 %v327, 127
      %v383 = vpop.permute.xlu0 %382
      %384 = vrot.lane.b32.xlu0 %v328, 127
      %v385 = vpop.permute.xlu0 %384
      %386 = vrot.lane.b32.xlu0 %v329, 127
      %v387 = vpop.permute.xlu0 %386
      %388 = vrot.lane.b32.xlu0 %v330, 127
      %v389 = vpop.permute.xlu0 %388
      %390 = vrot.lane.b32.xlu0 %v331, 127
      %v391 = vpop.permute.xlu0 %390
      %vm392 = vcmask 1039360
      %v393 = vsel %vm392, %v333, %v335
      %v394 = vsel %vm392, %v335, %v337
      %v395 = vsel %vm392, %v337, %v339
      %v396 = vsel %vm392, %v339, %v341
      %v397 = vsel %vm392, %v341, %v343
      %v398 = vsel %vm392, %v343, %v345
      %v399 = vsel %vm392, %v345, %v347
      %v400 = vsel %vm392, %v347, %v349
      %v401 = vsel %vm392, %v349, %v351
      %v402 = vsel %vm392, %v351, %v353
      %v403 = vsel %vm392, %v353, %v355
      %v404 = vsel %vm392, %v355, %v357
      %v405 = vsel %vm392, %v357, %v359
      %v406 = vsel %vm392, %v359, %v361
      %v407 = vsel %vm392, %v361, %v363
      %v408 = vsel %vm392, %v363, %v365
      %v409 = vsel %vm392, %v365, %v367
      %v410 = vsel %vm392, %v367, %v369
      %v411 = vsel %vm392, %v369, %v371
      %v412 = vsel %vm392, %v371, %v373
      %v413 = vsel %vm392, %v373, %v375
      %v414 = vsel %vm392, %v375, %v377
      %v415 = vsel %vm392, %v377, %v379
      %v416 = vsel %vm392, %v379, %v381
      %v417 = vsel %vm392, %v381, %v383
      %v418 = vsel %vm392, %v383, %v385
      %v419 = vsel %vm392, %v385, %v387
      %v420 = vsel %vm392, %v387, %v389
      %v421 = vsel %vm392, %v389, %v391
      %451 = vst [vmem:[#allocation2] sm:$0x38] %v393
      %452 = vst [vmem:[#allocation2 + $0x8] sm:$0x38] %v394
      %453 = vst [vmem:[#allocation2 + $0x10] sm:$0x38] %v395
      %454 = vst [vmem:[#allocation2 + $0x18] sm:$0x38] %v396
      %455 = vst [vmem:[#allocation2 + $0x20] sm:$0x38] %v397
      %456 = vst [vmem:[#allocation2 + $0x28] sm:$0x38] %v398
      %457 = vst [vmem:[#allocation2 + $0x30] sm:$0x38] %v399
      %458 = vst [vmem:[#allocation2 + $0x38] sm:$0x38] %v400
      %459 = vst [vmem:[#allocation2 + $0x40] sm:$0x38] %v401
      %460 = vst [vmem:[#allocation2 + $0x48] sm:$0x38] %v402
      %461 = vst [vmem:[#allocation2 + $0x50] sm:$0x38] %v403
      %462 = vst [vmem:[#allocation2 + $0x58] sm:$0x38] %v404
      %463 = vst [vmem:[#allocation2 + $0x60] sm:$0x38] %v405
      %464 = vst [vmem:[#allocation2 + $0x68] sm:$0x38] %v406
      %465 = vst [vmem:[#allocation2 + $0x70] sm:$0x38] %v407
      %466 = vst [vmem:[#allocation2 + $0x78] sm:$0x38] %v408
      %467 = vst [vmem:[#allocation2 + $0x80] sm:$0x38] %v409
      %468 = vst [vmem:[#allocation2 + $0x88] sm:$0x38] %v410
      %469 = vst [vmem:[#allocation2 + $0x90] sm:$0x38] %v411
      %470 = vst [vmem:[#allocation2 + $0x98] sm:$0x38] %v412
      %471 = vst [vmem:[#allocation2 + $0xa0] sm:$0x38] %v413
      %472 = vst [vmem:[#allocation2 + $0xa8] sm:$0x38] %v414
      %473 = vst [vmem:[#allocation2 + $0xb0] sm:$0x38] %v415
      %474 = vst [vmem:[#allocation2 + $0xb8] sm:$0x38] %v416
      %475 = vst [vmem:[#allocation2 + $0xc0] sm:$0x38] %v417
      %476 = vst [vmem:[#allocation2 + $0xc8] sm:$0x38] %v418
      %477 = vst [vmem:[#allocation2 + $0xd0] sm:$0x38] %v419
      %478 = vst [vmem:[#allocation2 + $0xd8] sm:$0x38] %v420
      %479 = vst [vmem:[#allocation2 + $0xe0] sm:$0x38] %v421
      %v480 = vld [vmem:[%s165] sm:$0x77]
      %v481 = vld [vmem:[%s165 + $0x8] sm:$0x77]
      %v482 = vld [vmem:[%s165 + $0x10] sm:$0x77]
      %v483 = vld [vmem:[%s165 + $0x18] sm:$0x77]
      %v484 = vld [vmem:[%s165 + $0x20] sm:$0x77]
      %v485 = vld [vmem:[%s165 + $0x28] sm:$0x77]
      %v486 = vld [vmem:[%s165 + $0x30] sm:$0x77]
      %v487 = vld [vmem:[%s165 + $0x38] sm:$0x77]
      %v488 = vld [vmem:[%s165 + $0x40] sm:$0x77]
      %v489 = vld [vmem:[%s165 + $0x48] sm:$0x77]
      %v490 = vld [vmem:[%s165 + $0x50] sm:$0x77]
      %v491 = vld [vmem:[%s165 + $0x58] sm:$0x77]
      %v492 = vld [vmem:[%s165 + $0x60] sm:$0x77]
      %v493 = vld [vmem:[%s165 + $0x68] sm:$0x77]
      %v494 = vld [vmem:[%s165 + $0x70] sm:$0x77]
      %v510 = vcombine.high %v480, %v480
      %v511 = vcombine.high %v481, %v481
      %v512 = vcombine.high %v482, %v482
      %v513 = vcombine.high %v483, %v483
      %v514 = vcombine.high %v484, %v484
      %v515 = vcombine.high %v485, %v485
      %v516 = vcombine.high %v486, %v486
      %v517 = vcombine.high %v487, %v487
      %v518 = vcombine.high %v488, %v488
      %v519 = vcombine.high %v489, %v489
      %v520 = vcombine.high %v490, %v490
      %v521 = vcombine.high %v491, %v491
      %v522 = vcombine.high %v492, %v492
      %v523 = vcombine.high %v493, %v493
      %v524 = vcombine.high %v494, %v494
      %v525 = vrot.slane %v480, 2
      %v526 = vrot.slane %v510, 2
      %v527 = vrot.slane %v481, 2
      %v528 = vrot.slane %v511, 2
      %v529 = vrot.slane %v482, 2
      %v530 = vrot.slane %v512, 2
      %v531 = vrot.slane %v483, 2
      %v532 = vrot.slane %v513, 2
      %v533 = vrot.slane %v484, 2
      %v534 = vrot.slane %v514, 2
      %v535 = vrot.slane %v485, 2
      %v536 = vrot.slane %v515, 2
      %v537 = vrot.slane %v486, 2
      %v538 = vrot.slane %v516, 2
      %v539 = vrot.slane %v487, 2
      %v540 = vrot.slane %v517, 2
      %v541 = vrot.slane %v488, 2
      %v542 = vrot.slane %v518, 2
      %v543 = vrot.slane %v489, 2
      %v544 = vrot.slane %v519, 2
      %v545 = vrot.slane %v490, 2
      %v546 = vrot.slane %v520, 2
      %v547 = vrot.slane %v491, 2
      %v548 = vrot.slane %v521, 2
      %v549 = vrot.slane %v492, 2
      %v550 = vrot.slane %v522, 2
      %v551 = vrot.slane %v493, 2
      %v552 = vrot.slane %v523, 2
      %v553 = vrot.slane %v494, 2
      %v554 = vrot.slane %v524, 2
      %555 = vrot.lane.b32.xlu0 %v525, 126
      %v556 = vpop.permute.xlu0 %555
      %557 = vrot.lane.b32.xlu0 %v526, 126
      %v558 = vpop.permute.xlu0 %557
      %559 = vrot.lane.b32.xlu0 %v527, 126
      %v560 = vpop.permute.xlu0 %559
      %561 = vrot.lane.b32.xlu0 %v528, 126
      %v562 = vpop.permute.xlu0 %561
      %563 = vrot.lane.b32.xlu0 %v529, 126
      %v564 = vpop.permute.xlu0 %563
      %565 = vrot.lane.b32.xlu0 %v530, 126
      %v566 = vpop.permute.xlu0 %565
      %567 = vrot.lane.b32.xlu0 %v531, 126
      %v568 = vpop.permute.xlu0 %567
      %569 = vrot.lane.b32.xlu0 %v532, 126
      %v570 = vpop.permute.xlu0 %569
      %571 = vrot.lane.b32.xlu0 %v533, 126
      %v572 = vpop.permute.xlu0 %571
      %573 = vrot.lane.b32.xlu0 %v534, 126
      %v574 = vpop.permute.xlu0 %573
      %575 = vrot.lane.b32.xlu0 %v535, 126
      %v576 = vpop.permute.xlu0 %575
      %577 = vrot.lane.b32.xlu0 %v536, 126
      %v578 = vpop.permute.xlu0 %577
      %579 = vrot.lane.b32.xlu0 %v537, 126
      %v580 = vpop.permute.xlu0 %579
      %581 = vrot.lane.b32.xlu0 %v538, 126
      %v582 = vpop.permute.xlu0 %581
      %583 = vrot.lane.b32.xlu0 %v539, 126
      %v584 = vpop.permute.xlu0 %583
      %585 = vrot.lane.b32.xlu0 %v540, 126
      %v586 = vpop.permute.xlu0 %585
      %587 = vrot.lane.b32.xlu0 %v541, 126
      %v588 = vpop.permute.xlu0 %587
      %589 = vrot.lane.b32.xlu0 %v542, 126
      %v590 = vpop.permute.xlu0 %589
      %591 = vrot.lane.b32.xlu0 %v543, 126
      %v592 = vpop.permute.xlu0 %591
      %593 = vrot.lane.b32.xlu0 %v544, 126
      %v594 = vpop.permute.xlu0 %593
      %595 = vrot.lane.b32.xlu0 %v545, 126
      %v596 = vpop.permute.xlu0 %595
      %597 = vrot.lane.b32.xlu0 %v546, 126
      %v598 = vpop.permute.xlu0 %597
      %599 = vrot.lane.b32.xlu0 %v547, 126
      %v600 = vpop.permute.xlu0 %599
      %601 = vrot.lane.b32.xlu0 %v548, 126
      %v602 = vpop.permute.xlu0 %601
      %603 = vrot.lane.b32.xlu0 %v549, 126
      %v604 = vpop.permute.xlu0 %603
      %605 = vrot.lane.b32.xlu0 %v550, 126
      %v606 = vpop.permute.xlu0 %605
      %607 = vrot.lane.b32.xlu0 %v551, 126
      %v608 = vpop.permute.xlu0 %607
      %609 = vrot.lane.b32.xlu0 %v552, 126
      %v610 = vpop.permute.xlu0 %609
      %611 = vrot.lane.b32.xlu0 %v553, 126
      %v612 = vpop.permute.xlu0 %611
      %613 = vrot.lane.b32.xlu0 %v554, 126
      %v614 = vpop.permute.xlu0 %613
      %vm615 = vcmask 1031168
      %v616 = vsel %vm615, %v556, %v558
      %v617 = vsel %vm615, %v558, %v560
      %v618 = vsel %vm615, %v560, %v562
      %v619 = vsel %vm615, %v562, %v564
      %v620 = vsel %vm615, %v564, %v566
      %v621 = vsel %vm615, %v566, %v568
      %v622 = vsel %vm615, %v568, %v570
      %v623 = vsel %vm615, %v570, %v572
      %v624 = vsel %vm615, %v572, %v574
      %v625 = vsel %vm615, %v574, %v576
      %v626 = vsel %vm615, %v576, %v578
      %v627 = vsel %vm615, %v578, %v580
      %v628 = vsel %vm615, %v580, %v582
      %v629 = vsel %vm615, %v582, %v584
      %v630 = vsel %vm615, %v584, %v586
      %v631 = vsel %vm615, %v586, %v588
      %v632 = vsel %vm615, %v588, %v590
      %v633 = vsel %vm615, %v590, %v592
      %v634 = vsel %vm615, %v592, %v594
      %v635 = vsel %vm615, %v594, %v596
      %v636 = vsel %vm615, %v596, %v598
      %v637 = vsel %vm615, %v598, %v600
      %v638 = vsel %vm615, %v600, %v602
      %v639 = vsel %vm615, %v602, %v604
      %v640 = vsel %vm615, %v604, %v606
      %v641 = vsel %vm615, %v606, %v608
      %v642 = vsel %vm615, %v608, %v610
      %v643 = vsel %vm615, %v610, %v612
      %v644 = vsel %vm615, %v612, %v614
      %674 = vst [vmem:[#allocation2] sm:$0xc0] %v616
      %675 = vst [vmem:[#allocation2 + $0x8] sm:$0xc0] %v617
      %676 = vst [vmem:[#allocation2 + $0x10] sm:$0xc0] %v618
      %677 = vst [vmem:[#allocation2 + $0x18] sm:$0xc0] %v619
      %678 = vst [vmem:[#allocation2 + $0x20] sm:$0xc0] %v620
      %679 = vst [vmem:[#allocation2 + $0x28] sm:$0xc0] %v621
      %680 = vst [vmem:[#allocation2 + $0x30] sm:$0xc0] %v622
      %681 = vst [vmem:[#allocation2 + $0x38] sm:$0xc0] %v623
      %682 = vst [vmem:[#allocation2 + $0x40] sm:$0xc0] %v624
      %683 = vst [vmem:[#allocation2 + $0x48] sm:$0xc0] %v625
      %684 = vst [vmem:[#allocation2 + $0x50] sm:$0xc0] %v626
      %685 = vst [vmem:[#allocation2 + $0x58] sm:$0xc0] %v627
      %686 = vst [vmem:[#allocation2 + $0x60] sm:$0xc0] %v628
      %687 = vst [vmem:[#allocation2 + $0x68] sm:$0xc0] %v629
      %688 = vst [vmem:[#allocation2 + $0x70] sm:$0xc0] %v630
      %689 = vst [vmem:[#allocation2 + $0x78] sm:$0xc0] %v631
      %690 = vst [vmem:[#allocation2 + $0x80] sm:$0xc0] %v632
      %691 = vst [vmem:[#allocation2 + $0x88] sm:$0xc0] %v633
      %692 = vst [vmem:[#allocation2 + $0x90] sm:$0xc0] %v634
      %693 = vst [vmem:[#allocation2 + $0x98] sm:$0xc0] %v635
      %694 = vst [vmem:[#allocation2 + $0xa0] sm:$0xc0] %v636
      %695 = vst [vmem:[#allocation2 + $0xa8] sm:$0xc0] %v637
      %696 = vst [vmem:[#allocation2 + $0xb0] sm:$0xc0] %v638
      %697 = vst [vmem:[#allocation2 + $0xb8] sm:$0xc0] %v639
      %698 = vst [vmem:[#allocation2 + $0xc0] sm:$0xc0] %v640
      %699 = vst [vmem:[#allocation2 + $0xc8] sm:$0xc0] %v641
      %700 = vst [vmem:[#allocation2 + $0xd0] sm:$0xc0] %v642
      %701 = vst [vmem:[#allocation2 + $0xd8] sm:$0xc0] %v643
      %702 = vst [vmem:[#allocation2 + $0xe0] sm:$0xc0] %v644
      %703 = vst [vmem:[#allocation2 + $0xe8] sm:$0x1] %v616
      %704 = vst [vmem:[#allocation2 + $0xf0] sm:$0x1] %v617
      %705 = vst [vmem:[#allocation2 + $0xf8] sm:$0x1] %v618
      %706 = vst [vmem:[#allocation2 + $0x100] sm:$0x1] %v619
      %707 = vst [vmem:[#allocation2 + $0x108] sm:$0x1] %v620
      %708 = vst [vmem:[#allocation2 + $0x110] sm:$0x1] %v621
      %709 = vst [vmem:[#allocation2 + $0x118] sm:$0x1] %v622
      %710 = vst [vmem:[#allocation2 + $0x120] sm:$0x1] %v623
      %711 = vst [vmem:[#allocation2 + $0x128] sm:$0x1] %v624
      %712 = vst [vmem:[#allocation2 + $0x130] sm:$0x1] %v625
      %713 = vst [vmem:[#allocation2 + $0x138] sm:$0x1] %v626
      %714 = vst [vmem:[#allocation2 + $0x140] sm:$0x1] %v627
      %715 = vst [vmem:[#allocation2 + $0x148] sm:$0x1] %v628
      %716 = vst [vmem:[#allocation2 + $0x150] sm:$0x1] %v629
      %717 = vst [vmem:[#allocation2 + $0x158] sm:$0x1] %v630
      %718 = vst [vmem:[#allocation2 + $0x160] sm:$0x1] %v631
      %719 = vst [vmem:[#allocation2 + $0x168] sm:$0x1] %v632
      %720 = vst [vmem:[#allocation2 + $0x170] sm:$0x1] %v633
      %721 = vst [vmem:[#allocation2 + $0x178] sm:$0x1] %v634
      %722 = vst [vmem:[#allocation2 + $0x180] sm:$0x1] %v635
      %723 = vst [vmem:[#allocation2 + $0x188] sm:$0x1] %v636
      %724 = vst [vmem:[#allocation2 + $0x190] sm:$0x1] %v637
      %725 = vst [vmem:[#allocation2 + $0x198] sm:$0x1] %v638
      %726 = vst [vmem:[#allocation2 + $0x1a0] sm:$0x1] %v639
      %727 = vst [vmem:[#allocation2 + $0x1a8] sm:$0x1] %v640
      %728 = vst [vmem:[#allocation2 + $0x1b0] sm:$0x1] %v641
      %729 = vst [vmem:[#allocation2 + $0x1b8] sm:$0x1] %v642
      %730 = vst [vmem:[#allocation2 + $0x1c0] sm:$0x1] %v643
      %731 = vst [vmem:[#allocation2 + $0x1c8] sm:$0x1] %v644
      %v732 = vld [vmem:[%s165] sm:$0x77]
      %v733 = vld [vmem:[%s165 + $0x8] sm:$0x77]
      %v734 = vld [vmem:[%s165 + $0x10] sm:$0x77]
      %v735 = vld [vmem:[%s165 + $0x18] sm:$0x77]
      %v736 = vld [vmem:[%s165 + $0x20] sm:$0x77]
      %v737 = vld [vmem:[%s165 + $0x28] sm:$0x77]
      %v738 = vld [vmem:[%s165 + $0x30] sm:$0x77]
      %v739 = vld [vmem:[%s165 + $0x38] sm:$0x77]
      %v740 = vld [vmem:[%s165 + $0x40] sm:$0x77]
      %v741 = vld [vmem:[%s165 + $0x48] sm:$0x77]
      %v742 = vld [vmem:[%s165 + $0x50] sm:$0x77]
      %v743 = vld [vmem:[%s165 + $0x58] sm:$0x77]
      %v744 = vld [vmem:[%s165 + $0x60] sm:$0x77]
      %v745 = vld [vmem:[%s165 + $0x68] sm:$0x77]
      %v746 = vld [vmem:[%s165 + $0x70] sm:$0x77]
      %v762 = vcombine.high %v732, %v732
      %v763 = vcombine.high %v733, %v733
      %v764 = vcombine.high %v734, %v734
      %v765 = vcombine.high %v735, %v735
      %v766 = vcombine.high %v736, %v736
      %v767 = vcombine.high %v737, %v737
      %v768 = vcombine.high %v738, %v738
      %v769 = vcombine.high %v739, %v739
      %v770 = vcombine.high %v740, %v740
      %v771 = vcombine.high %v741, %v741
      %v772 = vcombine.high %v742, %v742
      %v773 = vcombine.high %v743, %v743
      %v774 = vcombine.high %v744, %v744
      %v775 = vcombine.high %v745, %v745
      %v776 = vcombine.high %v746, %v746
      %v777 = vrot.slane %v732, 7
      %v778 = vrot.slane %v762, 7
      %v779 = vrot.slane %v733, 7
      %v780 = vrot.slane %v763, 7
      %v781 = vrot.slane %v734, 7
      %v782 = vrot.slane %v764, 7
      %v783 = vrot.slane %v735, 7
      %v784 = vrot.slane %v765, 7
      %v785 = vrot.slane %v736, 7
      %v786 = vrot.slane %v766, 7
      %v787 = vrot.slane %v737, 7
      %v788 = vrot.slane %v767, 7
      %v789 = vrot.slane %v738, 7
      %v790 = vrot.slane %v768, 7
      %v791 = vrot.slane %v739, 7
      %v792 = vrot.slane %v769, 7
      %v793 = vrot.slane %v740, 7
      %v794 = vrot.slane %v770, 7
      %v795 = vrot.slane %v741, 7
      %v796 = vrot.slane %v771, 7
      %v797 = vrot.slane %v742, 7
      %v798 = vrot.slane %v772, 7
      %v799 = vrot.slane %v743, 7
      %v800 = vrot.slane %v773, 7
      %v801 = vrot.slane %v744, 7
      %v802 = vrot.slane %v774, 7
      %v803 = vrot.slane %v745, 7
      %v804 = vrot.slane %v775, 7
      %v805 = vrot.slane %v746, 7
      %v806 = vrot.slane %v776, 7
      %807 = vrot.lane.b32.xlu0 %v777, 112
      %v808 = vpop.permute.xlu0 %807
      %809 = vrot.lane.b32.xlu0 %v778, 112
      %v810 = vpop.permute.xlu0 %809
      %811 = vrot.lane.b32.xlu0 %v779, 112
      %v812 = vpop.permute.xlu0 %811
      %813 = vrot.lane.b32.xlu0 %v780, 112
      %v814 = vpop.permute.xlu0 %813
      %815 = vrot.lane.b32.xlu0 %v781, 112
      %v816 = vpop.permute.xlu0 %815
      %817 = vrot.lane.b32.xlu0 %v782, 112
      %v818 = vpop.permute.xlu0 %817
      %819 = vrot.lane.b32.xlu0 %v783, 112
      %v820 = vpop.permute.xlu0 %819
      %821 = vrot.lane.b32.xlu0 %v784, 112
      %v822 = vpop.permute.xlu0 %821
      %823 = vrot.lane.b32.xlu0 %v785, 112
      %v824 = vpop.permute.xlu0 %823
      %825 = vrot.lane.b32.xlu0 %v786, 112
      %v826 = vpop.permute.xlu0 %825
      %827 = vrot.lane.b32.xlu0 %v787, 112
      %v828 = vpop.permute.xlu0 %827
      %829 = vrot.lane.b32.xlu0 %v788, 112
      %v830 = vpop.permute.xlu0 %829
      %831 = vrot.lane.b32.xlu0 %v789, 112
      %v832 = vpop.permute.xlu0 %831
      %833 = vrot.lane.b32.xlu0 %v790, 112
      %v834 = vpop.permute.xlu0 %833
      %835 = vrot.lane.b32.xlu0 %v791, 112
      %v836 = vpop.permute.xlu0 %835
      %837 = vrot.lane.b32.xlu0 %v792, 112
      %v838 = vpop.permute.xlu0 %837
      %839 = vrot.lane.b32.xlu0 %v793, 112
      %v840 = vpop.permute.xlu0 %839
      %841 = vrot.lane.b32.xlu0 %v794, 112
      %v842 = vpop.permute.xlu0 %841
      %843 = vrot.lane.b32.xlu0 %v795, 112
      %v844 = vpop.permute.xlu0 %843
      %845 = vrot.lane.b32.xlu0 %v796, 112
      %v846 = vpop.permute.xlu0 %845
      %847 = vrot.lane.b32.xlu0 %v797, 112
      %v848 = vpop.permute.xlu0 %847
      %849 = vrot.lane.b32.xlu0 %v798, 112
      %v850 = vpop.permute.xlu0 %849
      %851 = vrot.lane.b32.xlu0 %v799, 112
      %v852 = vpop.permute.xlu0 %851
      %853 = vrot.lane.b32.xlu0 %v800, 112
      %v854 = vpop.permute.xlu0 %853
      %855 = vrot.lane.b32.xlu0 %v801, 112
      %v856 = vpop.permute.xlu0 %855
      %857 = vrot.lane.b32.xlu0 %v802, 112
      %v858 = vpop.permute.xlu0 %857
      %859 = vrot.lane.b32.xlu0 %v803, 112
      %v860 = vpop.permute.xlu0 %859
      %861 = vrot.lane.b32.xlu0 %v804, 112
      %v862 = vpop.permute.xlu0 %861
      %863 = vrot.lane.b32.xlu0 %v805, 112
      %v864 = vpop.permute.xlu0 %863
      %865 = vrot.lane.b32.xlu0 %v806, 112
      %v866 = vpop.permute.xlu0 %865
      %vm867 = vcmask 916480
      %v868 = vsel %vm867, %v808, %v810
      %v869 = vsel %vm867, %v810, %v812
      %v870 = vsel %vm867, %v812, %v814
      %v871 = vsel %vm867, %v814, %v816
      %v872 = vsel %vm867, %v816, %v818
      %v873 = vsel %vm867, %v818, %v820
      %v874 = vsel %vm867, %v820, %v822
      %v875 = vsel %vm867, %v822, %v824
      %v876 = vsel %vm867, %v824, %v826
      %v877 = vsel %vm867, %v826, %v828
      %v878 = vsel %vm867, %v828, %v830
      %v879 = vsel %vm867, %v830, %v832
      %v880 = vsel %vm867, %v832, %v834
      %v881 = vsel %vm867, %v834, %v836
      %v882 = vsel %vm867, %v836, %v838
      %v883 = vsel %vm867, %v838, %v840
      %v884 = vsel %vm867, %v840, %v842
      %v885 = vsel %vm867, %v842, %v844
      %v886 = vsel %vm867, %v844, %v846
      %v887 = vsel %vm867, %v846, %v848
      %v888 = vsel %vm867, %v848, %v850
      %v889 = vsel %vm867, %v850, %v852
      %v890 = vsel %vm867, %v852, %v854
      %v891 = vsel %vm867, %v854, %v856
      %v892 = vsel %vm867, %v856, %v858
      %v893 = vsel %vm867, %v858, %v860
      %v894 = vsel %vm867, %v860, %v862
      %v895 = vsel %vm867, %v862, %v864
      %v896 = vsel %vm867, %v864, %v866
      %926 = vst [vmem:[#allocation2 + $0xe8] sm:$0xe] %v868
      %927 = vst [vmem:[#allocation2 + $0xf0] sm:$0xe] %v869
      %928 = vst [vmem:[#allocation2 + $0xf8] sm:$0xe] %v870
      %929 = vst [vmem:[#allocation2 + $0x100] sm:$0xe] %v871
      %930 = vst [vmem:[#allocation2 + $0x108] sm:$0xe] %v872
      %931 = vst [vmem:[#allocation2 + $0x110] sm:$0xe] %v873
      %932 = vst [vmem:[#allocation2 + $0x118] sm:$0xe] %v874
      %933 = vst [vmem:[#allocation2 + $0x120] sm:$0xe] %v875
      %934 = vst [vmem:[#allocation2 + $0x128] sm:$0xe] %v876
      %935 = vst [vmem:[#allocation2 + $0x130] sm:$0xe] %v877
      %936 = vst [vmem:[#allocation2 + $0x138] sm:$0xe] %v878
      %937 = vst [vmem:[#allocation2 + $0x140] sm:$0xe] %v879
      %938 = vst [vmem:[#allocation2 + $0x148] sm:$0xe] %v880
      %939 = vst [vmem:[#allocation2 + $0x150] sm:$0xe] %v881
      %940 = vst [vmem:[#allocation2 + $0x158] sm:$0xe] %v882
      %941 = vst [vmem:[#allocation2 + $0x160] sm:$0xe] %v883
      %942 = vst [vmem:[#allocation2 + $0x168] sm:$0xe] %v884
      %943 = vst [vmem:[#allocation2 + $0x170] sm:$0xe] %v885
      %944 = vst [vmem:[#allocation2 + $0x178] sm:$0xe] %v886
      %945 = vst [vmem:[#allocation2 + $0x180] sm:$0xe] %v887
      %946 = vst [vmem:[#allocation2 + $0x188] sm:$0xe] %v888
      %947 = vst [vmem:[#allocation2 + $0x190] sm:$0xe] %v889
      %948 = vst [vmem:[#allocation2 + $0x198] sm:$0xe] %v890
      %949 = vst [vmem:[#allocation2 + $0x1a0] sm:$0xe] %v891
      %950 = vst [vmem:[#allocation2 + $0x1a8] sm:$0xe] %v892
      %951 = vst [vmem:[#allocation2 + $0x1b0] sm:$0xe] %v893
      %952 = vst [vmem:[#allocation2 + $0x1b8] sm:$0xe] %v894
      %953 = vst [vmem:[#allocation2 + $0x1c0] sm:$0xe] %v895
      %954 = vst [vmem:[#allocation2 + $0x1c8] sm:$0xe] %v896
      %v955 = vld [vmem:[%s165] sm:$0x77]
      %v956 = vld [vmem:[%s165 + $0x8] sm:$0x77]
      %v957 = vld [vmem:[%s165 + $0x10] sm:$0x77]
      %v958 = vld [vmem:[%s165 + $0x18] sm:$0x77]
      %v959 = vld [vmem:[%s165 + $0x20] sm:$0x77]
      %v960 = vld [vmem:[%s165 + $0x28] sm:$0x77]
      %v961 = vld [vmem:[%s165 + $0x30] sm:$0x77]
      %v962 = vld [vmem:[%s165 + $0x38] sm:$0x77]
      %v963 = vld [vmem:[%s165 + $0x40] sm:$0x77]
      %v964 = vld [vmem:[%s165 + $0x48] sm:$0x77]
      %v965 = vld [vmem:[%s165 + $0x50] sm:$0x77]
      %v966 = vld [vmem:[%s165 + $0x58] sm:$0x77]
      %v967 = vld [vmem:[%s165 + $0x60] sm:$0x77]
      %v968 = vld [vmem:[%s165 + $0x68] sm:$0x77]
      %v969 = vld [vmem:[%s165 + $0x70] sm:$0x77]
      %v985 = vcombine.low %v955, %v955
      %v986 = vcombine.low %v956, %v956
      %v987 = vcombine.low %v957, %v957
      %v988 = vcombine.low %v958, %v958
      %v989 = vcombine.low %v959, %v959
      %v990 = vcombine.low %v960, %v960
      %v991 = vcombine.low %v961, %v961
      %v992 = vcombine.low %v962, %v962
      %v993 = vcombine.low %v963, %v963
      %v994 = vcombine.low %v964, %v964
      %v995 = vcombine.low %v965, %v965
      %v996 = vcombine.low %v966, %v966
      %v997 = vcombine.low %v967, %v967
      %v998 = vcombine.low %v968, %v968
      %v999 = vcombine.low %v969, %v969
      %1000 = vrot.lane.b32.xlu0 %v985, 111
      %v1001 = vpop.permute.xlu0 %1000
      %1002 = vrot.lane.b32.xlu0 %v955, 111
      %v1003 = vpop.permute.xlu0 %1002
      %1004 = vrot.lane.b32.xlu0 %v986, 111
      %v1005 = vpop.permute.xlu0 %1004
      %1006 = vrot.lane.b32.xlu0 %v956, 111
      %v1007 = vpop.permute.xlu0 %1006
      %1008 = vrot.lane.b32.xlu0 %v987, 111
      %v1009 = vpop.permute.xlu0 %1008
      %1010 = vrot.lane.b32.xlu0 %v957, 111
      %v1011 = vpop.permute.xlu0 %1010
      %1012 = vrot.lane.b32.xlu0 %v988, 111
      %v1013 = vpop.permute.xlu0 %1012
      %1014 = vrot.lane.b32.xlu0 %v958, 111
      %v1015 = vpop.permute.xlu0 %1014
      %1016 = vrot.lane.b32.xlu0 %v989, 111
      %v1017 = vpop.permute.xlu0 %1016
      %1018 = vrot.lane.b32.xlu0 %v959, 111
      %v1019 = vpop.permute.xlu0 %1018
      %1020 = vrot.lane.b32.xlu0 %v990, 111
      %v1021 = vpop.permute.xlu0 %1020
      %1022 = vrot.lane.b32.xlu0 %v960, 111
      %v1023 = vpop.permute.xlu0 %1022
      %1024 = vrot.lane.b32.xlu0 %v991, 111
      %v1025 = vpop.permute.xlu0 %1024
      %1026 = vrot.lane.b32.xlu0 %v961, 111
      %v1027 = vpop.permute.xlu0 %1026
      %1028 = vrot.lane.b32.xlu0 %v992, 111
      %v1029 = vpop.permute.xlu0 %1028
      %1030 = vrot.lane.b32.xlu0 %v962, 111
      %v1031 = vpop.permute.xlu0 %1030
      %1032 = vrot.lane.b32.xlu0 %v993, 111
      %v1033 = vpop.permute.xlu0 %1032
      %1034 = vrot.lane.b32.xlu0 %v963, 111
      %v1035 = vpop.permute.xlu0 %1034
      %1036 = vrot.lane.b32.xlu0 %v994, 111
      %v1037 = vpop.permute.xlu0 %1036
      %1038 = vrot.lane.b32.xlu0 %v964, 111
      %v1039 = vpop.permute.xlu0 %1038
      %1040 = vrot.lane.b32.xlu0 %v995, 111
      %v1041 = vpop.permute.xlu0 %1040
      %1042 = vrot.lane.b32.xlu0 %v965, 111
      %v1043 = vpop.permute.xlu0 %1042
      %1044 = vrot.lane.b32.xlu0 %v996, 111
      %v1045 = vpop.permute.xlu0 %1044
      %1046 = vrot.lane.b32.xlu0 %v966, 111
      %v1047 = vpop.permute.xlu0 %1046
      %1048 = vrot.lane.b32.xlu0 %v997, 111
      %v1049 = vpop.permute.xlu0 %1048
      %1050 = vrot.lane.b32.xlu0 %v967, 111
      %v1051 = vpop.permute.xlu0 %1050
      %1052 = vrot.lane.b32.xlu0 %v998, 111
      %v1053 = vpop.permute.xlu0 %1052
      %1054 = vrot.lane.b32.xlu0 %v968, 111
      %v1055 = vpop.permute.xlu0 %1054
      %1056 = vrot.lane.b32.xlu0 %v999, 111
      %v1057 = vpop.permute.xlu0 %1056
      %1058 = vrot.lane.b32.xlu0 %v969, 111
      %v1059 = vpop.permute.xlu0 %1058
      %vm1060 = vcmask 908288
      %v1061 = vsel %vm1060, %v1001, %v1003
      %v1062 = vsel %vm1060, %v1003, %v1005
      %v1063 = vsel %vm1060, %v1005, %v1007
      %v1064 = vsel %vm1060, %v1007, %v1009
      %v1065 = vsel %vm1060, %v1009, %v1011
      %v1066 = vsel %vm1060, %v1011, %v1013
      %v1067 = vsel %vm1060, %v1013, %v1015
      %v1068 = vsel %vm1060, %v1015, %v1017
      %v1069 = vsel %vm1060, %v1017, %v1019
      %v1070 = vsel %vm1060, %v1019, %v1021
      %v1071 = vsel %vm1060, %v1021, %v1023
      %v1072 = vsel %vm1060, %v1023, %v1025
      %v1073 = vsel %vm1060, %v1025, %v1027
      %v1074 = vsel %vm1060, %v1027, %v1029
      %v1075 = vsel %vm1060, %v1029, %v1031
      %v1076 = vsel %vm1060, %v1031, %v1033
      %v1077 = vsel %vm1060, %v1033, %v1035
      %v1078 = vsel %vm1060, %v1035, %v1037
      %v1079 = vsel %vm1060, %v1037, %v1039
      %v1080 = vsel %vm1060, %v1039, %v1041
      %v1081 = vsel %vm1060, %v1041, %v1043
      %v1082 = vsel %vm1060, %v1043, %v1045
      %v1083 = vsel %vm1060, %v1045, %v1047
      %v1084 = vsel %vm1060, %v1047, %v1049
      %v1085 = vsel %vm1060, %v1049, %v1051
      %v1086 = vsel %vm1060, %v1051, %v1053
      %v1087 = vsel %vm1060, %v1053, %v1055
      %v1088 = vsel %vm1060, %v1055, %v1057
      %v1089 = vsel %vm1060, %v1057, %v1059
      %1119 = vst [vmem:[#allocation2 + $0xe8] sm:$0x70] %v1061
      %1120 = vst [vmem:[#allocation2 + $0xf0] sm:$0x70] %v1062
      %1121 = vst [vmem:[#allocation2 + $0xf8] sm:$0x70] %v1063
      %1122 = vst [vmem:[#allocation2 + $0x100] sm:$0x70] %v1064
      %1123 = vst [vmem:[#allocation2 + $0x108] sm:$0x70] %v1065
      %1124 = vst [vmem:[#allocation2 + $0x110] sm:$0x70] %v1066
      %1125 = vst [vmem:[#allocation2 + $0x118] sm:$0x70] %v1067
      %1126 = vst [vmem:[#allocation2 + $0x120] sm:$0x70] %v1068
      %1127 = vst [vmem:[#allocation2 + $0x128] sm:$0x70] %v1069
      %1128 = vst [vmem:[#allocation2 + $0x130] sm:$0x70] %v1070
      %1129 = vst [vmem:[#allocation2 + $0x138] sm:$0x70] %v1071
      %1130 = vst [vmem:[#allocation2 + $0x140] sm:$0x70] %v1072
      %1131 = vst [vmem:[#allocation2 + $0x148] sm:$0x70] %v1073
      %1132 = vst [vmem:[#allocation2 + $0x150] sm:$0x70] %v1074
      %1133 = vst [vmem:[#allocation2 + $0x158] sm:$0x70] %v1075
      %1134 = vst [vmem:[#allocation2 + $0x160] sm:$0x70] %v1076
      %1135 = vst [vmem:[#allocation2 + $0x168] sm:$0x70] %v1077
      %1136 = vst [vmem:[#allocation2 + $0x170] sm:$0x70] %v1078
      %1137 = vst [vmem:[#allocation2 + $0x178] sm:$0x70] %v1079
      %1138 = vst [vmem:[#allocation2 + $0x180] sm:$0x70] %v1080
      %1139 = vst [vmem:[#allocation2 + $0x188] sm:$0x70] %v1081
      %1140 = vst [vmem:[#allocation2 + $0x190] sm:$0x70] %v1082
      %1141 = vst [vmem:[#allocation2 + $0x198] sm:$0x70] %v1083
      %1142 = vst [vmem:[#allocation2 + $0x1a0] sm:$0x70] %v1084
      %1143 = vst [vmem:[#allocation2 + $0x1a8] sm:$0x70] %v1085
      %1144 = vst [vmem:[#allocation2 + $0x1b0] sm:$0x70] %v1086
      %1145 = vst [vmem:[#allocation2 + $0x1b8] sm:$0x70] %v1087
      %1146 = vst [vmem:[#allocation2 + $0x1c0] sm:$0x70] %v1088
      %1147 = vst [vmem:[#allocation2 + $0x1c8] sm:$0x70] %v1089
      %v1148 = vld [vmem:[%s165] sm:$0x77]
      %v1149 = vld [vmem:[%s165 + $0x8] sm:$0x77]
      %v1150 = vld [vmem:[%s165 + $0x10] sm:$0x77]
      %v1151 = vld [vmem:[%s165 + $0x18] sm:$0x77]
      %v1152 = vld [vmem:[%s165 + $0x20] sm:$0x77]
      %v1153 = vld [vmem:[%s165 + $0x28] sm:$0x77]
      %v1154 = vld [vmem:[%s165 + $0x30] sm:$0x77]
      %v1155 = vld [vmem:[%s165 + $0x38] sm:$0x77]
      %v1156 = vld [vmem:[%s165 + $0x40] sm:$0x77]
      %v1157 = vld [vmem:[%s165 + $0x48] sm:$0x77]
      %v1158 = vld [vmem:[%s165 + $0x50] sm:$0x77]
      %v1159 = vld [vmem:[%s165 + $0x58] sm:$0x77]
      %v1160 = vld [vmem:[%s165 + $0x60] sm:$0x77]
      %v1161 = vld [vmem:[%s165 + $0x68] sm:$0x77]
      %v1162 = vld [vmem:[%s165 + $0x70] sm:$0x77]
      %v1178 = vcombine.high %v1148, %v1148
      %v1179 = vcombine.high %v1149, %v1149
      %v1180 = vcombine.high %v1150, %v1150
      %v1181 = vcombine.high %v1151, %v1151
      %v1182 = vcombine.high %v1152, %v1152
      %v1183 = vcombine.high %v1153, %v1153
      %v1184 = vcombine.high %v1154, %v1154
      %v1185 = vcombine.high %v1155, %v1155
      %v1186 = vcombine.high %v1156, %v1156
      %v1187 = vcombine.high %v1157, %v1157
      %v1188 = vcombine.high %v1158, %v1158
      %v1189 = vcombine.high %v1159, %v1159
      %v1190 = vcombine.high %v1160, %v1160
      %v1191 = vcombine.high %v1161, %v1161
      %v1192 = vcombine.high %v1162, %v1162
      %v1193 = vrot.slane %v1148, 1
      %v1194 = vrot.slane %v1178, 1
      %v1195 = vrot.slane %v1149, 1
      %v1196 = vrot.slane %v1179, 1
      %v1197 = vrot.slane %v1150, 1
      %v1198 = vrot.slane %v1180, 1
      %v1199 = vrot.slane %v1151, 1
      %v1200 = vrot.slane %v1181, 1
      %v1201 = vrot.slane %v1152, 1
      %v1202 = vrot.slane %v1182, 1
      %v1203 = vrot.slane %v1153, 1
      %v1204 = vrot.slane %v1183, 1
      %v1205 = vrot.slane %v1154, 1
      %v1206 = vrot.slane %v1184, 1
      %v1207 = vrot.slane %v1155, 1
      %v1208 = vrot.slane %v1185, 1
      %v1209 = vrot.slane %v1156, 1
      %v1210 = vrot.slane %v1186, 1
      %v1211 = vrot.slane %v1157, 1
      %v1212 = vrot.slane %v1187, 1
      %v1213 = vrot.slane %v1158, 1
      %v1214 = vrot.slane %v1188, 1
      %v1215 = vrot.slane %v1159, 1
      %v1216 = vrot.slane %v1189, 1
      %v1217 = vrot.slane %v1160, 1
      %v1218 = vrot.slane %v1190, 1
      %v1219 = vrot.slane %v1161, 1
      %v1220 = vrot.slane %v1191, 1
      %v1221 = vrot.slane %v1162, 1
      %v1222 = vrot.slane %v1192, 1
      %1223 = vrot.lane.b32.xlu0 %v1193, 110
      %v1224 = vpop.permute.xlu0 %1223
      %1225 = vrot.lane.b32.xlu0 %v1194, 110
      %v1226 = vpop.permute.xlu0 %1225
      %1227 = vrot.lane.b32.xlu0 %v1195, 110
      %v1228 = vpop.permute.xlu0 %1227
      %1229 = vrot.lane.b32.xlu0 %v1196, 110
      %v1230 = vpop.permute.xlu0 %1229
      %1231 = vrot.lane.b32.xlu0 %v1197, 110
      %v1232 = vpop.permute.xlu0 %1231
      %1233 = vrot.lane.b32.xlu0 %v1198, 110
      %v1234 = vpop.permute.xlu0 %1233
      %1235 = vrot.lane.b32.xlu0 %v1199, 110
      %v1236 = vpop.permute.xlu0 %1235
      %1237 = vrot.lane.b32.xlu0 %v1200, 110
      %v1238 = vpop.permute.xlu0 %1237
      %1239 = vrot.lane.b32.xlu0 %v1201, 110
      %v1240 = vpop.permute.xlu0 %1239
      %1241 = vrot.lane.b32.xlu0 %v1202, 110
      %v1242 = vpop.permute.xlu0 %1241
      %1243 = vrot.lane.b32.xlu0 %v1203, 110
      %v1244 = vpop.permute.xlu0 %1243
      %1245 = vrot.lane.b32.xlu0 %v1204, 110
      %v1246 = vpop.permute.xlu0 %1245
      %1247 = vrot.lane.b32.xlu0 %v1205, 110
      %v1248 = vpop.permute.xlu0 %1247
      %1249 = vrot.lane.b32.xlu0 %v1206, 110
      %v1250 = vpop.permute.xlu0 %1249
      %1251 = vrot.lane.b32.xlu0 %v1207, 110
      %v1252 = vpop.permute.xlu0 %1251
      %1253 = vrot.lane.b32.xlu0 %v1208, 110
      %v1254 = vpop.permute.xlu0 %1253
      %1255 = vrot.lane.b32.xlu0 %v1209, 110
      %v1256 = vpop.permute.xlu0 %1255
      %1257 = vrot.lane.b32.xlu0 %v1210, 110
      %v1258 = vpop.permute.xlu0 %1257
      %1259 = vrot.lane.b32.xlu0 %v1211, 110
      %v1260 = vpop.permute.xlu0 %1259
      %1261 = vrot.lane.b32.xlu0 %v1212, 110
      %v1262 = vpop.permute.xlu0 %1261
      %1263 = vrot.lane.b32.xlu0 %v1213, 110
      %v1264 = vpop.permute.xlu0 %1263
      %1265 = vrot.lane.b32.xlu0 %v1214, 110
      %v1266 = vpop.permute.xlu0 %1265
      %1267 = vrot.lane.b32.xlu0 %v1215, 110
      %v1268 = vpop.permute.xlu0 %1267
      %1269 = vrot.lane.b32.xlu0 %v1216, 110
      %v1270 = vpop.permute.xlu0 %1269
      %1271 = vrot.lane.b32.xlu0 %v1217, 110
      %v1272 = vpop.permute.xlu0 %1271
      %1273 = vrot.lane.b32.xlu0 %v1218, 110
      %v1274 = vpop.permute.xlu0 %1273
      %1275 = vrot.lane.b32.xlu0 %v1219, 110
      %v1276 = vpop.permute.xlu0 %1275
      %1277 = vrot.lane.b32.xlu0 %v1220, 110
      %v1278 = vpop.permute.xlu0 %1277
      %1279 = vrot.lane.b32.xlu0 %v1221, 110
      %v1280 = vpop.permute.xlu0 %1279
      %1281 = vrot.lane.b32.xlu0 %v1222, 110
      %v1282 = vpop.permute.xlu0 %1281
      %vm1283 = vcmask 900096
      %v1284 = vsel %vm1283, %v1224, %v1226
      %v1285 = vsel %vm1283, %v1226, %v1228
      %v1286 = vsel %vm1283, %v1228, %v1230
      %v1287 = vsel %vm1283, %v1230, %v1232
      %v1288 = vsel %vm1283, %v1232, %v1234
      %v1289 = vsel %vm1283, %v1234, %v1236
      %v1290 = vsel %vm1283, %v1236, %v1238
      %v1291 = vsel %vm1283, %v1238, %v1240
      %v1292 = vsel %vm1283, %v1240, %v1242
      %v1293 = vsel %vm1283, %v1242, %v1244
      %v1294 = vsel %vm1283, %v1244, %v1246
      %v1295 = vsel %vm1283, %v1246, %v1248
      %v1296 = vsel %vm1283, %v1248, %v1250
      %v1297 = vsel %vm1283, %v1250, %v1252
      %v1298 = vsel %vm1283, %v1252, %v1254
      %v1299 = vsel %vm1283, %v1254, %v1256
      %v1300 = vsel %vm1283, %v1256, %v1258
      %v1301 = vsel %vm1283, %v1258, %v1260
      %v1302 = vsel %vm1283, %v1260, %v1262
      %v1303 = vsel %vm1283, %v1262, %v1264
      %v1304 = vsel %vm1283, %v1264, %v1266
      %v1305 = vsel %vm1283, %v1266, %v1268
      %v1306 = vsel %vm1283, %v1268, %v1270
      %v1307 = vsel %vm1283, %v1270, %v1272
      %v1308 = vsel %vm1283, %v1272, %v1274
      %v1309 = vsel %vm1283, %v1274, %v1276
      %v1310 = vsel %vm1283, %v1276, %v1278
      %v1311 = vsel %vm1283, %v1278, %v1280
      %v1312 = vsel %vm1283, %v1280, %v1282
      %1342 = vst [vmem:[#allocation2 + $0xe8] sm:$0x80] %v1284
      %1343 = vst [vmem:[#allocation2 + $0xf0] sm:$0x80] %v1285
      %1344 = vst [vmem:[#allocation2 + $0xf8] sm:$0x80] %v1286
      %1345 = vst [vmem:[#allocation2 + $0x100] sm:$0x80] %v1287
      %1346 = vst [vmem:[#allocation2 + $0x108] sm:$0x80] %v1288
      %1347 = vst [vmem:[#allocation2 + $0x110] sm:$0x80] %v1289
      %1348 = vst [vmem:[#allocation2 + $0x118] sm:$0x80] %v1290
      %1349 = vst [vmem:[#allocation2 + $0x120] sm:$0x80] %v1291
      %1350 = vst [vmem:[#allocation2 + $0x128] sm:$0x80] %v1292
      %1351 = vst [vmem:[#allocation2 + $0x130] sm:$0x80] %v1293
      %1352 = vst [vmem:[#allocation2 + $0x138] sm:$0x80] %v1294
      %1353 = vst [vmem:[#allocation2 + $0x140] sm:$0x80] %v1295
      %1354 = vst [vmem:[#allocation2 + $0x148] sm:$0x80] %v1296
      %1355 = vst [vmem:[#allocation2 + $0x150] sm:$0x80] %v1297
      %1356 = vst [vmem:[#allocation2 + $0x158] sm:$0x80] %v1298
      %1357 = vst [vmem:[#allocation2 + $0x160] sm:$0x80] %v1299
      %1358 = vst [vmem:[#allocation2 + $0x168] sm:$0x80] %v1300
      %1359 = vst [vmem:[#allocation2 + $0x170] sm:$0x80] %v1301
      %1360 = vst [vmem:[#allocation2 + $0x178] sm:$0x80] %v1302
      %1361 = vst [vmem:[#allocation2 + $0x180] sm:$0x80] %v1303
      %1362 = vst [vmem:[#allocation2 + $0x188] sm:$0x80] %v1304
      %1363 = vst [vmem:[#allocation2 + $0x190] sm:$0x80] %v1305
      %1364 = vst [vmem:[#allocation2 + $0x198] sm:$0x80] %v1306
      %1365 = vst [vmem:[#allocation2 + $0x1a0] sm:$0x80] %v1307
      %1366 = vst [vmem:[#allocation2 + $0x1a8] sm:$0x80] %v1308
      %1367 = vst [vmem:[#allocation2 + $0x1b0] sm:$0x80] %v1309
      %1368 = vst [vmem:[#allocation2 + $0x1b8] sm:$0x80] %v1310
      %1369 = vst [vmem:[#allocation2 + $0x1c0] sm:$0x80] %v1311
      %1370 = vst [vmem:[#allocation2 + $0x1c8] sm:$0x80] %v1312
      %1371 = vst [vmem:[#allocation2 + $0x1d0] sm:$0x3] %v1284
      %1372 = vst [vmem:[#allocation2 + $0x1d8] sm:$0x3] %v1285
      %1373 = vst [vmem:[#allocation2 + $0x1e0] sm:$0x3] %v1286
      %1374 = vst [vmem:[#allocation2 + $0x1e8] sm:$0x3] %v1287
      %1375 = vst [vmem:[#allocation2 + $0x1f0] sm:$0x3] %v1288
      %1376 = vst [vmem:[#allocation2 + $0x1f8] sm:$0x3] %v1289
      %1377 = vst [vmem:[#allocation2 + $0x200] sm:$0x3] %v1290
      %1378 = vst [vmem:[#allocation2 + $0x208] sm:$0x3] %v1291
      %1379 = vst [vmem:[#allocation2 + $0x210] sm:$0x3] %v1292
      %1380 = vst [vmem:[#allocation2 + $0x218] sm:$0x3] %v1293
      %1381 = vst [vmem:[#allocation2 + $0x220] sm:$0x3] %v1294
      %1382 = vst [vmem:[#allocation2 + $0x228] sm:$0x3] %v1295
      %1383 = vst [vmem:[#allocation2 + $0x230] sm:$0x3] %v1296
      %1384 = vst [vmem:[#allocation2 + $0x238] sm:$0x3] %v1297
      %1385 = vst [vmem:[#allocation2 + $0x240] sm:$0x3] %v1298
      %1386 = vst [vmem:[#allocation2 + $0x248] sm:$0x3] %v1299
      %1387 = vst [vmem:[#allocation2 + $0x250] sm:$0x3] %v1300
      %1388 = vst [vmem:[#allocation2 + $0x258] sm:$0x3] %v1301
      %1389 = vst [vmem:[#allocation2 + $0x260] sm:$0x3] %v1302
      %1390 = vst [vmem:[#allocation2 + $0x268] sm:$0x3] %v1303
      %1391 = vst [vmem:[#allocation2 + $0x270] sm:$0x3] %v1304
      %1392 = vst [vmem:[#allocation2 + $0x278] sm:$0x3] %v1305
      %1393 = vst [vmem:[#allocation2 + $0x280] sm:$0x3] %v1306
      %1394 = vst [vmem:[#allocation2 + $0x288] sm:$0x3] %v1307
      %1395 = vst [vmem:[#allocation2 + $0x290] sm:$0x3] %v1308
      %1396 = vst [vmem:[#allocation2 + $0x298] sm:$0x3] %v1309
      %1397 = vst [vmem:[#allocation2 + $0x2a0] sm:$0x3] %v1310
      %1398 = vst [vmem:[#allocation2 + $0x2a8] sm:$0x3] %v1311
      %1399 = vst [vmem:[#allocation2 + $0x2b0] sm:$0x3] %v1312
      %v1400 = vld [vmem:[%s165] sm:$0x77]
      %v1401 = vld [vmem:[%s165 + $0x8] sm:$0x77]
      %v1402 = vld [vmem:[%s165 + $0x10] sm:$0x77]
      %v1403 = vld [vmem:[%s165 + $0x18] sm:$0x77]
      %v1404 = vld [vmem:[%s165 + $0x20] sm:$0x77]
      %v1405 = vld [vmem:[%s165 + $0x28] sm:$0x77]
      %v1406 = vld [vmem:[%s165 + $0x30] sm:$0x77]
      %v1407 = vld [vmem:[%s165 + $0x38] sm:$0x77]
      %v1408 = vld [vmem:[%s165 + $0x40] sm:$0x77]
      %v1409 = vld [vmem:[%s165 + $0x48] sm:$0x77]
      %v1410 = vld [vmem:[%s165 + $0x50] sm:$0x77]
      %v1411 = vld [vmem:[%s165 + $0x58] sm:$0x77]
      %v1412 = vld [vmem:[%s165 + $0x60] sm:$0x77]
      %v1413 = vld [vmem:[%s165 + $0x68] sm:$0x77]
      %v1414 = vld [vmem:[%s165 + $0x70] sm:$0x77]
      %v1430 = vcombine.high %v1400, %v1400
      %v1431 = vcombine.high %v1401, %v1401
      %v1432 = vcombine.high %v1402, %v1402
      %v1433 = vcombine.high %v1403, %v1403
      %v1434 = vcombine.high %v1404, %v1404
      %v1435 = vcombine.high %v1405, %v1405
      %v1436 = vcombine.high %v1406, %v1406
      %v1437 = vcombine.high %v1407, %v1407
      %v1438 = vcombine.high %v1408, %v1408
      %v1439 = vcombine.high %v1409, %v1409
      %v1440 = vcombine.high %v1410, %v1410
      %v1441 = vcombine.high %v1411, %v1411
      %v1442 = vcombine.high %v1412, %v1412
      %v1443 = vcombine.high %v1413, %v1413
      %v1444 = vcombine.high %v1414, %v1414
      %v1445 = vrot.slane %v1400, 6
      %v1446 = vrot.slane %v1430, 6
      %v1447 = vrot.slane %v1401, 6
      %v1448 = vrot.slane %v1431, 6
      %v1449 = vrot.slane %v1402, 6
      %v1450 = vrot.slane %v1432, 6
      %v1451 = vrot.slane %v1403, 6
      %v1452 = vrot.slane %v1433, 6
      %v1453 = vrot.slane %v1404, 6
      %v1454 = vrot.slane %v1434, 6
      %v1455 = vrot.slane %v1405, 6
      %v1456 = vrot.slane %v1435, 6
      %v1457 = vrot.slane %v1406, 6
      %v1458 = vrot.slane %v1436, 6
      %v1459 = vrot.slane %v1407, 6
      %v1460 = vrot.slane %v1437, 6
      %v1461 = vrot.slane %v1408, 6
      %v1462 = vrot.slane %v1438, 6
      %v1463 = vrot.slane %v1409, 6
      %v1464 = vrot.slane %v1439, 6
      %v1465 = vrot.slane %v1410, 6
      %v1466 = vrot.slane %v1440, 6
      %v1467 = vrot.slane %v1411, 6
      %v1468 = vrot.slane %v1441, 6
      %v1469 = vrot.slane %v1412, 6
      %v1470 = vrot.slane %v1442, 6
      %v1471 = vrot.slane %v1413, 6
      %v1472 = vrot.slane %v1443, 6
      %v1473 = vrot.slane %v1414, 6
      %v1474 = vrot.slane %v1444, 6
      %1475 = vrot.lane.b32.xlu0 %v1445, 96
      %v1476 = vpop.permute.xlu0 %1475
      %1477 = vrot.lane.b32.xlu0 %v1446, 96
      %v1478 = vpop.permute.xlu0 %1477
      %1479 = vrot.lane.b32.xlu0 %v1447, 96
      %v1480 = vpop.permute.xlu0 %1479
      %1481 = vrot.lane.b32.xlu0 %v1448, 96
      %v1482 = vpop.permute.xlu0 %1481
      %1483 = vrot.lane.b32.xlu0 %v1449, 96
      %v1484 = vpop.permute.xlu0 %1483
      %1485 = vrot.lane.b32.xlu0 %v1450, 96
      %v1486 = vpop.permute.xlu0 %1485
      %1487 = vrot.lane.b32.xlu0 %v1451, 96
      %v1488 = vpop.permute.xlu0 %1487
      %1489 = vrot.lane.b32.xlu0 %v1452, 96
      %v1490 = vpop.permute.xlu0 %1489
      %1491 = vrot.lane.b32.xlu0 %v1453, 96
      %v1492 = vpop.permute.xlu0 %1491
      %1493 = vrot.lane.b32.xlu0 %v1454, 96
      %v1494 = vpop.permute.xlu0 %1493
      %1495 = vrot.lane.b32.xlu0 %v1455, 96
      %v1496 = vpop.permute.xlu0 %1495
      %1497 = vrot.lane.b32.xlu0 %v1456, 96
      %v1498 = vpop.permute.xlu0 %1497
      %1499 = vrot.lane.b32.xlu0 %v1457, 96
      %v1500 = vpop.permute.xlu0 %1499
      %1501 = vrot.lane.b32.xlu0 %v1458, 96
      %v1502 = vpop.permute.xlu0 %1501
      %1503 = vrot.lane.b32.xlu0 %v1459, 96
      %v1504 = vpop.permute.xlu0 %1503
      %1505 = vrot.lane.b32.xlu0 %v1460, 96
      %v1506 = vpop.permute.xlu0 %1505
      %1507 = vrot.lane.b32.xlu0 %v1461, 96
      %v1508 = vpop.permute.xlu0 %1507
      %1509 = vrot.lane.b32.xlu0 %v1462, 96
      %v1510 = vpop.permute.xlu0 %1509
      %1511 = vrot.lane.b32.xlu0 %v1463, 96
      %v1512 = vpop.permute.xlu0 %1511
      %1513 = vrot.lane.b32.xlu0 %v1464, 96
      %v1514 = vpop.permute.xlu0 %1513
      %1515 = vrot.lane.b32.xlu0 %v1465, 96
      %v1516 = vpop.permute.xlu0 %1515
      %1517 = vrot.lane.b32.xlu0 %v1466, 96
      %v1518 = vpop.permute.xlu0 %1517
      %1519 = vrot.lane.b32.xlu0 %v1467, 96
      %v1520 = vpop.permute.xlu0 %1519
      %1521 = vrot.lane.b32.xlu0 %v1468, 96
      %v1522 = vpop.permute.xlu0 %1521
      %1523 = vrot.lane.b32.xlu0 %v1469, 96
      %v1524 = vpop.permute.xlu0 %1523
      %1525 = vrot.lane.b32.xlu0 %v1470, 96
      %v1526 = vpop.permute.xlu0 %1525
      %1527 = vrot.lane.b32.xlu0 %v1471, 96
      %v1528 = vpop.permute.xlu0 %1527
      %1529 = vrot.lane.b32.xlu0 %v1472, 96
      %v1530 = vpop.permute.xlu0 %1529
      %1531 = vrot.lane.b32.xlu0 %v1473, 96
      %v1532 = vpop.permute.xlu0 %1531
      %1533 = vrot.lane.b32.xlu0 %v1474, 96
      %v1534 = vpop.permute.xlu0 %1533
      %vm1535 = vcmask 785408
      %v1536 = vsel %vm1535, %v1476, %v1478
      %v1537 = vsel %vm1535, %v1478, %v1480
      %v1538 = vsel %vm1535, %v1480, %v1482
      %v1539 = vsel %vm1535, %v1482, %v1484
      %v1540 = vsel %vm1535, %v1484, %v1486
      %v1541 = vsel %vm1535, %v1486, %v1488
      %v1542 = vsel %vm1535, %v1488, %v1490
      %v1543 = vsel %vm1535, %v1490, %v1492
      %v1544 = vsel %vm1535, %v1492, %v1494
      %v1545 = vsel %vm1535, %v1494, %v1496
      %v1546 = vsel %vm1535, %v1496, %v1498
      %v1547 = vsel %vm1535, %v1498, %v1500
      %v1548 = vsel %vm1535, %v1500, %v1502
      %v1549 = vsel %vm1535, %v1502, %v1504
      %v1550 = vsel %vm1535, %v1504, %v1506
      %v1551 = vsel %vm1535, %v1506, %v1508
      %v1552 = vsel %vm1535, %v1508, %v1510
      %v1553 = vsel %vm1535, %v1510, %v1512
      %v1554 = vsel %vm1535, %v1512, %v1514
      %v1555 = vsel %vm1535, %v1514, %v1516
      %v1556 = vsel %vm1535, %v1516, %v1518
      %v1557 = vsel %vm1535, %v1518, %v1520
      %v1558 = vsel %vm1535, %v1520, %v1522
      %v1559 = vsel %vm1535, %v1522, %v1524
      %v1560 = vsel %vm1535, %v1524, %v1526
      %v1561 = vsel %vm1535, %v1526, %v1528
      %v1562 = vsel %vm1535, %v1528, %v1530
      %v1563 = vsel %vm1535, %v1530, %v1532
      %v1564 = vsel %vm1535, %v1532, %v1534
      %1594 = vst [vmem:[#allocation2 + $0x1d0] sm:$0x1c] %v1536
      %1595 = vst [vmem:[#allocation2 + $0x1d8] sm:$0x1c] %v1537
      %1596 = vst [vmem:[#allocation2 + $0x1e0] sm:$0x1c] %v1538
      %1597 = vst [vmem:[#allocation2 + $0x1e8] sm:$0x1c] %v1539
      %1598 = vst [vmem:[#allocation2 + $0x1f0] sm:$0x1c] %v1540
      %1599 = vst [vmem:[#allocation2 + $0x1f8] sm:$0x1c] %v1541
      %1600 = vst [vmem:[#allocation2 + $0x200] sm:$0x1c] %v1542
      %1601 = vst [vmem:[#allocation2 + $0x208] sm:$0x1c] %v1543
      %1602 = vst [vmem:[#allocation2 + $0x210] sm:$0x1c] %v1544
      %1603 = vst [vmem:[#allocation2 + $0x218] sm:$0x1c] %v1545
      %1604 = vst [vmem:[#allocation2 + $0x220] sm:$0x1c] %v1546
      %1605 = vst [vmem:[#allocation2 + $0x228] sm:$0x1c] %v1547
      %1606 = vst [vmem:[#allocation2 + $0x230] sm:$0x1c] %v1548
      %1607 = vst [vmem:[#allocation2 + $0x238] sm:$0x1c] %v1549
      %1608 = vst [vmem:[#allocation2 + $0x240] sm:$0x1c] %v1550
      %1609 = vst [vmem:[#allocation2 + $0x248] sm:$0x1c] %v1551
      %1610 = vst [vmem:[#allocation2 + $0x250] sm:$0x1c] %v1552
      %1611 = vst [vmem:[#allocation2 + $0x258] sm:$0x1c] %v1553
      %1612 = vst [vmem:[#allocation2 + $0x260] sm:$0x1c] %v1554
      %1613 = vst [vmem:[#allocation2 + $0x268] sm:$0x1c] %v1555
      %1614 = vst [vmem:[#allocation2 + $0x270] sm:$0x1c] %v1556
      %1615 = vst [vmem:[#allocation2 + $0x278] sm:$0x1c] %v1557
      %1616 = vst [vmem:[#allocation2 + $0x280] sm:$0x1c] %v1558
      %1617 = vst [vmem:[#allocation2 + $0x288] sm:$0x1c] %v1559
      %1618 = vst [vmem:[#allocation2 + $0x290] sm:$0x1c] %v1560
      %1619 = vst [vmem:[#allocation2 + $0x298] sm:$0x1c] %v1561
      %1620 = vst [vmem:[#allocation2 + $0x2a0] sm:$0x1c] %v1562
      %1621 = vst [vmem:[#allocation2 + $0x2a8] sm:$0x1c] %v1563
      %1622 = vst [vmem:[#allocation2 + $0x2b0] sm:$0x1c] %v1564
      %v1623 = vld [vmem:[%s165] sm:$0x77]
      %v1624 = vld [vmem:[%s165 + $0x8] sm:$0x77]
      %v1625 = vld [vmem:[%s165 + $0x10] sm:$0x77]
      %v1626 = vld [vmem:[%s165 + $0x18] sm:$0x77]
      %v1627 = vld [vmem:[%s165 + $0x20] sm:$0x77]
      %v1628 = vld [vmem:[%s165 + $0x28] sm:$0x77]
      %v1629 = vld [vmem:[%s165 + $0x30] sm:$0x77]
      %v1630 = vld [vmem:[%s165 + $0x38] sm:$0x77]
      %v1631 = vld [vmem:[%s165 + $0x40] sm:$0x77]
      %v1632 = vld [vmem:[%s165 + $0x48] sm:$0x77]
      %v1633 = vld [vmem:[%s165 + $0x50] sm:$0x77]
      %v1634 = vld [vmem:[%s165 + $0x58] sm:$0x77]
      %v1635 = vld [vmem:[%s165 + $0x60] sm:$0x77]
      %v1636 = vld [vmem:[%s165 + $0x68] sm:$0x77]
      %v1637 = vld [vmem:[%s165 + $0x70] sm:$0x77]
      %v1653 = vcombine.high %v1623, %v1623
      %v1654 = vcombine.high %v1624, %v1624
      %v1655 = vcombine.high %v1625, %v1625
      %v1656 = vcombine.high %v1626, %v1626
      %v1657 = vcombine.high %v1627, %v1627
      %v1658 = vcombine.high %v1628, %v1628
      %v1659 = vcombine.high %v1629, %v1629
      %v1660 = vcombine.high %v1630, %v1630
      %v1661 = vcombine.high %v1631, %v1631
      %v1662 = vcombine.high %v1632, %v1632
      %v1663 = vcombine.high %v1633, %v1633
      %v1664 = vcombine.high %v1634, %v1634
      %v1665 = vcombine.high %v1635, %v1635
      %v1666 = vcombine.high %v1636, %v1636
      %v1667 = vcombine.high %v1637, %v1637
      %v1668 = vrot.slane %v1623, 3
      %v1669 = vrot.slane %v1653, 3
      %v1670 = vrot.slane %v1624, 3
      %v1671 = vrot.slane %v1654, 3
      %v1672 = vrot.slane %v1625, 3
      %v1673 = vrot.slane %v1655, 3
      %v1674 = vrot.slane %v1626, 3
      %v1675 = vrot.slane %v1656, 3
      %v1676 = vrot.slane %v1627, 3
      %v1677 = vrot.slane %v1657, 3
      %v1678 = vrot.slane %v1628, 3
      %v1679 = vrot.slane %v1658, 3
      %v1680 = vrot.slane %v1629, 3
      %v1681 = vrot.slane %v1659, 3
      %v1682 = vrot.slane %v1630, 3
      %v1683 = vrot.slane %v1660, 3
      %v1684 = vrot.slane %v1631, 3
      %v1685 = vrot.slane %v1661, 3
      %v1686 = vrot.slane %v1632, 3
      %v1687 = vrot.slane %v1662, 3
      %v1688 = vrot.slane %v1633, 3
      %v1689 = vrot.slane %v1663, 3
      %v1690 = vrot.slane %v1634, 3
      %v1691 = vrot.slane %v1664, 3
      %v1692 = vrot.slane %v1635, 3
      %v1693 = vrot.slane %v1665, 3
      %v1694 = vrot.slane %v1636, 3
      %v1695 = vrot.slane %v1666, 3
      %v1696 = vrot.slane %v1637, 3
      %v1697 = vrot.slane %v1667, 3
      %1698 = vrot.lane.b32.xlu0 %v1668, 95
      %v1699 = vpop.permute.xlu0 %1698
      %1700 = vrot.lane.b32.xlu0 %v1669, 95
      %v1701 = vpop.permute.xlu0 %1700
      %1702 = vrot.lane.b32.xlu0 %v1670, 95
      %v1703 = vpop.permute.xlu0 %1702
      %1704 = vrot.lane.b32.xlu0 %v1671, 95
      %v1705 = vpop.permute.xlu0 %1704
      %1706 = vrot.lane.b32.xlu0 %v1672, 95
      %v1707 = vpop.permute.xlu0 %1706
      %1708 = vrot.lane.b32.xlu0 %v1673, 95
      %v1709 = vpop.permute.xlu0 %1708
      %1710 = vrot.lane.b32.xlu0 %v1674, 95
      %v1711 = vpop.permute.xlu0 %1710
      %1712 = vrot.lane.b32.xlu0 %v1675, 95
      %v1713 = vpop.permute.xlu0 %1712
      %1714 = vrot.lane.b32.xlu0 %v1676, 95
      %v1715 = vpop.permute.xlu0 %1714
      %1716 = vrot.lane.b32.xlu0 %v1677, 95
      %v1717 = vpop.permute.xlu0 %1716
      %1718 = vrot.lane.b32.xlu0 %v1678, 95
      %v1719 = vpop.permute.xlu0 %1718
      %1720 = vrot.lane.b32.xlu0 %v1679, 95
      %v1721 = vpop.permute.xlu0 %1720
      %1722 = vrot.lane.b32.xlu0 %v1680, 95
      %v1723 = vpop.permute.xlu0 %1722
      %1724 = vrot.lane.b32.xlu0 %v1681, 95
      %v1725 = vpop.permute.xlu0 %1724
      %1726 = vrot.lane.b32.xlu0 %v1682, 95
      %v1727 = vpop.permute.xlu0 %1726
      %1728 = vrot.lane.b32.xlu0 %v1683, 95
      %v1729 = vpop.permute.xlu0 %1728
      %1730 = vrot.lane.b32.xlu0 %v1684, 95
      %v1731 = vpop.permute.xlu0 %1730
      %1732 = vrot.lane.b32.xlu0 %v1685, 95
      %v1733 = vpop.permute.xlu0 %1732
      %1734 = vrot.lane.b32.xlu0 %v1686, 95
      %v1735 = vpop.permute.xlu0 %1734
      %1736 = vrot.lane.b32.xlu0 %v1687, 95
      %v1737 = vpop.permute.xlu0 %1736
      %1738 = vrot.lane.b32.xlu0 %v1688, 95
      %v1739 = vpop.permute.xlu0 %1738
      %1740 = vrot.lane.b32.xlu0 %v1689, 95
      %v1741 = vpop.permute.xlu0 %1740
      %1742 = vrot.lane.b32.xlu0 %v1690, 95
      %v1743 = vpop.permute.xlu0 %1742
      %1744 = vrot.lane.b32.xlu0 %v1691, 95
      %v1745 = vpop.permute.xlu0 %1744
      %1746 = vrot.lane.b32.xlu0 %v1692, 95
      %v1747 = vpop.permute.xlu0 %1746
      %1748 = vrot.lane.b32.xlu0 %v1693, 95
      %v1749 = vpop.permute.xlu0 %1748
      %1750 = vrot.lane.b32.xlu0 %v1694, 95
      %v1751 = vpop.permute.xlu0 %1750
      %1752 = vrot.lane.b32.xlu0 %v1695, 95
      %v1753 = vpop.permute.xlu0 %1752
      %1754 = vrot.lane.b32.xlu0 %v1696, 95
      %v1755 = vpop.permute.xlu0 %1754
      %1756 = vrot.lane.b32.xlu0 %v1697, 95
      %v1757 = vpop.permute.xlu0 %1756
      %vm1758 = vcmask 777216
      %v1759 = vsel %vm1758, %v1699, %v1701
      %v1760 = vsel %vm1758, %v1701, %v1703
      %v1761 = vsel %vm1758, %v1703, %v1705
      %v1762 = vsel %vm1758, %v1705, %v1707
      %v1763 = vsel %vm1758, %v1707, %v1709
      %v1764 = vsel %vm1758, %v1709, %v1711
      %v1765 = vsel %vm1758, %v1711, %v1713
      %v1766 = vsel %vm1758, %v1713, %v1715
      %v1767 = vsel %vm1758, %v1715, %v1717
      %v1768 = vsel %vm1758, %v1717, %v1719
      %v1769 = vsel %vm1758, %v1719, %v1721
      %v1770 = vsel %vm1758, %v1721, %v1723
      %v1771 = vsel %vm1758, %v1723, %v1725
      %v1772 = vsel %vm1758, %v1725, %v1727
      %v1773 = vsel %vm1758, %v1727, %v1729
      %v1774 = vsel %vm1758, %v1729, %v1731
      %v1775 = vsel %vm1758, %v1731, %v1733
      %v1776 = vsel %vm1758, %v1733, %v1735
      %v1777 = vsel %vm1758, %v1735, %v1737
      %v1778 = vsel %vm1758, %v1737, %v1739
      %v1779 = vsel %vm1758, %v1739, %v1741
      %v1780 = vsel %vm1758, %v1741, %v1743
      %v1781 = vsel %vm1758, %v1743, %v1745
      %v1782 = vsel %vm1758, %v1745, %v1747
      %v1783 = vsel %vm1758, %v1747, %v1749
      %v1784 = vsel %vm1758, %v1749, %v1751
      %v1785 = vsel %vm1758, %v1751, %v1753
      %v1786 = vsel %vm1758, %v1753, %v1755
      %v1787 = vsel %vm1758, %v1755, %v1757
      %1817 = vst [vmem:[#allocation2 + $0x1d0] sm:$0xe0] %v1759
      %1818 = vst [vmem:[#allocation2 + $0x1d8] sm:$0xe0] %v1760
      %1819 = vst [vmem:[#allocation2 + $0x1e0] sm:$0xe0] %v1761
      %1820 = vst [vmem:[#allocation2 + $0x1e8] sm:$0xe0] %v1762
      %1821 = vst [vmem:[#allocation2 + $0x1f0] sm:$0xe0] %v1763
      %1822 = vst [vmem:[#allocation2 + $0x1f8] sm:$0xe0] %v1764
      %1823 = vst [vmem:[#allocation2 + $0x200] sm:$0xe0] %v1765
      %1824 = vst [vmem:[#allocation2 + $0x208] sm:$0xe0] %v1766
      %1825 = vst [vmem:[#allocation2 + $0x210] sm:$0xe0] %v1767
      %1826 = vst [vmem:[#allocation2 + $0x218] sm:$0xe0] %v1768
      %1827 = vst [vmem:[#allocation2 + $0x220] sm:$0xe0] %v1769
      %1828 = vst [vmem:[#allocation2 + $0x228] sm:$0xe0] %v1770
      %1829 = vst [vmem:[#allocation2 + $0x230] sm:$0xe0] %v1771
      %1830 = vst [vmem:[#allocation2 + $0x238] sm:$0xe0] %v1772
      %1831 = vst [vmem:[#allocation2 + $0x240] sm:$0xe0] %v1773
      %1832 = vst [vmem:[#allocation2 + $0x248] sm:$0xe0] %v1774
      %1833 = vst [vmem:[#allocation2 + $0x250] sm:$0xe0] %v1775
      %1834 = vst [vmem:[#allocation2 + $0x258] sm:$0xe0] %v1776
      %1835 = vst [vmem:[#allocation2 + $0x260] sm:$0xe0] %v1777
      %1836 = vst [vmem:[#allocation2 + $0x268] sm:$0xe0] %v1778
      %1837 = vst [vmem:[#allocation2 + $0x270] sm:$0xe0] %v1779
      %1838 = vst [vmem:[#allocation2 + $0x278] sm:$0xe0] %v1780
      %1839 = vst [vmem:[#allocation2 + $0x280] sm:$0xe0] %v1781
      %1840 = vst [vmem:[#allocation2 + $0x288] sm:$0xe0] %v1782
      %1841 = vst [vmem:[#allocation2 + $0x290] sm:$0xe0] %v1783
      %1842 = vst [vmem:[#allocation2 + $0x298] sm:$0xe0] %v1784
      %1843 = vst [vmem:[#allocation2 + $0x2a0] sm:$0xe0] %v1785
      %1844 = vst [vmem:[#allocation2 + $0x2a8] sm:$0xe0] %v1786
      %1845 = vst [vmem:[#allocation2 + $0x2b0] sm:$0xe0] %v1787
      %v1846 = vld [vmem:[%s165] sm:$0x77]
      %v1847 = vld [vmem:[%s165 + $0x8] sm:$0x77]
      %v1848 = vld [vmem:[%s165 + $0x10] sm:$0x77]
      %v1849 = vld [vmem:[%s165 + $0x18] sm:$0x77]
      %v1850 = vld [vmem:[%s165 + $0x20] sm:$0x77]
      %v1851 = vld [vmem:[%s165 + $0x28] sm:$0x77]
      %v1852 = vld [vmem:[%s165 + $0x30] sm:$0x77]
      %v1853 = vld [vmem:[%s165 + $0x38] sm:$0x77]
      %v1854 = vld [vmem:[%s165 + $0x40] sm:$0x77]
      %v1855 = vld [vmem:[%s165 + $0x48] sm:$0x77]
      %v1856 = vld [vmem:[%s165 + $0x50] sm:$0x77]
      %v1857 = vld [vmem:[%s165 + $0x58] sm:$0x77]
      %v1858 = vld [vmem:[%s165 + $0x60] sm:$0x77]
      %v1859 = vld [vmem:[%s165 + $0x68] sm:$0x77]
      %v1860 = vld [vmem:[%s165 + $0x70] sm:$0x77]
      %v1876 = vcombine.high %v1846, %v1846
      %v1877 = vcombine.high %v1847, %v1847
      %v1878 = vcombine.high %v1848, %v1848
      %v1879 = vcombine.high %v1849, %v1849
      %v1880 = vcombine.high %v1850, %v1850
      %v1881 = vcombine.high %v1851, %v1851
      %v1882 = vcombine.high %v1852, %v1852
      %v1883 = vcombine.high %v1853, %v1853
      %v1884 = vcombine.high %v1854, %v1854
      %v1885 = vcombine.high %v1855, %v1855
      %v1886 = vcombine.high %v1856, %v1856
      %v1887 = vcombine.high %v1857, %v1857
      %v1888 = vcombine.high %v1858, %v1858
      %v1889 = vcombine.high %v1859, %v1859
      %v1890 = vcombine.high %v1860, %v1860
      %1891 = vrot.lane.b32.xlu0 %v1846, 94
      %v1892 = vpop.permute.xlu0 %1891
      %1893 = vrot.lane.b32.xlu0 %v1876, 94
      %v1894 = vpop.permute.xlu0 %1893
      %1895 = vrot.lane.b32.xlu0 %v1847, 94
      %v1896 = vpop.permute.xlu0 %1895
      %1897 = vrot.lane.b32.xlu0 %v1877, 94
      %v1898 = vpop.permute.xlu0 %1897
      %1899 = vrot.lane.b32.xlu0 %v1848, 94
      %v1900 = vpop.permute.xlu0 %1899
      %1901 = vrot.lane.b32.xlu0 %v1878, 94
      %v1902 = vpop.permute.xlu0 %1901
      %1903 = vrot.lane.b32.xlu0 %v1849, 94
      %v1904 = vpop.permute.xlu0 %1903
      %1905 = vrot.lane.b32.xlu0 %v1879, 94
      %v1906 = vpop.permute.xlu0 %1905
      %1907 = vrot.lane.b32.xlu0 %v1850, 94
      %v1908 = vpop.permute.xlu0 %1907
      %1909 = vrot.lane.b32.xlu0 %v1880, 94
      %v1910 = vpop.permute.xlu0 %1909
      %1911 = vrot.lane.b32.xlu0 %v1851, 94
      %v1912 = vpop.permute.xlu0 %1911
      %1913 = vrot.lane.b32.xlu0 %v1881, 94
      %v1914 = vpop.permute.xlu0 %1913
      %1915 = vrot.lane.b32.xlu0 %v1852, 94
      %v1916 = vpop.permute.xlu0 %1915
      %1917 = vrot.lane.b32.xlu0 %v1882, 94
      %v1918 = vpop.permute.xlu0 %1917
      %1919 = vrot.lane.b32.xlu0 %v1853, 94
      %v1920 = vpop.permute.xlu0 %1919
      %1921 = vrot.lane.b32.xlu0 %v1883, 94
      %v1922 = vpop.permute.xlu0 %1921
      %1923 = vrot.lane.b32.xlu0 %v1854, 94
      %v1924 = vpop.permute.xlu0 %1923
      %1925 = vrot.lane.b32.xlu0 %v1884, 94
      %v1926 = vpop.permute.xlu0 %1925
      %1927 = vrot.lane.b32.xlu0 %v1855, 94
      %v1928 = vpop.permute.xlu0 %1927
      %1929 = vrot.lane.b32.xlu0 %v1885, 94
      %v1930 = vpop.permute.xlu0 %1929
      %1931 = vrot.lane.b32.xlu0 %v1856, 94
      %v1932 = vpop.permute.xlu0 %1931
      %1933 = vrot.lane.b32.xlu0 %v1886, 94
      %v1934 = vpop.permute.xlu0 %1933
      %1935 = vrot.lane.b32.xlu0 %v1857, 94
      %v1936 = vpop.permute.xlu0 %1935
      %1937 = vrot.lane.b32.xlu0 %v1887, 94
      %v1938 = vpop.permute.xlu0 %1937
      %1939 = vrot.lane.b32.xlu0 %v1858, 94
      %v1940 = vpop.permute.xlu0 %1939
      %1941 = vrot.lane.b32.xlu0 %v1888, 94
      %v1942 = vpop.permute.xlu0 %1941
      %1943 = vrot.lane.b32.xlu0 %v1859, 94
      %v1944 = vpop.permute.xlu0 %1943
      %1945 = vrot.lane.b32.xlu0 %v1889, 94
      %v1946 = vpop.permute.xlu0 %1945
      %1947 = vrot.lane.b32.xlu0 %v1860, 94
      %v1948 = vpop.permute.xlu0 %1947
      %1949 = vrot.lane.b32.xlu0 %v1890, 94
      %v1950 = vpop.permute.xlu0 %1949
      %vm1951 = vcmask 769024
      %v1952 = vsel %vm1951, %v1892, %v1894
      %v1953 = vsel %vm1951, %v1894, %v1896
      %v1954 = vsel %vm1951, %v1896, %v1898
      %v1955 = vsel %vm1951, %v1898, %v1900
      %v1956 = vsel %vm1951, %v1900, %v1902
      %v1957 = vsel %vm1951, %v1902, %v1904
      %v1958 = vsel %vm1951, %v1904, %v1906
      %v1959 = vsel %vm1951, %v1906, %v1908
      %v1960 = vsel %vm1951, %v1908, %v1910
      %v1961 = vsel %vm1951, %v1910, %v1912
      %v1962 = vsel %vm1951, %v1912, %v1914
      %v1963 = vsel %vm1951, %v1914, %v1916
      %v1964 = vsel %vm1951, %v1916, %v1918
      %v1965 = vsel %vm1951, %v1918, %v1920
      %v1966 = vsel %vm1951, %v1920, %v1922
      %v1967 = vsel %vm1951, %v1922, %v1924
      %v1968 = vsel %vm1951, %v1924, %v1926
      %v1969 = vsel %vm1951, %v1926, %v1928
      %v1970 = vsel %vm1951, %v1928, %v1930
      %v1971 = vsel %vm1951, %v1930, %v1932
      %v1972 = vsel %vm1951, %v1932, %v1934
      %v1973 = vsel %vm1951, %v1934, %v1936
      %v1974 = vsel %vm1951, %v1936, %v1938
      %v1975 = vsel %vm1951, %v1938, %v1940
      %v1976 = vsel %vm1951, %v1940, %v1942
      %v1977 = vsel %vm1951, %v1942, %v1944
      %v1978 = vsel %vm1951, %v1944, %v1946
      %v1979 = vsel %vm1951, %v1946, %v1948
      %v1980 = vsel %vm1951, %v1948, %v1950
      %2010 = vst [vmem:[#allocation2 + $0x2b8] sm:$0x7] %v1952
      %2011 = vst [vmem:[#allocation2 + $0x2c0] sm:$0x7] %v1953
      %2012 = vst [vmem:[#allocation2 + $0x2c8] sm:$0x7] %v1954
      %2013 = vst [vmem:[#allocation2 + $0x2d0] sm:$0x7] %v1955
      %2014 = vst [vmem:[#allocation2 + $0x2d8] sm:$0x7] %v1956
      %2015 = vst [vmem:[#allocation2 + $0x2e0] sm:$0x7] %v1957
      %2016 = vst [vmem:[#allocation2 + $0x2e8] sm:$0x7] %v1958
      %2017 = vst [vmem:[#allocation2 + $0x2f0] sm:$0x7] %v1959
      %2018 = vst [vmem:[#allocation2 + $0x2f8] sm:$0x7] %v1960
      %2019 = vst [vmem:[#allocation2 + $0x300] sm:$0x7] %v1961
      %2020 = vst [vmem:[#allocation2 + $0x308] sm:$0x7] %v1962
      %2021 = vst [vmem:[#allocation2 + $0x310] sm:$0x7] %v1963
      %2022 = vst [vmem:[#allocation2 + $0x318] sm:$0x7] %v1964
      %2023 = vst [vmem:[#allocation2 + $0x320] sm:$0x7] %v1965
      %2024 = vst [vmem:[#allocation2 + $0x328] sm:$0x7] %v1966
      %2025 = vst [vmem:[#allocation2 + $0x330] sm:$0x7] %v1967
      %2026 = vst [vmem:[#allocation2 + $0x338] sm:$0x7] %v1968
      %2027 = vst [vmem:[#allocation2 + $0x340] sm:$0x7] %v1969
      %2028 = vst [vmem:[#allocation2 + $0x348] sm:$0x7] %v1970
      %2029 = vst [vmem:[#allocation2 + $0x350] sm:$0x7] %v1971
      %2030 = vst [vmem:[#allocation2 + $0x358] sm:$0x7] %v1972
      %2031 = vst [vmem:[#allocation2 + $0x360] sm:$0x7] %v1973
      %2032 = vst [vmem:[#allocation2 + $0x368] sm:$0x7] %v1974
      %2033 = vst [vmem:[#allocation2 + $0x370] sm:$0x7] %v1975
      %2034 = vst [vmem:[#allocation2 + $0x378] sm:$0x7] %v1976
      %2035 = vst [vmem:[#allocation2 + $0x380] sm:$0x7] %v1977
      %2036 = vst [vmem:[#allocation2 + $0x388] sm:$0x7] %v1978
      %2037 = vst [vmem:[#allocation2 + $0x390] sm:$0x7] %v1979
      %2038 = vst [vmem:[#allocation2 + $0x398] sm:$0x7] %v1980
      %v2039 = vld [vmem:[%s1] sm:$0xff]
      %v2040 = vld [vmem:[%s1 + $0x8] sm:$0xff]
      %v2041 = vld [vmem:[%s1 + $0x10] sm:$0xff]
      %v2042 = vld [vmem:[%s1 + $0x18] sm:$0xff]
      %v2043 = vld [vmem:[%s1 + $0x20] sm:$0xff]
      %v2044 = vld [vmem:[%s1 + $0x28] sm:$0xff]
      %v2045 = vld [vmem:[#allocation2] sm:$0xff]
      %v2046 = vld [vmem:[#allocation2 + $0x8] sm:$0xff]
      %v2047 = vld [vmem:[#allocation2 + $0x10] sm:$0xff]
      %v2048 = vld [vmem:[#allocation2 + $0x18] sm:$0xff]
      %v2049 = vld [vmem:[#allocation2 + $0x20] sm:$0xff]
      %v2050 = vld [vmem:[#allocation2 + $0x28] sm:$0xff]
      %v2051 = vld [vmem:[#allocation2 + $0x30] sm:$0xff]
      %v2052 = vld [vmem:[#allocation2 + $0x38] sm:$0xff]
      %v2053 = vld [vmem:[#allocation2 + $0x40] sm:$0xff]
      %v2054 = vld [vmem:[#allocation2 + $0x48] sm:$0xff]
      %v2055 = vld [vmem:[#allocation2 + $0x50] sm:$0xff]
      %v2056 = vld [vmem:[#allocation2 + $0x58] sm:$0xff]
      %v2057 = vld [vmem:[#allocation2 + $0x60] sm:$0xff]
      %v2058 = vld [vmem:[#allocation2 + $0x68] sm:$0xff]
      %v2059 = vld [vmem:[#allocation2 + $0x70] sm:$0xff]
      %v2060 = vld [vmem:[#allocation2 + $0x78] sm:$0xff]
      %v2061 = vld [vmem:[#allocation2 + $0x80] sm:$0xff]
      %v2062 = vld [vmem:[#allocation2 + $0x88] sm:$0xff]
      %v2063 = vld [vmem:[#allocation2 + $0x90] sm:$0xff]
      %v2064 = vld [vmem:[#allocation2 + $0x98] sm:$0xff]
      %v2065 = vld [vmem:[#allocation2 + $0xa0] sm:$0xff]
      %v2066 = vld [vmem:[#allocation2 + $0xa8] sm:$0xff]
      %v2067 = vld [vmem:[#allocation2 + $0xb0] sm:$0xff]
      %v2068 = vld [vmem:[#allocation2 + $0xb8] sm:$0xff]
      %v2069 = vld [vmem:[#allocation2 + $0xc0] sm:$0xff]
      %v2070 = vld [vmem:[#allocation2 + $0xc8] sm:$0xff]
      %v2071 = vld [vmem:[#allocation2 + $0xd0] sm:$0xff]
      %v2072 = vld [vmem:[#allocation2 + $0xd8] sm:$0xff]
      %v2073 = vld [vmem:[#allocation2 + $0xe0] sm:$0xff]
      %v2074 = vld [vmem:[#allocation2 + $0xe8] sm:$0xff]
      %v2075 = vld [vmem:[#allocation2 + $0xf0] sm:$0xff]
      %v2076 = vld [vmem:[#allocation2 + $0xf8] sm:$0xff]
      %v2077 = vld [vmem:[#allocation2 + $0x100] sm:$0xff]
      %v2078 = vld [vmem:[#allocation2 + $0x108] sm:$0xff]
      %v2079 = vld [vmem:[#allocation2 + $0x110] sm:$0xff]
      %v2080 = vld [vmem:[#allocation2 + $0x118] sm:$0xff]
      %v2081 = vld [vmem:[#allocation2 + $0x120] sm:$0xff]
      %v2082 = vld [vmem:[#allocation2 + $0x128] sm:$0xff]
      %v2083 = vld [vmem:[#allocation2 + $0x130] sm:$0xff]
      %v2084 = vld [vmem:[#allocation2 + $0x138] sm:$0xff]
      %v2085 = vld [vmem:[#allocation2 + $0x140] sm:$0xff]
      %v2086 = vld [vmem:[#allocation2 + $0x148] sm:$0xff]
      %v2087 = vld [vmem:[#allocation2 + $0x150] sm:$0xff]
      %v2088 = vld [vmem:[#allocation2 + $0x158] sm:$0xff]
      %v2089 = vld [vmem:[#allocation2 + $0x160] sm:$0xff]
      %v2090 = vld [vmem:[#allocation2 + $0x168] sm:$0xff]
      %v2091 = vld [vmem:[#allocation2 + $0x170] sm:$0xff]
      %v2092 = vld [vmem:[#allocation2 + $0x178] sm:$0xff]
      %v2093 = vld [vmem:[#allocation2 + $0x180] sm:$0xff]
      %v2094 = vld [vmem:[#allocation2 + $0x188] sm:$0xff]
      %v2095 = vld [vmem:[#allocation2 + $0x190] sm:$0xff]
      %v2096 = vld [vmem:[#allocation2 + $0x198] sm:$0xff]
      %v2097 = vld [vmem:[#allocation2 + $0x1a0] sm:$0xff]
      %v2098 = vld [vmem:[#allocation2 + $0x1a8] sm:$0xff]
      %v2099 = vld [vmem:[#allocation2 + $0x1b0] sm:$0xff]
      %v2100 = vld [vmem:[#allocation2 + $0x1b8] sm:$0xff]
      %v2101 = vld [vmem:[#allocation2 + $0x1c0] sm:$0xff]
      %v2102 = vld [vmem:[#allocation2 + $0x1c8] sm:$0xff]
      %v2103 = vld [vmem:[#allocation2 + $0x1d0] sm:$0xff]
      %v2104 = vld [vmem:[#allocation2 + $0x1d8] sm:$0xff]
      %v2105 = vld [vmem:[#allocation2 + $0x1e0] sm:$0xff]
      %v2106 = vld [vmem:[#allocation2 + $0x1e8] sm:$0xff]
      %v2107 = vld [vmem:[#allocation2 + $0x1f0] sm:$0xff]
      %v2108 = vld [vmem:[#allocation2 + $0x1f8] sm:$0xff]
      %v2109 = vld [vmem:[#allocation2 + $0x200] sm:$0xff]
      %v2110 = vld [vmem:[#allocation2 + $0x208] sm:$0xff]
      %v2111 = vld [vmem:[#allocation2 + $0x210] sm:$0xff]
      %v2112 = vld [vmem:[#allocation2 + $0x218] sm:$0xff]
      %v2113 = vld [vmem:[#allocation2 + $0x220] sm:$0xff]
      %v2114 = vld [vmem:[#allocation2 + $0x228] sm:$0xff]
      %v2115 = vld [vmem:[#allocation2 + $0x230] sm:$0xff]
      %v2116 = vld [vmem:[#allocation2 + $0x238] sm:$0xff]
      %v2117 = vld [vmem:[#allocation2 + $0x240] sm:$0xff]
      %v2118 = vld [vmem:[#allocation2 + $0x248] sm:$0xff]
      %v2119 = vld [vmem:[#allocation2 + $0x250] sm:$0xff]
      %v2120 = vld [vmem:[#allocation2 + $0x258] sm:$0xff]
      %v2121 = vld [vmem:[#allocation2 + $0x260] sm:$0xff]
      %v2122 = vld [vmem:[#allocation2 + $0x268] sm:$0xff]
      %v2123 = vld [vmem:[#allocation2 + $0x270] sm:$0xff]
      %v2124 = vld [vmem:[#allocation2 + $0x278] sm:$0xff]
      %v2125 = vld [vmem:[#allocation2 + $0x280] sm:$0xff]
      %v2126 = vld [vmem:[#allocation2 + $0x288] sm:$0xff]
      %v2127 = vld [vmem:[#allocation2 + $0x290] sm:$0xff]
      %v2128 = vld [vmem:[#allocation2 + $0x298] sm:$0xff]
      %v2129 = vld [vmem:[#allocation2 + $0x2a0] sm:$0xff]
      %v2130 = vld [vmem:[#allocation2 + $0x2a8] sm:$0xff]
      %v2131 = vld [vmem:[#allocation2 + $0x2b0] sm:$0xff]
      %v2132 = vld [vmem:[#allocation2 + $0x2b8] sm:$0x7]
      %v2133 = vld [vmem:[#allocation2 + $0x2c0] sm:$0x7]
      %v2134 = vld [vmem:[#allocation2 + $0x2c8] sm:$0x7]
      %v2135 = vld [vmem:[#allocation2 + $0x2d0] sm:$0x7]
      %v2136 = vld [vmem:[#allocation2 + $0x2d8] sm:$0x7]
      %v2137 = vld [vmem:[#allocation2 + $0x2e0] sm:$0x7]
      %v2138 = vld [vmem:[#allocation2 + $0x2e8] sm:$0x7]
      %v2139 = vld [vmem:[#allocation2 + $0x2f0] sm:$0x7]
      %v2140 = vld [vmem:[#allocation2 + $0x2f8] sm:$0x7]
      %v2141 = vld [vmem:[#allocation2 + $0x300] sm:$0x7]
      %v2142 = vld [vmem:[#allocation2 + $0x308] sm:$0x7]
      %v2143 = vld [vmem:[#allocation2 + $0x310] sm:$0x7]
      %v2144 = vld [vmem:[#allocation2 + $0x318] sm:$0x7]
      %v2145 = vld [vmem:[#allocation2 + $0x320] sm:$0x7]
      %v2146 = vld [vmem:[#allocation2 + $0x328] sm:$0x7]
      %v2147 = vld [vmem:[#allocation2 + $0x330] sm:$0x7]
      %v2148 = vld [vmem:[#allocation2 + $0x338] sm:$0x7]
      %v2149 = vld [vmem:[#allocation2 + $0x340] sm:$0x7]
      %v2150 = vld [vmem:[#allocation2 + $0x348] sm:$0x7]
      %v2151 = vld [vmem:[#allocation2 + $0x350] sm:$0x7]
      %v2152 = vld [vmem:[#allocation2 + $0x358] sm:$0x7]
      %v2153 = vld [vmem:[#allocation2 + $0x360] sm:$0x7]
      %v2154 = vld [vmem:[#allocation2 + $0x368] sm:$0x7]
      %v2155 = vld [vmem:[#allocation2 + $0x370] sm:$0x7]
      %v2156 = vld [vmem:[#allocation2 + $0x378] sm:$0x7]
      %v2157 = vld [vmem:[#allocation2 + $0x380] sm:$0x7]
      %v2158 = vld [vmem:[#allocation2 + $0x388] sm:$0x7]
      %v2159 = vld [vmem:[#allocation2 + $0x390] sm:$0x7]
      %v2160 = vld [vmem:[#allocation2 + $0x398] sm:$0x7]
      %vm2161 = vcmask 220160
      %v2163 = vsel %vm2161, %v2039, 0
      %v2166 = vsel %vm2161, %v2040, 0
      %v2169 = vsel %vm2161, %v2041, 0
      %v2172 = vsel %vm2161, %v2042, 0
      %v2175 = vsel %vm2161, %v2043, 0
      %v2178 = vsel %vm2161, %v2044, 0
      %vm2180 = vcmask 1042432
      %v2182 = vsel %vm2180, %v2132, 0
      %v2185 = vsel %vm2180, %v2133, 0
      %v2188 = vsel %vm2180, %v2134, 0
      %v2191 = vsel %vm2180, %v2135, 0
      %v2194 = vsel %vm2180, %v2136, 0
      %v2197 = vsel %vm2180, %v2137, 0
      %v2200 = vsel %vm2180, %v2138, 0
      %v2203 = vsel %vm2180, %v2139, 0
      %v2206 = vsel %vm2180, %v2140, 0
      %v2209 = vsel %vm2180, %v2141, 0
      %v2212 = vsel %vm2180, %v2142, 0
      %v2215 = vsel %vm2180, %v2143, 0
      %v2218 = vsel %vm2180, %v2144, 0
      %v2221 = vsel %vm2180, %v2145, 0
      %v2224 = vsel %vm2180, %v2146, 0
      %v2227 = vsel %vm2180, %v2147, 0
      %v2230 = vsel %vm2180, %v2148, 0
      %v2233 = vsel %vm2180, %v2149, 0
      %v2236 = vsel %vm2180, %v2150, 0
      %v2239 = vsel %vm2180, %v2151, 0
      %v2242 = vsel %vm2180, %v2152, 0
      %v2245 = vsel %vm2180, %v2153, 0
      %v2248 = vsel %vm2180, %v2154, 0
      %v2251 = vsel %vm2180, %v2155, 0
      %v2254 = vsel %vm2180, %v2156, 0
      %v2257 = vsel %vm2180, %v2157, 0
      %v2260 = vsel %vm2180, %v2158, 0
      %v2263 = vsel %vm2180, %v2159, 0
      %v2266 = vsel %vm2180, %v2160, 0
      %2268 = vmatprep.subr.mxu0 %v2046
      %2269 = vmatpush1.msra.mxu0 %v2045
      %2270 = vmatprep.subr.mxu0 %v2075
      %2271 = vmatpush1.msra.mxu0 %v2074
      %2272 = vmatprep.subr.mxu0 %v2104
      %2273 = vmatpush1.msra.mxu0 %v2103
      %2274 = vmatprep.subr.mxu0 %v2185
      %2275 = vmatpush1.msra.mxu0 %v2182
      %2276 = vmatprep.subr.mxu0 0.0
      %2277 = vmatpush1.msra.mxu0 0.0
      %2278 = vmatprep.subr.mxu0 0.0
      %2279 = vmatpush1.msra.mxu0 0.0
      %2280 = vmatprep.subr.mxu0 0.0
      %2281 = vmatpush1.msra.mxu0 0.0
      %2282 = vmatprep.subr.mxu0 0.0
      %2283 = vmatpush1.msra.mxu0 0.0
      %2284 = vmatprep.subr.mxu0 0.0
      %2285 = vmatpush1.msra.mxu0 0.0
      %2286 = vmatprep.subr.mxu0 0.0
      %2287 = vmatpush1.msra.mxu0 0.0
      %2288 = vmatprep.subr.mxu0 0.0
      %2289 = vmatpush1.msra.mxu0 0.0
      %2290 = vmatprep.subr.mxu0 0.0
      %2291 = vmatpush1.msra.mxu0 0.0
      %2292 = vmatprep.subr.mxu0 0.0
      %2293 = vmatpush1.msra.mxu0 0.0
      %2294 = vmatprep.subr.mxu0 0.0
      %2295 = vmatpush1.msra.mxu0 0.0
      %2296 = vmatprep.subr.mxu0 0.0
      %2297 = vmatpush1.msra.mxu0 0.0
      %2298 = vmatprep.subr.mxu0 0.0
      %2299 = vmatpush1.msra.mxu0 0.0
      %2300 = vmatprep.subr.mxu0 0.0
      %2301 = vmatpush1.msra.mxu0 0.0
      %2302 = vmatprep.subr.mxu0 0.0
      %2303 = vmatpush1.msra.mxu0 0.0
      %2304 = vmatprep.subr.mxu0 0.0
      %2305 = vmatpush1.msra.mxu0 0.0
      %2306 = vmatprep.subr.mxu0 0.0
      %2307 = vmatpush1.msra.mxu0 0.0
      %2308 = vmatprep.subr.mxu0 0.0
      %2309 = vmatpush1.msra.mxu0 0.0
      %2310 = vmatprep.subr.mxu0 0.0
      %2311 = vmatpush1.msra.mxu0 0.0
      %2312 = vmatprep.subr.mxu0 0.0
      %2313 = vmatpush1.msra.mxu0 0.0
      %2314 = vmatprep.subr.mxu0 0.0
      %2315 = vmatpush1.msra.mxu0 0.0
      %2316 = vmatprep.subr.mxu0 0.0
      %2317 = vmatpush1.msra.mxu0 0.0
      %2318 = vmatprep.subr.mxu0 0.0
      %2319 = vmatpush1.msra.mxu0 0.0
      %2320 = vmatprep.subr.mxu0 0.0
      %2321 = vmatpush1.msra.mxu0 0.0
      %2322 = vmatprep.subr.mxu0 0.0
      %2323 = vmatpush1.msra.mxu0 0.0
      %2324 = vmatprep.subr.mxu0 0.0
      %2325 = vmatpush1.msra.mxu0 0.0
      %2326 = vmatprep.subr.mxu0 0.0
      %2327 = vmatpush1.msra.mxu0 0.0
      %2328 = vmatprep.subr.mxu0 0.0
      %2329 = vmatpush1.msra.mxu0 0.0
      %2330 = vmatprep.subr.mxu0 0.0
      %2331 = vmatpush1.msra.mxu0 0.0
      %2332 = vmatprep.mubr.f32.mxu0 0.0
      %2333 = vmatmul.mubr.f32.gmra.mrb[0].mxu0 %v2163
      %v2334 = vpop.f32.mrb[0].mxu0
      %v2335 = vadd.f32 0.0, %v2334
      %v2336 = vpop.f32.mrb[0].mxu0
      %v2337 = vadd.f32 0.0, %v2336
      %2338 = vmatprep.mubr.f32.mxu0 0.0
      %2339 = vmatmul.mubr.f32.gmra.mrb[0].mxu0 %v2166
      %v2340 = vpop.f32.mrb[0].mxu0
      %v2341 = vadd.f32 0.0, %v2340
      %v2342 = vpop.f32.mrb[0].mxu0
      %v2343 = vadd.f32 0.0, %v2342
      %2344 = vmatprep.mubr.f32.mxu0 0.0
      %2345 = vmatmul.mubr.f32.gmra.mrb[0].mxu0 %v2169
      %v2346 = vpop.f32.mrb[0].mxu0
      %v2347 = vpop.f32.mrb[0].mxu0
      %2348 = vmatprep.mubr.f32.mxu0 0.0
      %2349 = vmatmul.mubr.f32.gmra.mrb[0].mxu0 %v2172
      %v2350 = vpop.f32.mrb[0].mxu0
      %v2351 = vpop.f32.mrb[0].mxu0
      %2352 = vmatprep.mubr.f32.mxu0 0.0
      %2353 = vmatmul.mubr.f32.gmra.mrb[0].mxu0 %v2175
      %v2354 = vpop.f32.mrb[0].mxu0
      %v2355 = vpop.f32.mrb[0].mxu0
      %2356 = vmatprep.mubr.f32.mxu0 0.0
      %2357 = vmatmul.mubr.f32.gmra.mrb[0].mxu0 %v2178
      %v2358 = vpop.f32.mrb[0].mxu0
      %v2359 = vpop.f32.mrb[0].mxu0
      %2360 = vdwg.mxu0
      %2361 = vmatprep.subr.mxu0 %v2048
      %2362 = vmatpush1.msra.mxu0 %v2047
      %2363 = vmatprep.subr.mxu0 %v2077
      %2364 = vmatpush1.msra.mxu0 %v2076
      %2365 = vmatprep.subr.mxu0 %v2106
      %2366 = vmatpush1.msra.mxu0 %v2105
      %2367 = vmatprep.subr.mxu0 %v2191
      %2368 = vmatpush1.msra.mxu0 %v2188
      %2369 = vmatprep.subr.mxu0 0.0
      %2370 = vmatpush1.msra.mxu0 0.0
      %2371 = vmatprep.subr.mxu0 0.0
      %2372 = vmatpush1.msra.mxu0 0.0
      %2373 = vmatprep.subr.mxu0 0.0
      %2374 = vmatpush1.msra.mxu0 0.0
      %2375 = vmatprep.subr.mxu0 0.0
      %2376 = vmatpush1.msra.mxu0 0.0
      %2377 = vmatprep.subr.mxu0 0.0
      %2378 = vmatpush1.msra.mxu0 0.0
      %2379 = vmatprep.subr.mxu0 0.0
      %2380 = vmatpush1.msra.mxu0 0.0
      %2381 = vmatprep.subr.mxu0 0.0
      %2382 = vmatpush1.msra.mxu0 0.0
      %2383 = vmatprep.subr.mxu0 0.0
      %2384 = vmatpush1.msra.mxu0 0.0
      %2385 = vmatprep.subr.mxu0 0.0
      %2386 = vmatpush1.msra.mxu0 0.0
      %2387 = vmatprep.subr.mxu0 0.0
      %2388 = vmatpush1.msra.mxu0 0.0
      %2389 = vmatprep.subr.mxu0 0.0
      %2390 = vmatpush1.msra.mxu0 0.0
      %2391 = vmatprep.subr.mxu0 0.0
      %2392 = vmatpush1.msra.mxu0 0.0
      %2393 = vmatprep.subr.mxu0 0.0
      %2394 = vmatpush1.msra.mxu0 0.0
      %2395 = vmatprep.subr.mxu0 0.0
      %2396 = vmatpush1.msra.mxu0 0.0
      %2397 = vmatprep.subr.mxu0 0.0
      %2398 = vmatpush1.msra.mxu0 0.0
      %2399 = vmatprep.subr.mxu0 0.0
      %2400 = vmatpush1.msra.mxu0 0.0
      %2401 = vmatprep.subr.mxu0 0.0
      %2402 = vmatpush1.msra.mxu0 0.0
      %2403 = vmatprep.subr.mxu0 0.0
      %2404 = vmatpush1.msra.mxu0 0.0
      %2405 = vmatprep.subr.mxu0 0.0
      %2406 = vmatpush1.msra.mxu0 0.0
      %2407 = vmatprep.subr.mxu0 0.0
      %2408 = vmatpush1.msra.mxu0 0.0
      %2409 = vmatprep.subr.mxu0 0.0
      %2410 = vmatpush1.msra.mxu0 0.0
      %2411 = vmatprep.subr.mxu0 0.0
      %2412 = vmatpush1.msra.mxu0 0.0
      %2413 = vmatprep.subr.mxu0 0.0
      %2414 = vmatpush1.msra.mxu0 0.0
      %2415 = vmatprep.subr.mxu0 0.0
      %2416 = vmatpush1.msra.mxu0 0.0
      %2417 = vmatprep.subr.mxu0 0.0
      %2418 = vmatpush1.msra.mxu0 0.0
      %2419 = vmatprep.subr.mxu0 0.0
      %2420 = vmatpush1.msra.mxu0 0.0
      %2421 = vmatprep.subr.mxu0 0.0
      %2422 = vmatpush1.msra.mxu0 0.0
      %2423 = vmatprep.subr.mxu0 0.0
      %2424 = vmatpush1.msra.mxu0 0.0
      %2425 = vmatprep.mubr.f32.mxu0 0.0
      %2426 = vmatmul.mubr.f32.gmra.mrb[0].mxu0 %v2163
      %v2427 = vpop.f32.mrb[0].mxu0
      %v2428 = vadd.f32 0.0, %v2427
      %v2429 = vpop.f32.mrb[0].mxu0
      %v2430 = vadd.f32 0.0, %v2429
      %2431 = vmatprep.mubr.f32.mxu0 0.0
      %2432 = vmatmul.mubr.f32.gmra.mrb[0].mxu0 %v2166
      %v2433 = vpop.f32.mrb[0].mxu0
      %v2434 = vadd.f32 0.0, %v2433
      %v2435 = vpop.f32.mrb[0].mxu0
      %v2436 = vadd.f32 0.0, %v2435
      %2437 = vmatprep.mubr.f32.mxu0 0.0
      %2438 = vmatmul.mubr.f32.gmra.mrb[0].mxu0 %v2169
      %v2439 = vpop.f32.mrb[0].mxu0
      %v2440 = vadd.f32 0.0, %v2439
      %v2441 = vpop.f32.mrb[0].mxu0
      %v2442 = vadd.f32 0.0, %v2441
      %2443 = vmatprep.mubr.f32.mxu0 0.0
      %2444 = vmatmul.mubr.f32.gmra.mrb[0].mxu0 %v2172
      %v2445 = vpop.f32.mrb[0].mxu0
      %v2446 = vadd.f32 0.0, %v2445
      %v2447 = vpop.f32.mrb[0].mxu0
      %v2448 = vadd.f32 0.0, %v2447
      %2449 = vmatprep.mubr.f32.mxu0 0.0
      %2450 = vmatmul.mubr.f32.gmra.mrb[0].mxu0 %v2175
      %v2451 = vpop.f32.mrb[0].mxu0
      %v2452 = vpop.f32.mrb[0].mxu0
      %2453 = vmatprep.mubr.f32.mxu0 0.0
      %2454 = vmatmul.mubr.f32.gmra.mrb[0].mxu0 %v2178
      %v2455 = vpop.f32.mrb[0].mxu0
      %v2456 = vpop.f32.mrb[0].mxu0
      %2457 = vdwg.mxu0
      %2458 = vmatprep.subr.mxu0 %v2050
      %2459 = vmatpush1.msra.mxu0 %v2049
      %2460 = vmatprep.subr.mxu0 %v2079
      %2461 = vmatpush1.msra.mxu0 %v2078
      %2462 = vmatprep.subr.mxu0 %v2108
      %2463 = vmatpush1.msra.mxu0 %v2107
      %2464 = vmatprep.subr.mxu0 %v2197
      %2465 = vmatpush1.msra.mxu0 %v2194
      %2466 = vmatprep.subr.mxu0 0.0
      %2467 = vmatpush1.msra.mxu0 0.0
      %2468 = vmatprep.subr.mxu0 0.0
      %2469 = vmatpush1.msra.mxu0 0.0
      %2470 = vmatprep.subr.mxu0 0.0
      %2471 = vmatpush1.msra.mxu0 0.0
      %2472 = vmatprep.subr.mxu0 0.0
      %2473 = vmatpush1.msra.mxu0 0.0
      %2474 = vmatprep.subr.mxu0 0.0
      %2475 = vmatpush1.msra.mxu0 0.0
      %2476 = vmatprep.subr.mxu0 0.0
      %2477 = vmatpush1.msra.mxu0 0.0
      %2478 = vmatprep.subr.mxu0 0.0
      %2479 = vmatpush1.msra.mxu0 0.0
      %2480 = vmatprep.subr.mxu0 0.0
      %2481 = vmatpush1.msra.mxu0 0.0
      %2482 = vmatprep.subr.mxu0 0.0
      %2483 = vmatpush1.msra.mxu0 0.0
      %2484 = vmatprep.subr.mxu0 0.0
      %2485 = vmatpush1.msra.mxu0 0.0
      %2486 = vmatprep.subr.mxu0 0.0
      %2487 = vmatpush1.msra.mxu0 0.0
      %2488 = vmatprep.subr.mxu0 0.0
      %2489 = vmatpush1.msra.mxu0 0.0
      %2490 = vmatprep.subr.mxu0 0.0
      %2491 = vmatpush1.msra.mxu0 0.0
      %2492 = vmatprep.subr.mxu0 0.0
      %2493 = vmatpush1.msra.mxu0 0.0
      %2494 = vmatprep.subr.mxu0 0.0
      %2495 = vmatpush1.msra.mxu0 0.0
      %2496 = vmatprep.subr.mxu0 0.0
      %2497 = vmatpush1.msra.mxu0 0.0
      %2498 = vmatprep.subr.mxu0 0.0
      %2499 = vmatpush1.msra.mxu0 0.0
      %2500 = vmatprep.subr.mxu0 0.0
      %2501 = vmatpush1.msra.mxu0 0.0
      %2502 = vmatprep.subr.mxu0 0.0
      %2503 = vmatpush1.msra.mxu0 0.0
      %2504 = vmatprep.subr.mxu0 0.0
      %2505 = vmatpush1.msra.mxu0 0.0
      %2506 = vmatprep.subr.mxu0 0.0
      %2507 = vmatpush1.msra.mxu0 0.0
      %2508 = vmatprep.subr.mxu0 0.0
      %2509 = vmatpush1.msra.mxu0 0.0
      %2510 = vmatprep.subr.mxu0 0.0
      %2511 = vmatpush1.msra.mxu0 0.0
      %2512 = vmatprep.subr.mxu0 0.0
      %2513 = vmatpush1.msra.mxu0 0.0
      %2514 = vmatprep.subr.mxu0 0.0
      %2515 = vmatpush1.msra.mxu0 0.0
      %2516 = vmatprep.subr.mxu0 0.0
      %2517 = vmatpush1.msra.mxu0 0.0
      %2518 = vmatprep.subr.mxu0 0.0
      %2519 = vmatpush1.msra.mxu0 0.0
      %2520 = vmatprep.subr.mxu0 0.0
      %2521 = vmatpush1.msra.mxu0 0.0
      %2522 = vmatprep.mubr.f32.mxu0 0.0
      %2523 = vmatmul.mubr.f32.gmra.mrb[0].mxu0 %v2163
      %v2524 = vpop.f32.mrb[0].mxu0
      %v2525 = vadd.f32 0.0, %v2524
      %v2526 = vpop.f32.mrb[0].mxu0
      %v2527 = vadd.f32 0.0, %v2526
      %2528 = vmatprep.mubr.f32.mxu0 0.0
      %2529 = vmatmul.mubr.f32.gmra.mrb[0].mxu0 %v2166
      %v2530 = vpop.f32.mrb[0].mxu0
      %v2531 = vadd.f32 0.0, %v2530
      %v2532 = vpop.f32.mrb[0].mxu0
      %v2533 = vadd.f32 0.0, %v2532
      %2534 = vmatprep.mubr.f32.mxu0 0.0
      %2535 = vmatmul.mubr.f32.gmra.mrb[0].mxu0 %v2169
      %v2536 = vpop.f32.mrb[0].mxu0
      %v2537 = vadd.f32 0.0, %v2536
      %v2538 = vpop.f32.mrb[0].mxu0
      %v2539 = vadd.f32 0.0, %v2538
      %2540 = vmatprep.mubr.f32.mxu0 0.0
      %2541 = vmatmul.mubr.f32.gmra.mrb[0].mxu0 %v2172
      %v2542 = vpop.f32.mrb[0].mxu0
      %v2543 = vadd.f32 0.0, %v2542
      %v2544 = vpop.f32.mrb[0].mxu0
      %v2545 = vadd.f32 0.0, %v2544
      %2546 = vmatprep.mubr.f32.mxu0 0.0
      %2547 = vmatmul.mubr.f32.gmra.mrb[0].mxu0 %v2175
      %v2548 = vpop.f32.mrb[0].mxu0
      %v2549 = vadd.f32 0.0, %v2548
      %v2550 = vpop.f32.mrb[0].mxu0
      %v2551 = vadd.f32 0.0, %v2550
      %2552 = vmatprep.mubr.f32.mxu0 0.0
      %2553 = vmatmul.mubr.f32.gmra.mrb[0].mxu0 %v2178
      %v2554 = vpop.f32.mrb[0].mxu0
      %v2555 = vadd.f32 0.0, %v2554
      %v2556 = vpop.f32.mrb[0].mxu0
      %v2557 = vadd.f32 0.0, %v2556
      %2558 = vdwg.mxu0
      %2559 = vmatprep.subr.mxu0 %v2052
      %2560 = vmatpush1.msra.mxu0 %v2051
      %2561 = vmatprep.subr.mxu0 %v2081
      %2562 = vmatpush1.msra.mxu0 %v2080
      %2563 = vmatprep.subr.mxu0 %v2110
      %2564 = vmatpush1.msra.mxu0 %v2109
      %2565 = vmatprep.subr.mxu0 %v2203
      %2566 = vmatpush1.msra.mxu0 %v2200
      %2567 = vmatprep.subr.mxu0 0.0
      %2568 = vmatpush1.msra.mxu0 0.0
      %2569 = vmatprep.subr.mxu0 0.0
      %2570 = vmatpush1.msra.mxu0 0.0
      %2571 = vmatprep.subr.mxu0 0.0
      %2572 = vmatpush1.msra.mxu0 0.0
      %2573 = vmatprep.subr.mxu0 0.0
      %2574 = vmatpush1.msra.mxu0 0.0
      %2575 = vmatprep.subr.mxu0 0.0
      %2576 = vmatpush1.msra.mxu0 0.0
      %2577 = vmatprep.subr.mxu0 0.0
      %2578 = vmatpush1.msra.mxu0 0.0
      %2579 = vmatprep.subr.mxu0 0.0
      %2580 = vmatpush1.msra.mxu0 0.0
      %2581 = vmatprep.subr.mxu0 0.0
      %2582 = vmatpush1.msra.mxu0 0.0
      %2583 = vmatprep.subr.mxu0 0.0
      %2584 = vmatpush1.msra.mxu0 0.0
      %2585 = vmatprep.subr.mxu0 0.0
      %2586 = vmatpush1.msra.mxu0 0.0
      %2587 = vmatprep.subr.mxu0 0.0
      %2588 = vmatpush1.msra.mxu0 0.0
      %2589 = vmatprep.subr.mxu0 0.0
      %2590 = vmatpush1.msra.mxu0 0.0
      %2591 = vmatprep.subr.mxu0 0.0
      %2592 = vmatpush1.msra.mxu0 0.0
      %2593 = vmatprep.subr.mxu0 0.0
      %2594 = vmatpush1.msra.mxu0 0.0
      %2595 = vmatprep.subr.mxu0 0.0
      %2596 = vmatpush1.msra.mxu0 0.0
      %2597 = vmatprep.subr.mxu0 0.0
      %2598 = vmatpush1.msra.mxu0 0.0
      %2599 = vmatprep.subr.mxu0 0.0
      %2600 = vmatpush1.msra.mxu0 0.0
      %2601 = vmatprep.subr.mxu0 0.0
      %2602 = vmatpush1.msra.mxu0 0.0
      %2603 = vmatprep.subr.mxu0 0.0
      %2604 = vmatpush1.msra.mxu0 0.0
      %2605 = vmatprep.subr.mxu0 0.0
      %2606 = vmatpush1.msra.mxu0 0.0
      %2607 = vmatprep.subr.mxu0 0.0
      %2608 = vmatpush1.msra.mxu0 0.0
      %2609 = vmatprep.subr.mxu0 0.0
      %2610 = vmatpush1.msra.mxu0 0.0
      %2611 = vmatprep.subr.mxu0 0.0
      %2612 = vmatpush1.msra.mxu0 0.0
      %2613 = vmatprep.subr.mxu0 0.0
      %2614 = vmatpush1.msra.mxu0 0.0
      %2615 = vmatprep.subr.mxu0 0.0
      %2616 = vmatpush1.msra.mxu0 0.0
      %2617 = vmatprep.subr.mxu0 0.0
      %2618 = vmatpush1.msra.mxu0 0.0
      %2619 = vmatprep.subr.mxu0 0.0
      %2620 = vmatpush1.msra.mxu0 0.0
      %2621 = vmatprep.subr.mxu0 0.0
      %2622 = vmatpush1.msra.mxu0 0.0
      %2623 = vmatprep.mubr.f32.mxu0 0.0
      %2624 = vmatmul.mubr.f32.gmra.mrb[0].mxu0 %v2163
      %v2625 = vpop.f32.mrb[0].mxu0
      %v2626 = vadd.f32 0.0, %v2625
      %v2627 = vpop.f32.mrb[0].mxu0
      %v2628 = vadd.f32 0.0, %v2627
      %2629 = vmatprep.mubr.f32.mxu0 0.0
      %2630 = vmatmul.mubr.f32.gmra.mrb[0].mxu0 %v2166
      %v2631 = vpop.f32.mrb[0].mxu0
      %v2632 = vadd.f32 0.0, %v2631
      %v2633 = vpop.f32.mrb[0].mxu0
      %v2634 = vadd.f32 0.0, %v2633
      %2635 = vmatprep.mubr.f32.mxu0 0.0
      %2636 = vmatmul.mubr.f32.gmra.mrb[0].mxu0 %v2169
      %v2637 = vpop.f32.mrb[0].mxu0
      %v2638 = vadd.f32 0.0, %v2637
      %v2639 = vpop.f32.mrb[0].mxu0
      %v2640 = vadd.f32 0.0, %v2639
      %2641 = vmatprep.mubr.f32.mxu0 0.0
      %2642 = vmatmul.mubr.f32.gmra.mrb[0].mxu0 %v2172
      %v2643 = vpop.f32.mrb[0].mxu0
      %v2644 = vadd.f32 0.0, %v2643
      %v2645 = vpop.f32.mrb[0].mxu0
      %v2646 = vadd.f32 0.0, %v2645
      %2647 = vmatprep.mubr.f32.mxu0 0.0
      %2648 = vmatmul.mubr.f32.gmra.mrb[0].mxu0 %v2175
      %v2649 = vpop.f32.mrb[0].mxu0
      %v2650 = vadd.f32 0.0, %v2649
      %v2651 = vpop.f32.mrb[0].mxu0
      %v2652 = vadd.f32 0.0, %v2651
      %2653 = vmatprep.mubr.f32.mxu0 0.0
      %2654 = vmatmul.mubr.f32.gmra.mrb[0].mxu0 %v2178
      %v2655 = vpop.f32.mrb[0].mxu0
      %v2656 = vadd.f32 0.0, %v2655
      %v2657 = vpop.f32.mrb[0].mxu0
      %v2658 = vadd.f32 0.0, %v2657
      %2659 = vdwg.mxu0
      %2660 = vmatprep.subr.mxu0 %v2054
      %2661 = vmatpush1.msra.mxu0 %v2053
      %2662 = vmatprep.subr.mxu0 %v2083
      %2663 = vmatpush1.msra.mxu0 %v2082
      %2664 = vmatprep.subr.mxu0 %v2112
      %2665 = vmatpush1.msra.mxu0 %v2111
      %2666 = vmatprep.subr.mxu0 %v2209
      %2667 = vmatpush1.msra.mxu0 %v2206
      %2668 = vmatprep.subr.mxu0 0.0
      %2669 = vmatpush1.msra.mxu0 0.0
      %2670 = vmatprep.subr.mxu0 0.0
      %2671 = vmatpush1.msra.mxu0 0.0
      %2672 = vmatprep.subr.mxu0 0.0
      %2673 = vmatpush1.msra.mxu0 0.0
      %2674 = vmatprep.subr.mxu0 0.0
      %2675 = vmatpush1.msra.mxu0 0.0
      %2676 = vmatprep.subr.mxu0 0.0
      %2677 = vmatpush1.msra.mxu0 0.0
      %2678 = vmatprep.subr.mxu0 0.0
      %2679 = vmatpush1.msra.mxu0 0.0
      %2680 = vmatprep.subr.mxu0 0.0
      %2681 = vmatpush1.msra.mxu0 0.0
      %2682 = vmatprep.subr.mxu0 0.0
      %2683 = vmatpush1.msra.mxu0 0.0
      %2684 = vmatprep.subr.mxu0 0.0
      %2685 = vmatpush1.msra.mxu0 0.0
      %2686 = vmatprep.subr.mxu0 0.0
      %2687 = vmatpush1.msra.mxu0 0.0
      %2688 = vmatprep.subr.mxu0 0.0
      %2689 = vmatpush1.msra.mxu0 0.0
      %2690 = vmatprep.subr.mxu0 0.0
      %2691 = vmatpush1.msra.mxu0 0.0
      %2692 = vmatprep.subr.mxu0 0.0
      %2693 = vmatpush1.msra.mxu0 0.0
      %2694 = vmatprep.subr.mxu0 0.0
      %2695 = vmatpush1.msra.mxu0 0.0
      %2696 = vmatprep.subr.mxu0 0.0
      %2697 = vmatpush1.msra.mxu0 0.0
      %2698 = vmatprep.subr.mxu0 0.0
      %2699 = vmatpush1.msra.mxu0 0.0
      %2700 = vmatprep.subr.mxu0 0.0
      %2701 = vmatpush1.msra.mxu0 0.0
      %2702 = vmatprep.subr.mxu0 0.0
      %2703 = vmatpush1.msra.mxu0 0.0
      %2704 = vmatprep.subr.mxu0 0.0
      %2705 = vmatpush1.msra.mxu0 0.0
      %2706 = vmatprep.subr.mxu0 0.0
      %2707 = vmatpush1.msra.mxu0 0.0
      %2708 = vmatprep.subr.mxu0 0.0
      %2709 = vmatpush1.msra.mxu0 0.0
      %2710 = vmatprep.subr.mxu0 0.0
      %2711 = vmatpush1.msra.mxu0 0.0
      %2712 = vmatprep.subr.mxu0 0.0
      %2713 = vmatpush1.msra.mxu0 0.0
      %2714 = vmatprep.subr.mxu0 0.0
      %2715 = vmatpush1.msra.mxu0 0.0
      %2716 = vmatprep.subr.mxu0 0.0
      %2717 = vmatpush1.msra.mxu0 0.0
      %2718 = vmatprep.subr.mxu0 0.0
      %2719 = vmatpush1.msra.mxu0 0.0
      %2720 = vmatprep.subr.mxu0 0.0
      %2721 = vmatpush1.msra.mxu0 0.0
      %2722 = vmatprep.subr.mxu0 0.0
      %2723 = vmatpush1.msra.mxu0 0.0
      %2724 = vmatprep.mubr.f32.mxu0 0.0
      %2725 = vmatmul.mubr.f32.gmra.mrb[0].mxu0 %v2163
      %v2726 = vpop.f32.mrb[0].mxu0
      %v2727 = vadd.f32 0.0, %v2726
      %v2728 = vpop.f32.mrb[0].mxu0
      %v2729 = vadd.f32 0.0, %v2728
      %2730 = vmatprep.mubr.f32.mxu0 0.0
      %2731 = vmatmul.mubr.f32.gmra.mrb[0].mxu0 %v2166
      %v2732 = vpop.f32.mrb[0].mxu0
      %v2733 = vadd.f32 0.0, %v2732
      %v2734 = vpop.f32.mrb[0].mxu0
      %v2735 = vadd.f32 0.0, %v2734
      %2736 = vmatprep.mubr.f32.mxu0 0.0
      %2737 = vmatmul.mubr.f32.gmra.mrb[0].mxu0 %v2169
      %v2738 = vpop.f32.mrb[0].mxu0
      %v2739 = vadd.f32 0.0, %v2738
      %v2740 = vpop.f32.mrb[0].mxu0
      %v2741 = vadd.f32 0.0, %v2740
      %2742 = vmatprep.mubr.f32.mxu0 0.0
      %2743 = vmatmul.mubr.f32.gmra.mrb[0].mxu0 %v2172
      %v2744 = vpop.f32.mrb[0].mxu0
      %v2745 = vadd.f32 0.0, %v2744
      %v2746 = vpop.f32.mrb[0].mxu0
      %v2747 = vadd.f32 0.0, %v2746
      %2748 = vmatprep.mubr.f32.mxu0 0.0
      %2749 = vmatmul.mubr.f32.gmra.mrb[0].mxu0 %v2175
      %v2750 = vpop.f32.mrb[0].mxu0
      %v2751 = vadd.f32 0.0, %v2750
      %v2752 = vpop.f32.mrb[0].mxu0
      %v2753 = vadd.f32 0.0, %v2752
      %2754 = vmatprep.mubr.f32.mxu0 0.0
      %2755 = vmatmul.mubr.f32.gmra.mrb[0].mxu0 %v2178
      %v2756 = vpop.f32.mrb[0].mxu0
      %v2757 = vadd.f32 0.0, %v2756
      %v2758 = vpop.f32.mrb[0].mxu0
      %v2759 = vadd.f32 0.0, %v2758
      %2760 = vdwg.mxu0
      %2761 = vmatprep.subr.mxu0 %v2056
      %2762 = vmatpush1.msra.mxu0 %v2055
      %2763 = vmatprep.subr.mxu0 %v2085
      %2764 = vmatpush1.msra.mxu0 %v2084
      %2765 = vmatprep.subr.mxu0 %v2114
      %2766 = vmatpush1.msra.mxu0 %v2113
      %2767 = vmatprep.subr.mxu0 %v2215
      %2768 = vmatpush1.msra.mxu0 %v2212
      %2769 = vmatprep.subr.mxu0 0.0
      %2770 = vmatpush1.msra.mxu0 0.0
      %2771 = vmatprep.subr.mxu0 0.0
      %2772 = vmatpush1.msra.mxu0 0.0
      %2773 = vmatprep.subr.mxu0 0.0
      %2774 = vmatpush1.msra.mxu0 0.0
      %2775 = vmatprep.subr.mxu0 0.0
      %2776 = vmatpush1.msra.mxu0 0.0
      %2777 = vmatprep.subr.mxu0 0.0
      %2778 = vmatpush1.msra.mxu0 0.0
      %2779 = vmatprep.subr.mxu0 0.0
      %2780 = vmatpush1.msra.mxu0 0.0
      %2781 = vmatprep.subr.mxu0 0.0
      %2782 = vmatpush1.msra.mxu0 0.0
      %2783 = vmatprep.subr.mxu0 0.0
      %2784 = vmatpush1.msra.mxu0 0.0
      %2785 = vmatprep.subr.mxu0 0.0
      %2786 = vmatpush1.msra.mxu0 0.0
      %2787 = vmatprep.subr.mxu0 0.0
      %2788 = vmatpush1.msra.mxu0 0.0
      %2789 = vmatprep.subr.mxu0 0.0
      %2790 = vmatpush1.msra.mxu0 0.0
      %2791 = vmatprep.subr.mxu0 0.0
      %2792 = vmatpush1.msra.mxu0 0.0
      %2793 = vmatprep.subr.mxu0 0.0
      %2794 = vmatpush1.msra.mxu0 0.0
      %2795 = vmatprep.subr.mxu0 0.0
      %2796 = vmatpush1.msra.mxu0 0.0
      %2797 = vmatprep.subr.mxu0 0.0
      %2798 = vmatpush1.msra.mxu0 0.0
      %2799 = vmatprep.subr.mxu0 0.0
      %2800 = vmatpush1.msra.mxu0 0.0
      %2801 = vmatprep.subr.mxu0 0.0
      %2802 = vmatpush1.msra.mxu0 0.0
      %2803 = vmatprep.subr.mxu0 0.0
      %2804 = vmatpush1.msra.mxu0 0.0
      %2805 = vmatprep.subr.mxu0 0.0
      %2806 = vmatpush1.msra.mxu0 0.0
      %2807 = vmatprep.subr.mxu0 0.0
      %2808 = vmatpush1.msra.mxu0 0.0
      %2809 = vmatprep.subr.mxu0 0.0
      %2810 = vmatpush1.msra.mxu0 0.0
      %2811 = vmatprep.subr.mxu0 0.0
      %2812 = vmatpush1.msra.mxu0 0.0
      %2813 = vmatprep.subr.mxu0 0.0
      %2814 = vmatpush1.msra.mxu0 0.0
      %2815 = vmatprep.subr.mxu0 0.0
      %2816 = vmatpush1.msra.mxu0 0.0
      %2817 = vmatprep.subr.mxu0 0.0
      %2818 = vmatpush1.msra.mxu0 0.0
      %2819 = vmatprep.subr.mxu0 0.0
      %2820 = vmatpush1.msra.mxu0 0.0
      %2821 = vmatprep.subr.mxu0 0.0
      %2822 = vmatpush1.msra.mxu0 0.0
      %2823 = vmatprep.subr.mxu0 0.0
      %2824 = vmatpush1.msra.mxu0 0.0
      %2825 = vmatprep.mubr.f32.mxu0 0.0
      %2826 = vmatmul.mubr.f32.gmra.mrb[0].mxu0 %v2163
      %v2827 = vpop.f32.mrb[0].mxu0
      %v2828 = vadd.f32 0.0, %v2827
      %v2829 = vpop.f32.mrb[0].mxu0
      %v2830 = vadd.f32 0.0, %v2829
      %2831 = vmatprep.mubr.f32.mxu0 0.0
      %2832 = vmatmul.mubr.f32.gmra.mrb[0].mxu0 %v2166
      %v2833 = vpop.f32.mrb[0].mxu0
      %v2834 = vadd.f32 0.0, %v2833
      %v2835 = vpop.f32.mrb[0].mxu0
      %v2836 = vadd.f32 0.0, %v2835
      %2837 = vmatprep.mubr.f32.mxu0 0.0
      %2838 = vmatmul.mubr.f32.gmra.mrb[0].mxu0 %v2169
      %v2839 = vpop.f32.mrb[0].mxu0
      %v2840 = vadd.f32 0.0, %v2839
      %v2841 = vpop.f32.mrb[0].mxu0
      %v2842 = vadd.f32 0.0, %v2841
      %2843 = vmatprep.mubr.f32.mxu0 0.0
      %2844 = vmatmul.mubr.f32.gmra.mrb[0].mxu0 %v2172
      %v2845 = vpop.f32.mrb[0].mxu0
      %v2846 = vadd.f32 0.0, %v2845
      %v2847 = vpop.f32.mrb[0].mxu0
      %v2848 = vadd.f32 0.0, %v2847
      %2849 = vmatprep.mubr.f32.mxu0 0.0
      %2850 = vmatmul.mubr.f32.gmra.mrb[0].mxu0 %v2175
      %v2851 = vpop.f32.mrb[0].mxu0
      %v2852 = vadd.f32 0.0, %v2851
      %v2853 = vpop.f32.mrb[0].mxu0
      %v2854 = vadd.f32 0.0, %v2853
      %2855 = vmatprep.mubr.f32.mxu0 0.0
      %2856 = vmatmul.mubr.f32.gmra.mrb[0].mxu0 %v2178
      %v2857 = vpop.f32.mrb[0].mxu0
      %v2858 = vadd.f32 0.0, %v2857
      %v2859 = vpop.f32.mrb[0].mxu0
      %v2860 = vadd.f32 0.0, %v2859
      %2861 = vdwg.mxu0
      %2862 = vmatprep.subr.mxu0 %v2058
      %2863 = vmatpush1.msra.mxu0 %v2057
      %2864 = vmatprep.subr.mxu0 %v2087
      %2865 = vmatpush1.msra.mxu0 %v2086
      %2866 = vmatprep.subr.mxu0 %v2116
      %2867 = vmatpush1.msra.mxu0 %v2115
      %2868 = vmatprep.subr.mxu0 %v2221
      %2869 = vmatpush1.msra.mxu0 %v2218
      %2870 = vmatprep.subr.mxu0 0.0
      %2871 = vmatpush1.msra.mxu0 0.0
      %2872 = vmatprep.subr.mxu0 0.0
      %2873 = vmatpush1.msra.mxu0 0.0
      %2874 = vmatprep.subr.mxu0 0.0
      %2875 = vmatpush1.msra.mxu0 0.0
      %2876 = vmatprep.subr.mxu0 0.0
      %2877 = vmatpush1.msra.mxu0 0.0
      %2878 = vmatprep.subr.mxu0 0.0
      %2879 = vmatpush1.msra.mxu0 0.0
      %2880 = vmatprep.subr.mxu0 0.0
      %2881 = vmatpush1.msra.mxu0 0.0
      %2882 = vmatprep.subr.mxu0 0.0
      %2883 = vmatpush1.msra.mxu0 0.0
      %2884 = vmatprep.subr.mxu0 0.0
      %2885 = vmatpush1.msra.mxu0 0.0
      %2886 = vmatprep.subr.mxu0 0.0
      %2887 = vmatpush1.msra.mxu0 0.0
      %2888 = vmatprep.subr.mxu0 0.0
      %2889 = vmatpush1.msra.mxu0 0.0
      %2890 = vmatprep.subr.mxu0 0.0
      %2891 = vmatpush1.msra.mxu0 0.0
      %2892 = vmatprep.subr.mxu0 0.0
      %2893 = vmatpush1.msra.mxu0 0.0
      %2894 = vmatprep.subr.mxu0 0.0
      %2895 = vmatpush1.msra.mxu0 0.0
      %2896 = vmatprep.subr.mxu0 0.0
      %2897 = vmatpush1.msra.mxu0 0.0
      %2898 = vmatprep.subr.mxu0 0.0
      %2899 = vmatpush1.msra.mxu0 0.0
      %2900 = vmatprep.subr.mxu0 0.0
      %2901 = vmatpush1.msra.mxu0 0.0
      %2902 = vmatprep.subr.mxu0 0.0
      %2903 = vmatpush1.msra.mxu0 0.0
      %2904 = vmatprep.subr.mxu0 0.0
      %2905 = vmatpush1.msra.mxu0 0.0
      %2906 = vmatprep.subr.mxu0 0.0
      %2907 = vmatpush1.msra.mxu0 0.0
      %2908 = vmatprep.subr.mxu0 0.0
      %2909 = vmatpush1.msra.mxu0 0.0
      %2910 = vmatprep.subr.mxu0 0.0
      %2911 = vmatpush1.msra.mxu0 0.0
      %2912 = vmatprep.subr.mxu0 0.0
      %2913 = vmatpush1.msra.mxu0 0.0
      %2914 = vmatprep.subr.mxu0 0.0
      %2915 = vmatpush1.msra.mxu0 0.0
      %2916 = vmatprep.subr.mxu0 0.0
      %2917 = vmatpush1.msra.mxu0 0.0
      %2918 = vmatprep.subr.mxu0 0.0
      %2919 = vmatpush1.msra.mxu0 0.0
      %2920 = vmatprep.subr.mxu0 0.0
      %2921 = vmatpush1.msra.mxu0 0.0
      %2922 = vmatprep.subr.mxu0 0.0
      %2923 = vmatpush1.msra.mxu0 0.0
      %2924 = vmatprep.subr.mxu0 0.0
      %2925 = vmatpush1.msra.mxu0 0.0
      %2926 = vmatprep.mubr.f32.mxu0 0.0
      %2927 = vmatmul.mubr.f32.gmra.mrb[0].mxu0 %v2163
      %v2928 = vpop.f32.mrb[0].mxu0
      %v2929 = vadd.f32 0.0, %v2928
      %v2930 = vpop.f32.mrb[0].mxu0
      %v2931 = vadd.f32 0.0, %v2930
      %2932 = vmatprep.mubr.f32.mxu0 0.0
      %2933 = vmatmul.mubr.f32.gmra.mrb[0].mxu0 %v2166
      %v2934 = vpop.f32.mrb[0].mxu0
      %v2935 = vadd.f32 0.0, %v2934
      %v2936 = vpop.f32.mrb[0].mxu0
      %v2937 = vadd.f32 0.0, %v2936
      %2938 = vmatprep.mubr.f32.mxu0 0.0
      %2939 = vmatmul.mubr.f32.gmra.mrb[0].mxu0 %v2169
      %v2940 = vpop.f32.mrb[0].mxu0
      %v2941 = vadd.f32 0.0, %v2940
      %v2942 = vpop.f32.mrb[0].mxu0
      %v2943 = vadd.f32 0.0, %v2942
      %2944 = vmatprep.mubr.f32.mxu0 0.0
      %2945 = vmatmul.mubr.f32.gmra.mrb[0].mxu0 %v2172
      %v2946 = vpop.f32.mrb[0].mxu0
      %v2947 = vadd.f32 0.0, %v2946
      %v2948 = vpop.f32.mrb[0].mxu0
      %v2949 = vadd.f32 0.0, %v2948
      %2950 = vmatprep.mubr.f32.mxu0 0.0
      %2951 = vmatmul.mubr.f32.gmra.mrb[0].mxu0 %v2175
      %v2952 = vpop.f32.mrb[0].mxu0
      %v2953 = vadd.f32 0.0, %v2952
      %v2954 = vpop.f32.mrb[0].mxu0
      %v2955 = vadd.f32 0.0, %v2954
      %2956 = vmatprep.mubr.f32.mxu0 0.0
      %2957 = vmatmul.mubr.f32.gmra.mrb[0].mxu0 %v2178
      %v2958 = vpop.f32.mrb[0].mxu0
      %v2959 = vadd.f32 0.0, %v2958
      %v2960 = vpop.f32.mrb[0].mxu0
      %v2961 = vadd.f32 0.0, %v2960
      %2962 = vdwg.mxu0
      %2963 = vmatprep.subr.mxu0 %v2060
      %2964 = vmatpush1.msra.mxu0 %v2059
      %2965 = vmatprep.subr.mxu0 %v2089
      %2966 = vmatpush1.msra.mxu0 %v2088
      %2967 = vmatprep.subr.mxu0 %v2118
      %2968 = vmatpush1.msra.mxu0 %v2117
      %2969 = vmatprep.subr.mxu0 %v2227
      %2970 = vmatpush1.msra.mxu0 %v2224
      %2971 = vmatprep.subr.mxu0 0.0
      %2972 = vmatpush1.msra.mxu0 0.0
      %2973 = vmatprep.subr.mxu0 0.0
      %2974 = vmatpush1.msra.mxu0 0.0
      %2975 = vmatprep.subr.mxu0 0.0
      %2976 = vmatpush1.msra.mxu0 0.0
      %2977 = vmatprep.subr.mxu0 0.0
      %2978 = vmatpush1.msra.mxu0 0.0
      %2979 = vmatprep.subr.mxu0 0.0
      %2980 = vmatpush1.msra.mxu0 0.0
      %2981 = vmatprep.subr.mxu0 0.0
      %2982 = vmatpush1.msra.mxu0 0.0
      %2983 = vmatprep.subr.mxu0 0.0
      %2984 = vmatpush1.msra.mxu0 0.0
      %2985 = vmatprep.subr.mxu0 0.0
      %2986 = vmatpush1.msra.mxu0 0.0
      %2987 = vmatprep.subr.mxu0 0.0
      %2988 = vmatpush1.msra.mxu0 0.0
      %2989 = vmatprep.subr.mxu0 0.0
      %2990 = vmatpush1.msra.mxu0 0.0
      %2991 = vmatprep.subr.mxu0 0.0
      %2992 = vmatpush1.msra.mxu0 0.0
      %2993 = vmatprep.subr.mxu0 0.0
      %2994 = vmatpush1.msra.mxu0 0.0
      %2995 = vmatprep.subr.mxu0 0.0
      %2996 = vmatpush1.msra.mxu0 0.0
      %2997 = vmatprep.subr.mxu0 0.0
      %2998 = vmatpush1.msra.mxu0 0.0
      %2999 = vmatprep.subr.mxu0 0.0
      %3000 = vmatpush1.msra.mxu0 0.0
      %3001 = vmatprep.subr.mxu0 0.0
      %3002 = vmatpush1.msra.mxu0 0.0
      %3003 = vmatprep.subr.mxu0 0.0
      %3004 = vmatpush1.msra.mxu0 0.0
      %3005 = vmatprep.subr.mxu0 0.0
      %3006 = vmatpush1.msra.mxu0 0.0
      %3007 = vmatprep.subr.mxu0 0.0
      %3008 = vmatpush1.msra.mxu0 0.0
      %3009 = vmatprep.subr.mxu0 0.0
      %3010 = vmatpush1.msra.mxu0 0.0
      %3011 = vmatprep.subr.mxu0 0.0
      %3012 = vmatpush1.msra.mxu0 0.0
      %3013 = vmatprep.subr.mxu0 0.0
      %3014 = vmatpush1.msra.mxu0 0.0
      %3015 = vmatprep.subr.mxu0 0.0
      %3016 = vmatpush1.msra.mxu0 0.0
      %3017 = vmatprep.subr.mxu0 0.0
      %3018 = vmatpush1.msra.mxu0 0.0
      %3019 = vmatprep.subr.mxu0 0.0
      %3020 = vmatpush1.msra.mxu0 0.0
      %3021 = vmatprep.subr.mxu0 0.0
      %3022 = vmatpush1.msra.mxu0 0.0
      %3023 = vmatprep.subr.mxu0 0.0
      %3024 = vmatpush1.msra.mxu0 0.0
      %3025 = vmatprep.subr.mxu0 0.0
      %3026 = vmatpush1.msra.mxu0 0.0
      %3027 = vmatprep.mubr.f32.mxu0 0.0
      %3028 = vmatmul.mubr.f32.gmra.mrb[0].mxu0 %v2163
      %v3029 = vpop.f32.mrb[0].mxu0
      %v3030 = vadd.f32 0.0, %v3029
      %v3031 = vpop.f32.mrb[0].mxu0
      %v3032 = vadd.f32 0.0, %v3031
      %3033 = vmatprep.mubr.f32.mxu0 0.0
      %3034 = vmatmul.mubr.f32.gmra.mrb[0].mxu0 %v2166
      %v3035 = vpop.f32.mrb[0].mxu0
      %v3036 = vadd.f32 0.0, %v3035
      %v3037 = vpop.f32.mrb[0].mxu0
      %v3038 = vadd.f32 0.0, %v3037
      %3039 = vmatprep.mubr.f32.mxu0 0.0
      %3040 = vmatmul.mubr.f32.gmra.mrb[0].mxu0 %v2169
      %v3041 = vpop.f32.mrb[0].mxu0
      %v3042 = vadd.f32 0.0, %v3041
      %v3043 = vpop.f32.mrb[0].mxu0
      %v3044 = vadd.f32 0.0, %v3043
      %3045 = vmatprep.mubr.f32.mxu0 0.0
      %3046 = vmatmul.mubr.f32.gmra.mrb[0].mxu0 %v2172
      %v3047 = vpop.f32.mrb[0].mxu0
      %v3048 = vadd.f32 0.0, %v3047
      %v3049 = vpop.f32.mrb[0].mxu0
      %v3050 = vadd.f32 0.0, %v3049
      %3051 = vmatprep.mubr.f32.mxu0 0.0
      %3052 = vmatmul.mubr.f32.gmra.mrb[0].mxu0 %v2175
      %v3053 = vpop.f32.mrb[0].mxu0
      %v3054 = vadd.f32 0.0, %v3053
      %v3055 = vpop.f32.mrb[0].mxu0
      %v3056 = vadd.f32 0.0, %v3055
      %3057 = vmatprep.mubr.f32.mxu0 0.0
      %3058 = vmatmul.mubr.f32.gmra.mrb[0].mxu0 %v2178
      %v3059 = vpop.f32.mrb[0].mxu0
      %v3060 = vadd.f32 0.0, %v3059
      %v3061 = vpop.f32.mrb[0].mxu0
      %v3062 = vadd.f32 0.0, %v3061
      %3063 = vdwg.mxu0
      %3064 = vmatprep.subr.mxu0 %v2062
      %3065 = vmatpush1.msra.mxu0 %v2061
      %3066 = vmatprep.subr.mxu0 %v2091
      %3067 = vmatpush1.msra.mxu0 %v2090
      %3068 = vmatprep.subr.mxu0 %v2120
      %3069 = vmatpush1.msra.mxu0 %v2119
      %3070 = vmatprep.subr.mxu0 %v2233
      %3071 = vmatpush1.msra.mxu0 %v2230
      %3072 = vmatprep.subr.mxu0 0.0
      %3073 = vmatpush1.msra.mxu0 0.0
      %3074 = vmatprep.subr.mxu0 0.0
      %3075 = vmatpush1.msra.mxu0 0.0
      %3076 = vmatprep.subr.mxu0 0.0
      %3077 = vmatpush1.msra.mxu0 0.0
      %3078 = vmatprep.subr.mxu0 0.0
      %3079 = vmatpush1.msra.mxu0 0.0
      %3080 = vmatprep.subr.mxu0 0.0
      %3081 = vmatpush1.msra.mxu0 0.0
      %3082 = vmatprep.subr.mxu0 0.0
      %3083 = vmatpush1.msra.mxu0 0.0
      %3084 = vmatprep.subr.mxu0 0.0
      %3085 = vmatpush1.msra.mxu0 0.0
      %3086 = vmatprep.subr.mxu0 0.0
      %3087 = vmatpush1.msra.mxu0 0.0
      %3088 = vmatprep.subr.mxu0 0.0
      %3089 = vmatpush1.msra.mxu0 0.0
      %3090 = vmatprep.subr.mxu0 0.0
      %3091 = vmatpush1.msra.mxu0 0.0
      %3092 = vmatprep.subr.mxu0 0.0
      %3093 = vmatpush1.msra.mxu0 0.0
      %3094 = vmatprep.subr.mxu0 0.0
      %3095 = vmatpush1.msra.mxu0 0.0
      %3096 = vmatprep.subr.mxu0 0.0
      %3097 = vmatpush1.msra.mxu0 0.0
      %3098 = vmatprep.subr.mxu0 0.0
      %3099 = vmatpush1.msra.mxu0 0.0
      %3100 = vmatprep.subr.mxu0 0.0
      %3101 = vmatpush1.msra.mxu0 0.0
      %3102 = vmatprep.subr.mxu0 0.0
      %3103 = vmatpush1.msra.mxu0 0.0
      %3104 = vmatprep.subr.mxu0 0.0
      %3105 = vmatpush1.msra.mxu0 0.0
      %3106 = vmatprep.subr.mxu0 0.0
      %3107 = vmatpush1.msra.mxu0 0.0
      %3108 = vmatprep.subr.mxu0 0.0
      %3109 = vmatpush1.msra.mxu0 0.0
      %3110 = vmatprep.subr.mxu0 0.0
      %3111 = vmatpush1.msra.mxu0 0.0
      %3112 = vmatprep.subr.mxu0 0.0
      %3113 = vmatpush1.msra.mxu0 0.0
      %3114 = vmatprep.subr.mxu0 0.0
      %3115 = vmatpush1.msra.mxu0 0.0
      %3116 = vmatprep.subr.mxu0 0.0
      %3117 = vmatpush1.msra.mxu0 0.0
      %3118 = vmatprep.subr.mxu0 0.0
      %3119 = vmatpush1.msra.mxu0 0.0
      %3120 = vmatprep.subr.mxu0 0.0
      %3121 = vmatpush1.msra.mxu0 0.0
      %3122 = vmatprep.subr.mxu0 0.0
      %3123 = vmatpush1.msra.mxu0 0.0
      %3124 = vmatprep.subr.mxu0 0.0
      %3125 = vmatpush1.msra.mxu0 0.0
      %3126 = vmatprep.subr.mxu0 0.0
      %3127 = vmatpush1.msra.mxu0 0.0
      %3128 = vmatprep.mubr.f32.mxu0 0.0
      %3129 = vmatmul.mubr.f32.gmra.mrb[0].mxu0 %v2163
      %v3130 = vpop.f32.mrb[0].mxu0
      %v3131 = vadd.f32 0.0, %v3130
      %v3132 = vpop.f32.mrb[0].mxu0
      %v3133 = vadd.f32 0.0, %v3132
      %3134 = vmatprep.mubr.f32.mxu0 0.0
      %3135 = vmatmul.mubr.f32.gmra.mrb[0].mxu0 %v2166
      %v3136 = vpop.f32.mrb[0].mxu0
      %v3137 = vadd.f32 0.0, %v3136
      %v3138 = vpop.f32.mrb[0].mxu0
      %v3139 = vadd.f32 0.0, %v3138
      %3140 = vmatprep.mubr.f32.mxu0 0.0
      %3141 = vmatmul.mubr.f32.gmra.mrb[0].mxu0 %v2169
      %v3142 = vpop.f32.mrb[0].mxu0
      %v3143 = vadd.f32 0.0, %v3142
      %v3144 = vpop.f32.mrb[0].mxu0
      %v3145 = vadd.f32 0.0, %v3144
      %3146 = vmatprep.mubr.f32.mxu0 0.0
      %3147 = vmatmul.mubr.f32.gmra.mrb[0].mxu0 %v2172
      %v3148 = vpop.f32.mrb[0].mxu0
      %v3149 = vadd.f32 0.0, %v3148
      %v3150 = vpop.f32.mrb[0].mxu0
      %v3151 = vadd.f32 0.0, %v3150
      %3152 = vmatprep.mubr.f32.mxu0 0.0
      %3153 = vmatmul.mubr.f32.gmra.mrb[0].mxu0 %v2175
      %v3154 = vpop.f32.mrb[0].mxu0
      %v3155 = vadd.f32 0.0, %v3154
      %v3156 = vpop.f32.mrb[0].mxu0
      %v3157 = vadd.f32 0.0, %v3156
      %3158 = vmatprep.mubr.f32.mxu0 0.0
      %3159 = vmatmul.mubr.f32.gmra.mrb[0].mxu0 %v2178
      %v3160 = vpop.f32.mrb[0].mxu0
      %v3161 = vadd.f32 0.0, %v3160
      %v3162 = vpop.f32.mrb[0].mxu0
      %v3163 = vadd.f32 0.0, %v3162
      %3164 = vdwg.mxu0
      %3165 = vmatprep.subr.mxu0 %v2064
      %3166 = vmatpush1.msra.mxu0 %v2063
      %3167 = vmatprep.subr.mxu0 %v2093
      %3168 = vmatpush1.msra.mxu0 %v2092
      %3169 = vmatprep.subr.mxu0 %v2122
      %3170 = vmatpush1.msra.mxu0 %v2121
      %3171 = vmatprep.subr.mxu0 %v2239
      %3172 = vmatpush1.msra.mxu0 %v2236
      %3173 = vmatprep.subr.mxu0 0.0
      %3174 = vmatpush1.msra.mxu0 0.0
      %3175 = vmatprep.subr.mxu0 0.0
      %3176 = vmatpush1.msra.mxu0 0.0
      %3177 = vmatprep.subr.mxu0 0.0
      %3178 = vmatpush1.msra.mxu0 0.0
      %3179 = vmatprep.subr.mxu0 0.0
      %3180 = vmatpush1.msra.mxu0 0.0
      %3181 = vmatprep.subr.mxu0 0.0
      %3182 = vmatpush1.msra.mxu0 0.0
      %3183 = vmatprep.subr.mxu0 0.0
      %3184 = vmatpush1.msra.mxu0 0.0
      %3185 = vmatprep.subr.mxu0 0.0
      %3186 = vmatpush1.msra.mxu0 0.0
      %3187 = vmatprep.subr.mxu0 0.0
      %3188 = vmatpush1.msra.mxu0 0.0
      %3189 = vmatprep.subr.mxu0 0.0
      %3190 = vmatpush1.msra.mxu0 0.0
      %3191 = vmatprep.subr.mxu0 0.0
      %3192 = vmatpush1.msra.mxu0 0.0
      %3193 = vmatprep.subr.mxu0 0.0
      %3194 = vmatpush1.msra.mxu0 0.0
      %3195 = vmatprep.subr.mxu0 0.0
      %3196 = vmatpush1.msra.mxu0 0.0
      %3197 = vmatprep.subr.mxu0 0.0
      %3198 = vmatpush1.msra.mxu0 0.0
      %3199 = vmatprep.subr.mxu0 0.0
      %3200 = vmatpush1.msra.mxu0 0.0
      %3201 = vmatprep.subr.mxu0 0.0
      %3202 = vmatpush1.msra.mxu0 0.0
      %3203 = vmatprep.subr.mxu0 0.0
      %3204 = vmatpush1.msra.mxu0 0.0
      %3205 = vmatprep.subr.mxu0 0.0
      %3206 = vmatpush1.msra.mxu0 0.0
      %3207 = vmatprep.subr.mxu0 0.0
      %3208 = vmatpush1.msra.mxu0 0.0
      %3209 = vmatprep.subr.mxu0 0.0
      %3210 = vmatpush1.msra.mxu0 0.0
      %3211 = vmatprep.subr.mxu0 0.0
      %3212 = vmatpush1.msra.mxu0 0.0
      %3213 = vmatprep.subr.mxu0 0.0
      %3214 = vmatpush1.msra.mxu0 0.0
      %3215 = vmatprep.subr.mxu0 0.0
      %3216 = vmatpush1.msra.mxu0 0.0
      %3217 = vmatprep.subr.mxu0 0.0
      %3218 = vmatpush1.msra.mxu0 0.0
      %3219 = vmatprep.subr.mxu0 0.0
      %3220 = vmatpush1.msra.mxu0 0.0
      %3221 = vmatprep.subr.mxu0 0.0
      %3222 = vmatpush1.msra.mxu0 0.0
      %3223 = vmatprep.subr.mxu0 0.0
      %3224 = vmatpush1.msra.mxu0 0.0
      %3225 = vmatprep.subr.mxu0 0.0
      %3226 = vmatpush1.msra.mxu0 0.0
      %3227 = vmatprep.subr.mxu0 0.0
      %3228 = vmatpush1.msra.mxu0 0.0
      %3229 = vmatprep.mubr.f32.mxu0 0.0
      %3230 = vmatmul.mubr.f32.gmra.mrb[0].mxu0 %v2163
      %v3231 = vpop.f32.mrb[0].mxu0
      %v3232 = vadd.f32 0.0, %v3231
      %v3233 = vpop.f32.mrb[0].mxu0
      %v3234 = vadd.f32 0.0, %v3233
      %3235 = vmatprep.mubr.f32.mxu0 0.0
      %3236 = vmatmul.mubr.f32.gmra.mrb[0].mxu0 %v2166
      %v3237 = vpop.f32.mrb[0].mxu0
      %v3238 = vadd.f32 0.0, %v3237
      %v3239 = vpop.f32.mrb[0].mxu0
      %v3240 = vadd.f32 0.0, %v3239
      %3241 = vmatprep.mubr.f32.mxu0 0.0
      %3242 = vmatmul.mubr.f32.gmra.mrb[0].mxu0 %v2169
      %v3243 = vpop.f32.mrb[0].mxu0
      %v3244 = vadd.f32 0.0, %v3243
      %v3245 = vpop.f32.mrb[0].mxu0
      %v3246 = vadd.f32 0.0, %v3245
      %3247 = vmatprep.mubr.f32.mxu0 0.0
      %3248 = vmatmul.mubr.f32.gmra.mrb[0].mxu0 %v2172
      %v3249 = vpop.f32.mrb[0].mxu0
      %v3250 = vadd.f32 0.0, %v3249
      %v3251 = vpop.f32.mrb[0].mxu0
      %v3252 = vadd.f32 0.0, %v3251
      %3253 = vmatprep.mubr.f32.mxu0 0.0
      %3254 = vmatmul.mubr.f32.gmra.mrb[0].mxu0 %v2175
      %v3255 = vpop.f32.mrb[0].mxu0
      %v3256 = vadd.f32 0.0, %v3255
      %v3257 = vpop.f32.mrb[0].mxu0
      %v3258 = vadd.f32 0.0, %v3257
      %3259 = vmatprep.mubr.f32.mxu0 0.0
      %3260 = vmatmul.mubr.f32.gmra.mrb[0].mxu0 %v2178
      %v3261 = vpop.f32.mrb[0].mxu0
      %v3262 = vadd.f32 0.0, %v3261
      %v3263 = vpop.f32.mrb[0].mxu0
      %v3264 = vadd.f32 0.0, %v3263
      %3265 = vdwg.mxu0
      %3266 = vmatprep.subr.mxu0 %v2066
      %3267 = vmatpush1.msra.mxu0 %v2065
      %3268 = vmatprep.subr.mxu0 %v2095
      %3269 = vmatpush1.msra.mxu0 %v2094
      %3270 = vmatprep.subr.mxu0 %v2124
      %3271 = vmatpush1.msra.mxu0 %v2123
      %3272 = vmatprep.subr.mxu0 %v2245
      %3273 = vmatpush1.msra.mxu0 %v2242
      %3274 = vmatprep.subr.mxu0 0.0
      %3275 = vmatpush1.msra.mxu0 0.0
      %3276 = vmatprep.subr.mxu0 0.0
      %3277 = vmatpush1.msra.mxu0 0.0
      %3278 = vmatprep.subr.mxu0 0.0
      %3279 = vmatpush1.msra.mxu0 0.0
      %3280 = vmatprep.subr.mxu0 0.0
      %3281 = vmatpush1.msra.mxu0 0.0
      %3282 = vmatprep.subr.mxu0 0.0
      %3283 = vmatpush1.msra.mxu0 0.0
      %3284 = vmatprep.subr.mxu0 0.0
      %3285 = vmatpush1.msra.mxu0 0.0
      %3286 = vmatprep.subr.mxu0 0.0
      %3287 = vmatpush1.msra.mxu0 0.0
      %3288 = vmatprep.subr.mxu0 0.0
      %3289 = vmatpush1.msra.mxu0 0.0
      %3290 = vmatprep.subr.mxu0 0.0
      %3291 = vmatpush1.msra.mxu0 0.0
      %3292 = vmatprep.subr.mxu0 0.0
      %3293 = vmatpush1.msra.mxu0 0.0
      %3294 = vmatprep.subr.mxu0 0.0
      %3295 = vmatpush1.msra.mxu0 0.0
      %3296 = vmatprep.subr.mxu0 0.0
      %3297 = vmatpush1.msra.mxu0 0.0
      %3298 = vmatprep.subr.mxu0 0.0
      %3299 = vmatpush1.msra.mxu0 0.0
      %3300 = vmatprep.subr.mxu0 0.0
      %3301 = vmatpush1.msra.mxu0 0.0
      %3302 = vmatprep.subr.mxu0 0.0
      %3303 = vmatpush1.msra.mxu0 0.0
      %3304 = vmatprep.subr.mxu0 0.0
      %3305 = vmatpush1.msra.mxu0 0.0
      %3306 = vmatprep.subr.mxu0 0.0
      %3307 = vmatpush1.msra.mxu0 0.0
      %3308 = vmatprep.subr.mxu0 0.0
      %3309 = vmatpush1.msra.mxu0 0.0
      %3310 = vmatprep.subr.mxu0 0.0
      %3311 = vmatpush1.msra.mxu0 0.0
      %3312 = vmatprep.subr.mxu0 0.0
      %3313 = vmatpush1.msra.mxu0 0.0
      %3314 = vmatprep.subr.mxu0 0.0
      %3315 = vmatpush1.msra.mxu0 0.0
      %3316 = vmatprep.subr.mxu0 0.0
      %3317 = vmatpush1.msra.mxu0 0.0
      %3318 = vmatprep.subr.mxu0 0.0
      %3319 = vmatpush1.msra.mxu0 0.0
      %3320 = vmatprep.subr.mxu0 0.0
      %3321 = vmatpush1.msra.mxu0 0.0
      %3322 = vmatprep.subr.mxu0 0.0
      %3323 = vmatpush1.msra.mxu0 0.0
      %3324 = vmatprep.subr.mxu0 0.0
      %3325 = vmatpush1.msra.mxu0 0.0
      %3326 = vmatprep.subr.mxu0 0.0
      %3327 = vmatpush1.msra.mxu0 0.0
      %3328 = vmatprep.subr.mxu0 0.0
      %3329 = vmatpush1.msra.mxu0 0.0
      %3330 = vmatprep.mubr.f32.mxu0 0.0
      %3331 = vmatmul.mubr.f32.gmra.mrb[0].mxu0 %v2163
      %v3332 = vpop.f32.mrb[0].mxu0
      %v3333 = vadd.f32 0.0, %v3332
      %v3334 = vpop.f32.mrb[0].mxu0
      %v3335 = vadd.f32 0.0, %v3334
      %3336 = vmatprep.mubr.f32.mxu0 0.0
      %3337 = vmatmul.mubr.f32.gmra.mrb[0].mxu0 %v2166
      %v3338 = vpop.f32.mrb[0].mxu0
      %v3339 = vadd.f32 0.0, %v3338
      %v3340 = vpop.f32.mrb[0].mxu0
      %v3341 = vadd.f32 0.0, %v3340
      %3342 = vmatprep.mubr.f32.mxu0 0.0
      %3343 = vmatmul.mubr.f32.gmra.mrb[0].mxu0 %v2169
      %v3344 = vpop.f32.mrb[0].mxu0
      %v3345 = vadd.f32 0.0, %v3344
      %v3346 = vpop.f32.mrb[0].mxu0
      %v3347 = vadd.f32 0.0, %v3346
      %3348 = vmatprep.mubr.f32.mxu0 0.0
      %3349 = vmatmul.mubr.f32.gmra.mrb[0].mxu0 %v2172
      %v3350 = vpop.f32.mrb[0].mxu0
      %v3351 = vadd.f32 0.0, %v3350
      %v3352 = vpop.f32.mrb[0].mxu0
      %v3353 = vadd.f32 0.0, %v3352
      %3354 = vmatprep.mubr.f32.mxu0 0.0
      %3355 = vmatmul.mubr.f32.gmra.mrb[0].mxu0 %v2175
      %v3356 = vpop.f32.mrb[0].mxu0
      %v3357 = vadd.f32 0.0, %v3356
      %v3358 = vpop.f32.mrb[0].mxu0
      %v3359 = vadd.f32 0.0, %v3358
      %3360 = vmatprep.mubr.f32.mxu0 0.0
      %3361 = vmatmul.mubr.f32.gmra.mrb[0].mxu0 %v2178
      %v3362 = vpop.f32.mrb[0].mxu0
      %v3363 = vadd.f32 0.0, %v3362
      %v3364 = vpop.f32.mrb[0].mxu0
      %v3365 = vadd.f32 0.0, %v3364
      %3366 = vdwg.mxu0
      %3367 = vmatprep.subr.mxu0 %v2068
      %3368 = vmatpush1.msra.mxu0 %v2067
      %3369 = vmatprep.subr.mxu0 %v2097
      %3370 = vmatpush1.msra.mxu0 %v2096
      %3371 = vmatprep.subr.mxu0 %v2126
      %3372 = vmatpush1.msra.mxu0 %v2125
      %3373 = vmatprep.subr.mxu0 %v2251
      %3374 = vmatpush1.msra.mxu0 %v2248
      %3375 = vmatprep.subr.mxu0 0.0
      %3376 = vmatpush1.msra.mxu0 0.0
      %3377 = vmatprep.subr.mxu0 0.0
      %3378 = vmatpush1.msra.mxu0 0.0
      %3379 = vmatprep.subr.mxu0 0.0
      %3380 = vmatpush1.msra.mxu0 0.0
      %3381 = vmatprep.subr.mxu0 0.0
      %3382 = vmatpush1.msra.mxu0 0.0
      %3383 = vmatprep.subr.mxu0 0.0
      %3384 = vmatpush1.msra.mxu0 0.0
      %3385 = vmatprep.subr.mxu0 0.0
      %3386 = vmatpush1.msra.mxu0 0.0
      %3387 = vmatprep.subr.mxu0 0.0
      %3388 = vmatpush1.msra.mxu0 0.0
      %3389 = vmatprep.subr.mxu0 0.0
      %3390 = vmatpush1.msra.mxu0 0.0
      %3391 = vmatprep.subr.mxu0 0.0
      %3392 = vmatpush1.msra.mxu0 0.0
      %3393 = vmatprep.subr.mxu0 0.0
      %3394 = vmatpush1.msra.mxu0 0.0
      %3395 = vmatprep.subr.mxu0 0.0
      %3396 = vmatpush1.msra.mxu0 0.0
      %3397 = vmatprep.subr.mxu0 0.0
      %3398 = vmatpush1.msra.mxu0 0.0
      %3399 = vmatprep.subr.mxu0 0.0
      %3400 = vmatpush1.msra.mxu0 0.0
      %3401 = vmatprep.subr.mxu0 0.0
      %3402 = vmatpush1.msra.mxu0 0.0
      %3403 = vmatprep.subr.mxu0 0.0
      %3404 = vmatpush1.msra.mxu0 0.0
      %3405 = vmatprep.subr.mxu0 0.0
      %3406 = vmatpush1.msra.mxu0 0.0
      %3407 = vmatprep.subr.mxu0 0.0
      %3408 = vmatpush1.msra.mxu0 0.0
      %3409 = vmatprep.subr.mxu0 0.0
      %3410 = vmatpush1.msra.mxu0 0.0
      %3411 = vmatprep.subr.mxu0 0.0
      %3412 = vmatpush1.msra.mxu0 0.0
      %3413 = vmatprep.subr.mxu0 0.0
      %3414 = vmatpush1.msra.mxu0 0.0
      %3415 = vmatprep.subr.mxu0 0.0
      %3416 = vmatpush1.msra.mxu0 0.0
      %3417 = vmatprep.subr.mxu0 0.0
      %3418 = vmatpush1.msra.mxu0 0.0
      %3419 = vmatprep.subr.mxu0 0.0
      %3420 = vmatpush1.msra.mxu0 0.0
      %3421 = vmatprep.subr.mxu0 0.0
      %3422 = vmatpush1.msra.mxu0 0.0
      %3423 = vmatprep.subr.mxu0 0.0
      %3424 = vmatpush1.msra.mxu0 0.0
      %3425 = vmatprep.subr.mxu0 0.0
      %3426 = vmatpush1.msra.mxu0 0.0
      %3427 = vmatprep.subr.mxu0 0.0
      %3428 = vmatpush1.msra.mxu0 0.0
      %3429 = vmatprep.subr.mxu0 0.0
      %3430 = vmatpush1.msra.mxu0 0.0
      %3431 = vmatprep.mubr.f32.mxu0 0.0
      %3432 = vmatmul.mubr.f32.gmra.mrb[0].mxu0 %v2163
      %v3433 = vpop.f32.mrb[0].mxu0
      %v3434 = vadd.f32 0.0, %v3433
      %v3435 = vpop.f32.mrb[0].mxu0
      %v3436 = vadd.f32 0.0, %v3435
      %3437 = vmatprep.mubr.f32.mxu0 0.0
      %3438 = vmatmul.mubr.f32.gmra.mrb[0].mxu0 %v2166
      %v3439 = vpop.f32.mrb[0].mxu0
      %v3440 = vadd.f32 0.0, %v3439
      %v3441 = vpop.f32.mrb[0].mxu0
      %v3442 = vadd.f32 0.0, %v3441
      %3443 = vmatprep.mubr.f32.mxu0 0.0
      %3444 = vmatmul.mubr.f32.gmra.mrb[0].mxu0 %v2169
      %v3445 = vpop.f32.mrb[0].mxu0
      %v3446 = vadd.f32 0.0, %v3445
      %v3447 = vpop.f32.mrb[0].mxu0
      %v3448 = vadd.f32 0.0, %v3447
      %3449 = vmatprep.mubr.f32.mxu0 0.0
      %3450 = vmatmul.mubr.f32.gmra.mrb[0].mxu0 %v2172
      %v3451 = vpop.f32.mrb[0].mxu0
      %v3452 = vadd.f32 0.0, %v3451
      %v3453 = vpop.f32.mrb[0].mxu0
      %v3454 = vadd.f32 0.0, %v3453
      %3455 = vmatprep.mubr.f32.mxu0 0.0
      %3456 = vmatmul.mubr.f32.gmra.mrb[0].mxu0 %v2175
      %v3457 = vpop.f32.mrb[0].mxu0
      %v3458 = vadd.f32 0.0, %v3457
      %v3459 = vpop.f32.mrb[0].mxu0
      %v3460 = vadd.f32 0.0, %v3459
      %3461 = vmatprep.mubr.f32.mxu0 0.0
      %3462 = vmatmul.mubr.f32.gmra.mrb[0].mxu0 %v2178
      %v3463 = vpop.f32.mrb[0].mxu0
      %v3464 = vadd.f32 0.0, %v3463
      %v3465 = vpop.f32.mrb[0].mxu0
      %v3466 = vadd.f32 0.0, %v3465
      %3467 = vdwg.mxu0
      %3468 = vmatprep.subr.mxu0 %v2070
      %3469 = vmatpush1.msra.mxu0 %v2069
      %3470 = vmatprep.subr.mxu0 %v2099
      %3471 = vmatpush1.msra.mxu0 %v2098
      %3472 = vmatprep.subr.mxu0 %v2128
      %3473 = vmatpush1.msra.mxu0 %v2127
      %3474 = vmatprep.subr.mxu0 %v2257
      %3475 = vmatpush1.msra.mxu0 %v2254
      %3476 = vmatprep.subr.mxu0 0.0
      %3477 = vmatpush1.msra.mxu0 0.0
      %3478 = vmatprep.subr.mxu0 0.0
      %3479 = vmatpush1.msra.mxu0 0.0
      %3480 = vmatprep.subr.mxu0 0.0
      %3481 = vmatpush1.msra.mxu0 0.0
      %3482 = vmatprep.subr.mxu0 0.0
      %3483 = vmatpush1.msra.mxu0 0.0
      %3484 = vmatprep.subr.mxu0 0.0
      %3485 = vmatpush1.msra.mxu0 0.0
      %3486 = vmatprep.subr.mxu0 0.0
      %3487 = vmatpush1.msra.mxu0 0.0
      %3488 = vmatprep.subr.mxu0 0.0
      %3489 = vmatpush1.msra.mxu0 0.0
      %3490 = vmatprep.subr.mxu0 0.0
      %3491 = vmatpush1.msra.mxu0 0.0
      %3492 = vmatprep.subr.mxu0 0.0
      %3493 = vmatpush1.msra.mxu0 0.0
      %3494 = vmatprep.subr.mxu0 0.0
      %3495 = vmatpush1.msra.mxu0 0.0
      %3496 = vmatprep.subr.mxu0 0.0
      %3497 = vmatpush1.msra.mxu0 0.0
      %3498 = vmatprep.subr.mxu0 0.0
      %3499 = vmatpush1.msra.mxu0 0.0
      %3500 = vmatprep.subr.mxu0 0.0
      %3501 = vmatpush1.msra.mxu0 0.0
      %3502 = vmatprep.subr.mxu0 0.0
      %3503 = vmatpush1.msra.mxu0 0.0
      %3504 = vmatprep.subr.mxu0 0.0
      %3505 = vmatpush1.msra.mxu0 0.0
      %3506 = vmatprep.subr.mxu0 0.0
      %3507 = vmatpush1.msra.mxu0 0.0
      %3508 = vmatprep.subr.mxu0 0.0
      %3509 = vmatpush1.msra.mxu0 0.0
      %3510 = vmatprep.subr.mxu0 0.0
      %3511 = vmatpush1.msra.mxu0 0.0
      %3512 = vmatprep.subr.mxu0 0.0
      %3513 = vmatpush1.msra.mxu0 0.0
      %3514 = vmatprep.subr.mxu0 0.0
      %3515 = vmatpush1.msra.mxu0 0.0
      %3516 = vmatprep.subr.mxu0 0.0
      %3517 = vmatpush1.msra.mxu0 0.0
      %3518 = vmatprep.subr.mxu0 0.0
      %3519 = vmatpush1.msra.mxu0 0.0
      %3520 = vmatprep.subr.mxu0 0.0
      %3521 = vmatpush1.msra.mxu0 0.0
      %3522 = vmatprep.subr.mxu0 0.0
      %3523 = vmatpush1.msra.mxu0 0.0
      %3524 = vmatprep.subr.mxu0 0.0
      %3525 = vmatpush1.msra.mxu0 0.0
      %3526 = vmatprep.subr.mxu0 0.0
      %3527 = vmatpush1.msra.mxu0 0.0
      %3528 = vmatprep.subr.mxu0 0.0
      %3529 = vmatpush1.msra.mxu0 0.0
      %3530 = vmatprep.subr.mxu0 0.0
      %3531 = vmatpush1.msra.mxu0 0.0
      %3532 = vmatprep.mubr.f32.mxu0 0.0
      %3533 = vmatmul.mubr.f32.gmra.mrb[0].mxu0 %v2163
      %v3534 = vpop.f32.mrb[0].mxu0
      %v3535 = vadd.f32 0.0, %v3534
      %v3536 = vpop.f32.mrb[0].mxu0
      %3537 = vmatprep.mubr.f32.mxu0 0.0
      %3538 = vmatmul.mubr.f32.gmra.mrb[0].mxu0 %v2166
      %v3539 = vpop.f32.mrb[0].mxu0
      %v3540 = vadd.f32 0.0, %v3539
      %v3541 = vpop.f32.mrb[0].mxu0
      %3542 = vmatprep.mubr.f32.mxu0 0.0
      %3543 = vmatmul.mubr.f32.gmra.mrb[0].mxu0 %v2169
      %v3544 = vpop.f32.mrb[0].mxu0
      %v3545 = vadd.f32 0.0, %v3544
      %v3546 = vpop.f32.mrb[0].mxu0
      %v3547 = vadd.f32 0.0, %v3546
      %3548 = vmatprep.mubr.f32.mxu0 0.0
      %3549 = vmatmul.mubr.f32.gmra.mrb[0].mxu0 %v2172
      %v3550 = vpop.f32.mrb[0].mxu0
      %v3551 = vadd.f32 0.0, %v3550
      %v3552 = vpop.f32.mrb[0].mxu0
      %v3553 = vadd.f32 0.0, %v3552
      %3554 = vmatprep.mubr.f32.mxu0 0.0
      %3555 = vmatmul.mubr.f32.gmra.mrb[0].mxu0 %v2175
      %v3556 = vpop.f32.mrb[0].mxu0
      %v3557 = vadd.f32 0.0, %v3556
      %v3558 = vpop.f32.mrb[0].mxu0
      %v3559 = vadd.f32 0.0, %v3558
      %3560 = vmatprep.mubr.f32.mxu0 0.0
      %3561 = vmatmul.mubr.f32.gmra.mrb[0].mxu0 %v2178
      %v3562 = vpop.f32.mrb[0].mxu0
      %v3563 = vadd.f32 0.0, %v3562
      %v3564 = vpop.f32.mrb[0].mxu0
      %v3565 = vadd.f32 0.0, %v3564
      %3566 = vdwg.mxu0
      %3567 = vmatprep.subr.mxu0 %v2072
      %3568 = vmatpush1.msra.mxu0 %v2071
      %3569 = vmatprep.subr.mxu0 %v2101
      %3570 = vmatpush1.msra.mxu0 %v2100
      %3571 = vmatprep.subr.mxu0 %v2130
      %3572 = vmatpush1.msra.mxu0 %v2129
      %3573 = vmatprep.subr.mxu0 %v2263
      %3574 = vmatpush1.msra.mxu0 %v2260
      %3575 = vmatprep.subr.mxu0 0.0
      %3576 = vmatpush1.msra.mxu0 0.0
      %3577 = vmatprep.subr.mxu0 0.0
      %3578 = vmatpush1.msra.mxu0 0.0
      %3579 = vmatprep.subr.mxu0 0.0
      %3580 = vmatpush1.msra.mxu0 0.0
      %3581 = vmatprep.subr.mxu0 0.0
      %3582 = vmatpush1.msra.mxu0 0.0
      %3583 = vmatprep.subr.mxu0 0.0
      %3584 = vmatpush1.msra.mxu0 0.0
      %3585 = vmatprep.subr.mxu0 0.0
      %3586 = vmatpush1.msra.mxu0 0.0
      %3587 = vmatprep.subr.mxu0 0.0
      %3588 = vmatpush1.msra.mxu0 0.0
      %3589 = vmatprep.subr.mxu0 0.0
      %3590 = vmatpush1.msra.mxu0 0.0
      %3591 = vmatprep.subr.mxu0 0.0
      %3592 = vmatpush1.msra.mxu0 0.0
      %3593 = vmatprep.subr.mxu0 0.0
      %3594 = vmatpush1.msra.mxu0 0.0
      %3595 = vmatprep.subr.mxu0 0.0
      %3596 = vmatpush1.msra.mxu0 0.0
      %3597 = vmatprep.subr.mxu0 0.0
      %3598 = vmatpush1.msra.mxu0 0.0
      %3599 = vmatprep.subr.mxu0 0.0
      %3600 = vmatpush1.msra.mxu0 0.0
      %3601 = vmatprep.subr.mxu0 0.0
      %3602 = vmatpush1.msra.mxu0 0.0
      %3603 = vmatprep.subr.mxu0 0.0
      %3604 = vmatpush1.msra.mxu0 0.0
      %3605 = vmatprep.subr.mxu0 0.0
      %3606 = vmatpush1.msra.mxu0 0.0
      %3607 = vmatprep.subr.mxu0 0.0
      %3608 = vmatpush1.msra.mxu0 0.0
      %3609 = vmatprep.subr.mxu0 0.0
      %3610 = vmatpush1.msra.mxu0 0.0
      %3611 = vmatprep.subr.mxu0 0.0
      %3612 = vmatpush1.msra.mxu0 0.0
      %3613 = vmatprep.subr.mxu0 0.0
      %3614 = vmatpush1.msra.mxu0 0.0
      %3615 = vmatprep.subr.mxu0 0.0
      %3616 = vmatpush1.msra.mxu0 0.0
      %3617 = vmatprep.subr.mxu0 0.0
      %3618 = vmatpush1.msra.mxu0 0.0
      %3619 = vmatprep.subr.mxu0 0.0
      %3620 = vmatpush1.msra.mxu0 0.0
      %3621 = vmatprep.subr.mxu0 0.0
      %3622 = vmatpush1.msra.mxu0 0.0
      %3623 = vmatprep.subr.mxu0 0.0
      %3624 = vmatpush1.msra.mxu0 0.0
      %3625 = vmatprep.subr.mxu0 0.0
      %3626 = vmatpush1.msra.mxu0 0.0
      %3627 = vmatprep.subr.mxu0 0.0
      %3628 = vmatpush1.msra.mxu0 0.0
      %3629 = vmatprep.subr.mxu0 0.0
      %3630 = vmatpush1.msra.mxu0 0.0
      %3631 = vmatprep.mubr.f32.mxu0 0.0
      %3632 = vmatmul.mubr.f32.gmra.mrb[0].mxu0 %v2163
      %v3633 = vpop.f32.mrb[0].mxu0
      %v3634 = vpop.f32.mrb[0].mxu0
      %3635 = vmatprep.mubr.f32.mxu0 0.0
      %3636 = vmatmul.mubr.f32.gmra.mrb[0].mxu0 %v2166
      %v3637 = vpop.f32.mrb[0].mxu0
      %v3638 = vpop.f32.mrb[0].mxu0
      %3639 = vmatprep.mubr.f32.mxu0 0.0
      %3640 = vmatmul.mubr.f32.gmra.mrb[0].mxu0 %v2169
      %v3641 = vpop.f32.mrb[0].mxu0
      %v3642 = vadd.f32 0.0, %v3641
      %v3643 = vpop.f32.mrb[0].mxu0
      %3644 = vmatprep.mubr.f32.mxu0 0.0
      %3645 = vmatmul.mubr.f32.gmra.mrb[0].mxu0 %v2172
      %v3646 = vpop.f32.mrb[0].mxu0
      %v3647 = vadd.f32 0.0, %v3646
      %v3648 = vpop.f32.mrb[0].mxu0
      %3649 = vmatprep.mubr.f32.mxu0 0.0
      %3650 = vmatmul.mubr.f32.gmra.mrb[0].mxu0 %v2175
      %v3651 = vpop.f32.mrb[0].mxu0
      %v3652 = vadd.f32 0.0, %v3651
      %v3653 = vpop.f32.mrb[0].mxu0
      %v3654 = vadd.f32 0.0, %v3653
      %3655 = vmatprep.mubr.f32.mxu0 0.0
      %3656 = vmatmul.mubr.f32.gmra.mrb[0].mxu0 %v2178
      %v3657 = vpop.f32.mrb[0].mxu0
      %v3658 = vadd.f32 0.0, %v3657
      %v3659 = vpop.f32.mrb[0].mxu0
      %v3660 = vadd.f32 0.0, %v3659
      %3661 = vdwg.mxu0
      %3662 = vmatprep.subr.mxu0 0.0
      %3663 = vmatpush1.msra.mxu0 %v2073
      %3664 = vmatprep.subr.mxu0 0.0
      %3665 = vmatpush1.msra.mxu0 %v2102
      %3666 = vmatprep.subr.mxu0 0.0
      %3667 = vmatpush1.msra.mxu0 %v2131
      %3668 = vmatprep.subr.mxu0 0.0
      %3669 = vmatpush1.msra.mxu0 %v2266
      %3670 = vmatprep.subr.mxu0 0.0
      %3671 = vmatpush1.msra.mxu0 0.0
      %3672 = vmatprep.subr.mxu0 0.0
      %3673 = vmatpush1.msra.mxu0 0.0
      %3674 = vmatprep.subr.mxu0 0.0
      %3675 = vmatpush1.msra.mxu0 0.0
      %3676 = vmatprep.subr.mxu0 0.0
      %3677 = vmatpush1.msra.mxu0 0.0
      %3678 = vmatprep.subr.mxu0 0.0
      %3679 = vmatpush1.msra.mxu0 0.0
      %3680 = vmatprep.subr.mxu0 0.0
      %3681 = vmatpush1.msra.mxu0 0.0
      %3682 = vmatprep.subr.mxu0 0.0
      %3683 = vmatpush1.msra.mxu0 0.0
      %3684 = vmatprep.subr.mxu0 0.0
      %3685 = vmatpush1.msra.mxu0 0.0
      %3686 = vmatprep.subr.mxu0 0.0
      %3687 = vmatpush1.msra.mxu0 0.0
      %3688 = vmatprep.subr.mxu0 0.0
      %3689 = vmatpush1.msra.mxu0 0.0
      %3690 = vmatprep.subr.mxu0 0.0
      %3691 = vmatpush1.msra.mxu0 0.0
      %3692 = vmatprep.subr.mxu0 0.0
      %3693 = vmatpush1.msra.mxu0 0.0
      %3694 = vmatprep.subr.mxu0 0.0
      %3695 = vmatpush1.msra.mxu0 0.0
      %3696 = vmatprep.subr.mxu0 0.0
      %3697 = vmatpush1.msra.mxu0 0.0
      %3698 = vmatprep.subr.mxu0 0.0
      %3699 = vmatpush1.msra.mxu0 0.0
      %3700 = vmatprep.subr.mxu0 0.0
      %3701 = vmatpush1.msra.mxu0 0.0
      %3702 = vmatprep.subr.mxu0 0.0
      %3703 = vmatpush1.msra.mxu0 0.0
      %3704 = vmatprep.subr.mxu0 0.0
      %3705 = vmatpush1.msra.mxu0 0.0
      %3706 = vmatprep.subr.mxu0 0.0
      %3707 = vmatpush1.msra.mxu0 0.0
      %3708 = vmatprep.subr.mxu0 0.0
      %3709 = vmatpush1.msra.mxu0 0.0
      %3710 = vmatprep.subr.mxu0 0.0
      %3711 = vmatpush1.msra.mxu0 0.0
      %3712 = vmatprep.subr.mxu0 0.0
      %3713 = vmatpush1.msra.mxu0 0.0
      %3714 = vmatprep.subr.mxu0 0.0
      %3715 = vmatpush1.msra.mxu0 0.0
      %3716 = vmatprep.subr.mxu0 0.0
      %3717 = vmatpush1.msra.mxu0 0.0
      %3718 = vmatprep.subr.mxu0 0.0
      %3719 = vmatpush1.msra.mxu0 0.0
      %3720 = vmatprep.subr.mxu0 0.0
      %3721 = vmatpush1.msra.mxu0 0.0
      %3722 = vmatprep.subr.mxu0 0.0
      %3723 = vmatpush1.msra.mxu0 0.0
      %3724 = vmatprep.subr.mxu0 0.0
      %3725 = vmatpush1.msra.mxu0 0.0
      %3726 = vmatprep.mubr.f32.mxu0 0.0
      %3727 = vmatmul.mubr.f32.gmra.mrb[0].mxu0 %v2163
      %v3728 = vpop.f32.mrb[0].mxu0
      %v3729 = vpop.f32.mrb[0].mxu0
      %3730 = vmatprep.mubr.f32.mxu0 0.0
      %3731 = vmatmul.mubr.f32.gmra.mrb[0].mxu0 %v2166
      %v3732 = vpop.f32.mrb[0].mxu0
      %v3733 = vpop.f32.mrb[0].mxu0
      %3734 = vmatprep.mubr.f32.mxu0 0.0
      %3735 = vmatmul.mubr.f32.gmra.mrb[0].mxu0 %v2169
      %v3736 = vpop.f32.mrb[0].mxu0
      %v3737 = vpop.f32.mrb[0].mxu0
      %3738 = vmatprep.mubr.f32.mxu0 0.0
      %3739 = vmatmul.mubr.f32.gmra.mrb[0].mxu0 %v2172
      %v3740 = vpop.f32.mrb[0].mxu0
      %v3741 = vpop.f32.mrb[0].mxu0
      %3742 = vmatprep.mubr.f32.mxu0 0.0
      %3743 = vmatmul.mubr.f32.gmra.mrb[0].mxu0 %v2175
      %v3744 = vpop.f32.mrb[0].mxu0
      %v3745 = vadd.f32 0.0, %v3744
      %v3746 = vpop.f32.mrb[0].mxu0
      %3747 = vmatprep.mubr.f32.mxu0 0.0
      %3748 = vmatmul.mubr.f32.gmra.mrb[0].mxu0 %v2178
      %v3749 = vpop.f32.mrb[0].mxu0
      %v3750 = vadd.f32 0.0, %v3749
      %v3751 = vpop.f32.mrb[0].mxu0
      %3752 = vdwg.mxu0
      %v3753 = vadd.f32 %v2335, %v2440
      %v3754 = vadd.f32 %v2337, %v2442
      %v3755 = vadd.f32 %v2428, %v2537
      %v3756 = vadd.f32 %v2430, %v2539
      %v3757 = vadd.f32 %v2525, %v2638
      %v3758 = vadd.f32 %v2527, %v2640
      %v3759 = vadd.f32 %v2626, %v2739
      %v3760 = vadd.f32 %v2628, %v2741
      %v3761 = vadd.f32 %v2727, %v2840
      %v3762 = vadd.f32 %v2729, %v2842
      %v3763 = vadd.f32 %v2828, %v2941
      %v3764 = vadd.f32 %v2830, %v2943
      %v3765 = vadd.f32 %v2929, %v3042
      %v3766 = vadd.f32 %v2931, %v3044
      %v3767 = vadd.f32 %v3030, %v3143
      %v3768 = vadd.f32 %v3032, %v3145
      %v3769 = vadd.f32 %v3131, %v3244
      %v3770 = vadd.f32 %v3133, %v3246
      %v3771 = vadd.f32 %v3232, %v3345
      %v3772 = vadd.f32 %v3234, %v3347
      %v3773 = vadd.f32 %v3333, %v3446
      %v3774 = vadd.f32 %v3335, %v3448
      %v3775 = vadd.f32 %v3434, %v3545
      %v3776 = vadd.f32 %v3436, %v3547
      %v3777 = vadd.f32 %v3535, %v3642
      %v3778 = vadd.f32 %v2341, %v2446
      %v3779 = vadd.f32 %v2343, %v2448
      %v3780 = vadd.f32 %v2434, %v2543
      %v3781 = vadd.f32 %v2436, %v2545
      %v3782 = vadd.f32 %v2531, %v2644
      %v3783 = vadd.f32 %v2533, %v2646
      %v3784 = vadd.f32 %v2632, %v2745
      %v3785 = vadd.f32 %v2634, %v2747
      %v3786 = vadd.f32 %v2733, %v2846
      %v3787 = vadd.f32 %v2735, %v2848
      %v3788 = vadd.f32 %v2834, %v2947
      %v3789 = vadd.f32 %v2836, %v2949
      %v3790 = vadd.f32 %v2935, %v3048
      %v3791 = vadd.f32 %v2937, %v3050
      %v3792 = vadd.f32 %v3036, %v3149
      %v3793 = vadd.f32 %v3038, %v3151
      %v3794 = vadd.f32 %v3137, %v3250
      %v3795 = vadd.f32 %v3139, %v3252
      %v3796 = vadd.f32 %v3238, %v3351
      %v3797 = vadd.f32 %v3240, %v3353
      %v3798 = vadd.f32 %v3339, %v3452
      %v3799 = vadd.f32 %v3341, %v3454
      %v3800 = vadd.f32 %v3440, %v3551
      %v3801 = vadd.f32 %v3442, %v3553
      %v3802 = vadd.f32 %v3540, %v3647
      %v3803 = vadd.f32 %v3753, %v2549
      %v3804 = vadd.f32 %v3754, %v2551
      %v3805 = vadd.f32 %v3755, %v2650
      %v3806 = vadd.f32 %v3756, %v2652
      %v3807 = vadd.f32 %v3757, %v2751
      %v3808 = vadd.f32 %v3758, %v2753
      %v3809 = vadd.f32 %v3759, %v2852
      %v3810 = vadd.f32 %v3760, %v2854
      %v3811 = vadd.f32 %v3761, %v2953
      %v3812 = vadd.f32 %v3762, %v2955
      %v3813 = vadd.f32 %v3763, %v3054
      %v3814 = vadd.f32 %v3764, %v3056
      %v3815 = vadd.f32 %v3765, %v3155
      %v3816 = vadd.f32 %v3766, %v3157
      %v3817 = vadd.f32 %v3767, %v3256
      %v3818 = vadd.f32 %v3768, %v3258
      %v3819 = vadd.f32 %v3769, %v3357
      %v3820 = vadd.f32 %v3770, %v3359
      %v3821 = vadd.f32 %v3771, %v3458
      %v3822 = vadd.f32 %v3772, %v3460
      %v3823 = vadd.f32 %v3773, %v3557
      %v3824 = vadd.f32 %v3774, %v3559
      %v3825 = vadd.f32 %v3775, %v3652
      %v3826 = vadd.f32 %v3776, %v3654
      %v3827 = vadd.f32 %v3777, %v3745
      %v3828 = vadd.f32 %v3778, %v2555
      %v3829 = vadd.f32 %v3779, %v2557
      %v3830 = vadd.f32 %v3780, %v2656
      %v3831 = vadd.f32 %v3781, %v2658
      %v3832 = vadd.f32 %v3782, %v2757
      %v3833 = vadd.f32 %v3783, %v2759
      %v3834 = vadd.f32 %v3784, %v2858
      %v3835 = vadd.f32 %v3785, %v2860
      %v3836 = vadd.f32 %v3786, %v2959
      %v3837 = vadd.f32 %v3787, %v2961
      %v3838 = vadd.f32 %v3788, %v3060
      %v3839 = vadd.f32 %v3789, %v3062
      %v3840 = vadd.f32 %v3790, %v3161
      %v3841 = vadd.f32 %v3791, %v3163
      %v3842 = vadd.f32 %v3792, %v3262
      %v3843 = vadd.f32 %v3793, %v3264
      %v3844 = vadd.f32 %v3794, %v3363
      %v3845 = vadd.f32 %v3795, %v3365
      %v3846 = vadd.f32 %v3796, %v3464
      %v3847 = vadd.f32 %v3797, %v3466
      %v3848 = vadd.f32 %v3798, %v3563
      %v3849 = vadd.f32 %v3799, %v3565
      %v3850 = vadd.f32 %v3800, %v3658
      %v3851 = vadd.f32 %v3801, %v3660
      %v3852 = vadd.f32 %v3802, %v3750
      %v3853 = vld [vmem:[%s2] sm:$0xff]
      %v3854 = vld [vmem:[%s2 + $0x8] sm:$0xff]
      %3856 = vset.pattern.permute.xlu0 0
      %3857 = vperm.xlu0 %3856, %v3853
      %v3858 = vpop.permute.xlu0 %3857
      %3861 = vset.pattern.permute.xlu0 0
      %3862 = vperm.xlu0 %3861, %v3854
      %v3863 = vpop.permute.xlu0 %3862
      %v3865 = vadd.f32 %v3803, %v3858
      %v3866 = vadd.f32 %v3804, %v3858
      %v3867 = vadd.f32 %v3805, %v3858
      %v3868 = vadd.f32 %v3806, %v3858
      %v3869 = vadd.f32 %v3807, %v3858
      %v3870 = vadd.f32 %v3808, %v3858
      %v3871 = vadd.f32 %v3809, %v3858
      %v3872 = vadd.f32 %v3810, %v3858
      %v3873 = vadd.f32 %v3811, %v3858
      %v3874 = vadd.f32 %v3812, %v3858
      %v3875 = vadd.f32 %v3813, %v3858
      %v3876 = vadd.f32 %v3814, %v3858
      %v3877 = vadd.f32 %v3815, %v3858
      %v3878 = vadd.f32 %v3816, %v3858
      %v3879 = vadd.f32 %v3817, %v3858
      %v3880 = vadd.f32 %v3818, %v3858
      %v3881 = vadd.f32 %v3819, %v3858
      %v3882 = vadd.f32 %v3820, %v3858
      %v3883 = vadd.f32 %v3821, %v3858
      %v3884 = vadd.f32 %v3822, %v3858
      %v3885 = vadd.f32 %v3823, %v3858
      %v3886 = vadd.f32 %v3824, %v3858
      %v3887 = vadd.f32 %v3825, %v3858
      %v3888 = vadd.f32 %v3826, %v3858
      %v3889 = vadd.f32 %v3827, %v3858
      %v3890 = vadd.f32 %v3828, %v3863
      %v3891 = vadd.f32 %v3829, %v3863
      %v3892 = vadd.f32 %v3830, %v3863
      %v3893 = vadd.f32 %v3831, %v3863
      %v3894 = vadd.f32 %v3832, %v3863
      %v3895 = vadd.f32 %v3833, %v3863
      %v3896 = vadd.f32 %v3834, %v3863
      %v3897 = vadd.f32 %v3835, %v3863
      %v3898 = vadd.f32 %v3836, %v3863
      %v3899 = vadd.f32 %v3837, %v3863
      %v3900 = vadd.f32 %v3838, %v3863
      %v3901 = vadd.f32 %v3839, %v3863
      %v3902 = vadd.f32 %v3840, %v3863
      %v3903 = vadd.f32 %v3841, %v3863
      %v3904 = vadd.f32 %v3842, %v3863
      %v3905 = vadd.f32 %v3843, %v3863
      %v3906 = vadd.f32 %v3844, %v3863
      %v3907 = vadd.f32 %v3845, %v3863
      %v3908 = vadd.f32 %v3846, %v3863
      %v3909 = vadd.f32 %v3847, %v3863
      %v3910 = vadd.f32 %v3848, %v3863
      %v3911 = vadd.f32 %v3849, %v3863
      %v3912 = vadd.f32 %v3850, %v3863
      %v3913 = vadd.f32 %v3851, %v3863
      %v3914 = vadd.f32 %v3852, %v3863
      %v3915 = vmax.f32 %v3865, %v3890
      %v3916 = vrot.slane %v3915, 4
      %v3917 = vmax.f32 %v3915, %v3916
      %v3918 = vrot.slane %v3917, 2
      %v3919 = vmax.f32 %v3917, %v3918
      %v3920 = vrot.slane %v3919, 1
      %v3921 = vmax.f32 %v3919, %v3920
      %v3922 = vmax.f32 %v3866, %v3891
      %v3923 = vrot.slane %v3922, 4
      %v3924 = vmax.f32 %v3922, %v3923
      %v3925 = vrot.slane %v3924, 2
      %v3926 = vmax.f32 %v3924, %v3925
      %v3927 = vrot.slane %v3926, 1
      %v3928 = vmax.f32 %v3926, %v3927
      %v3929 = vmax.f32 %v3867, %v3892
      %v3930 = vrot.slane %v3929, 4
      %v3931 = vmax.f32 %v3929, %v3930
      %v3932 = vrot.slane %v3931, 2
      %v3933 = vmax.f32 %v3931, %v3932
      %v3934 = vrot.slane %v3933, 1
      %v3935 = vmax.f32 %v3933, %v3934
      %v3936 = vmax.f32 %v3868, %v3893
      %v3937 = vrot.slane %v3936, 4
      %v3938 = vmax.f32 %v3936, %v3937
      %v3939 = vrot.slane %v3938, 2
      %v3940 = vmax.f32 %v3938, %v3939
      %v3941 = vrot.slane %v3940, 1
      %v3942 = vmax.f32 %v3940, %v3941
      %v3943 = vmax.f32 %v3869, %v3894
      %v3944 = vrot.slane %v3943, 4
      %v3945 = vmax.f32 %v3943, %v3944
      %v3946 = vrot.slane %v3945, 2
      %v3947 = vmax.f32 %v3945, %v3946
      %v3948 = vrot.slane %v3947, 1
      %v3949 = vmax.f32 %v3947, %v3948
      %v3950 = vmax.f32 %v3870, %v3895
      %v3951 = vrot.slane %v3950, 4
      %v3952 = vmax.f32 %v3950, %v3951
      %v3953 = vrot.slane %v3952, 2
      %v3954 = vmax.f32 %v3952, %v3953
      %v3955 = vrot.slane %v3954, 1
      %v3956 = vmax.f32 %v3954, %v3955
      %v3957 = vmax.f32 %v3871, %v3896
      %v3958 = vrot.slane %v3957, 4
      %v3959 = vmax.f32 %v3957, %v3958
      %v3960 = vrot.slane %v3959, 2
      %v3961 = vmax.f32 %v3959, %v3960
      %v3962 = vrot.slane %v3961, 1
      %v3963 = vmax.f32 %v3961, %v3962
      %v3964 = vmax.f32 %v3872, %v3897
      %v3965 = vrot.slane %v3964, 4
      %v3966 = vmax.f32 %v3964, %v3965
      %v3967 = vrot.slane %v3966, 2
      %v3968 = vmax.f32 %v3966, %v3967
      %v3969 = vrot.slane %v3968, 1
      %v3970 = vmax.f32 %v3968, %v3969
      %v3971 = vmax.f32 %v3873, %v3898
      %v3972 = vrot.slane %v3971, 4
      %v3973 = vmax.f32 %v3971, %v3972
      %v3974 = vrot.slane %v3973, 2
      %v3975 = vmax.f32 %v3973, %v3974
      %v3976 = vrot.slane %v3975, 1
      %v3977 = vmax.f32 %v3975, %v3976
      %v3978 = vmax.f32 %v3874, %v3899
      %v3979 = vrot.slane %v3978, 4
      %v3980 = vmax.f32 %v3978, %v3979
      %v3981 = vrot.slane %v3980, 2
      %v3982 = vmax.f32 %v3980, %v3981
      %v3983 = vrot.slane %v3982, 1
      %v3984 = vmax.f32 %v3982, %v3983
      %v3985 = vmax.f32 %v3875, %v3900
      %v3986 = vrot.slane %v3985, 4
      %v3987 = vmax.f32 %v3985, %v3986
      %v3988 = vrot.slane %v3987, 2
      %v3989 = vmax.f32 %v3987, %v3988
      %v3990 = vrot.slane %v3989, 1
      %v3991 = vmax.f32 %v3989, %v3990
      %v3992 = vmax.f32 %v3876, %v3901
      %v3993 = vrot.slane %v3992, 4
      %v3994 = vmax.f32 %v3992, %v3993
      %v3995 = vrot.slane %v3994, 2
      %v3996 = vmax.f32 %v3994, %v3995
      %v3997 = vrot.slane %v3996, 1
      %v3998 = vmax.f32 %v3996, %v3997
      %v3999 = vmax.f32 %v3877, %v3902
      %v4000 = vrot.slane %v3999, 4
      %v4001 = vmax.f32 %v3999, %v4000
      %v4002 = vrot.slane %v4001, 2
      %v4003 = vmax.f32 %v4001, %v4002
      %v4004 = vrot.slane %v4003, 1
      %v4005 = vmax.f32 %v4003, %v4004
      %v4006 = vmax.f32 %v3878, %v3903
      %v4007 = vrot.slane %v4006, 4
      %v4008 = vmax.f32 %v4006, %v4007
      %v4009 = vrot.slane %v4008, 2
      %v4010 = vmax.f32 %v4008, %v4009
      %v4011 = vrot.slane %v4010, 1
      %v4012 = vmax.f32 %v4010, %v4011
      %v4013 = vmax.f32 %v3879, %v3904
      %v4014 = vrot.slane %v4013, 4
      %v4015 = vmax.f32 %v4013, %v4014
      %v4016 = vrot.slane %v4015, 2
      %v4017 = vmax.f32 %v4015, %v4016
      %v4018 = vrot.slane %v4017, 1
      %v4019 = vmax.f32 %v4017, %v4018
      %v4020 = vmax.f32 %v3880, %v3905
      %v4021 = vrot.slane %v4020, 4
      %v4022 = vmax.f32 %v4020, %v4021
      %v4023 = vrot.slane %v4022, 2
      %v4024 = vmax.f32 %v4022, %v4023
      %v4025 = vrot.slane %v4024, 1
      %v4026 = vmax.f32 %v4024, %v4025
      %v4027 = vmax.f32 %v3881, %v3906
      %v4028 = vrot.slane %v4027, 4
      %v4029 = vmax.f32 %v4027, %v4028
      %v4030 = vrot.slane %v4029, 2
      %v4031 = vmax.f32 %v4029, %v4030
      %v4032 = vrot.slane %v4031, 1
      %v4033 = vmax.f32 %v4031, %v4032
      %v4034 = vmax.f32 %v3882, %v3907
      %v4035 = vrot.slane %v4034, 4
      %v4036 = vmax.f32 %v4034, %v4035
      %v4037 = vrot.slane %v4036, 2
      %v4038 = vmax.f32 %v4036, %v4037
      %v4039 = vrot.slane %v4038, 1
      %v4040 = vmax.f32 %v4038, %v4039
      %v4041 = vmax.f32 %v3883, %v3908
      %v4042 = vrot.slane %v4041, 4
      %v4043 = vmax.f32 %v4041, %v4042
      %v4044 = vrot.slane %v4043, 2
      %v4045 = vmax.f32 %v4043, %v4044
      %v4046 = vrot.slane %v4045, 1
      %v4047 = vmax.f32 %v4045, %v4046
      %v4048 = vmax.f32 %v3884, %v3909
      %v4049 = vrot.slane %v4048, 4
      %v4050 = vmax.f32 %v4048, %v4049
      %v4051 = vrot.slane %v4050, 2
      %v4052 = vmax.f32 %v4050, %v4051
      %v4053 = vrot.slane %v4052, 1
      %v4054 = vmax.f32 %v4052, %v4053
      %v4055 = vmax.f32 %v3885, %v3910
      %v4056 = vrot.slane %v4055, 4
      %v4057 = vmax.f32 %v4055, %v4056
      %v4058 = vrot.slane %v4057, 2
      %v4059 = vmax.f32 %v4057, %v4058
      %v4060 = vrot.slane %v4059, 1
      %v4061 = vmax.f32 %v4059, %v4060
      %v4062 = vmax.f32 %v3886, %v3911
      %v4063 = vrot.slane %v4062, 4
      %v4064 = vmax.f32 %v4062, %v4063
      %v4065 = vrot.slane %v4064, 2
      %v4066 = vmax.f32 %v4064, %v4065
      %v4067 = vrot.slane %v4066, 1
      %v4068 = vmax.f32 %v4066, %v4067
      %v4069 = vmax.f32 %v3887, %v3912
      %v4070 = vrot.slane %v4069, 4
      %v4071 = vmax.f32 %v4069, %v4070
      %v4072 = vrot.slane %v4071, 2
      %v4073 = vmax.f32 %v4071, %v4072
      %v4074 = vrot.slane %v4073, 1
      %v4075 = vmax.f32 %v4073, %v4074
      %v4076 = vmax.f32 %v3888, %v3913
      %v4077 = vrot.slane %v4076, 4
      %v4078 = vmax.f32 %v4076, %v4077
      %v4079 = vrot.slane %v4078, 2
      %v4080 = vmax.f32 %v4078, %v4079
      %v4081 = vrot.slane %v4080, 1
      %v4082 = vmax.f32 %v4080, %v4081
      %v4083 = vmax.f32 %v3889, %v3914
      %v4084 = vrot.slane %v4083, 4
      %v4085 = vmax.f32 %v4083, %v4084
      %v4086 = vrot.slane %v4085, 2
      %v4087 = vmax.f32 %v4085, %v4086
      %v4088 = vrot.slane %v4087, 1
      %v4089 = vmax.f32 %v4087, %v4088
      %v4090 = vsub.f32 %v3865, %v3921
      %v4091 = vsub.f32 %v3866, %v3928
      %v4092 = vsub.f32 %v3867, %v3935
      %v4093 = vsub.f32 %v3868, %v3942
      %v4094 = vsub.f32 %v3869, %v3949
      %v4095 = vsub.f32 %v3870, %v3956
      %v4096 = vsub.f32 %v3871, %v3963
      %v4097 = vsub.f32 %v3872, %v3970
      %v4098 = vsub.f32 %v3873, %v3977
      %v4099 = vsub.f32 %v3874, %v3984
      %v4100 = vsub.f32 %v3875, %v3991
      %v4101 = vsub.f32 %v3876, %v3998
      %v4102 = vsub.f32 %v3877, %v4005
      %v4103 = vsub.f32 %v3878, %v4012
      %v4104 = vsub.f32 %v3879, %v4019
      %v4105 = vsub.f32 %v3880, %v4026
      %v4106 = vsub.f32 %v3881, %v4033
      %v4107 = vsub.f32 %v3882, %v4040
      %v4108 = vsub.f32 %v3883, %v4047
      %v4109 = vsub.f32 %v3884, %v4054
      %v4110 = vsub.f32 %v3885, %v4061
      %v4111 = vsub.f32 %v3886, %v4068
      %v4112 = vsub.f32 %v3887, %v4075
      %v4113 = vsub.f32 %v3888, %v4082
      %v4114 = vsub.f32 %v3889, %v4089
      %v4115 = vsub.f32 %v3890, %v3921
      %v4116 = vsub.f32 %v3891, %v3928
      %v4117 = vsub.f32 %v3892, %v3935
      %v4118 = vsub.f32 %v3893, %v3942
      %v4119 = vsub.f32 %v3894, %v3949
      %v4120 = vsub.f32 %v3895, %v3956
      %v4121 = vsub.f32 %v3896, %v3963
      %v4122 = vsub.f32 %v3897, %v3970
      %v4123 = vsub.f32 %v3898, %v3977
      %v4124 = vsub.f32 %v3899, %v3984
      %v4125 = vsub.f32 %v3900, %v3991
      %v4126 = vsub.f32 %v3901, %v3998
      %v4127 = vsub.f32 %v3902, %v4005
      %v4128 = vsub.f32 %v3903, %v4012
      %v4129 = vsub.f32 %v3904, %v4019
      %v4130 = vsub.f32 %v3905, %v4026
      %v4131 = vsub.f32 %v3906, %v4033
      %v4132 = vsub.f32 %v3907, %v4040
      %v4133 = vsub.f32 %v3908, %v4047
      %v4134 = vsub.f32 %v3909, %v4054
      %v4135 = vsub.f32 %v3910, %v4061
      %v4136 = vsub.f32 %v3911, %v4068
      %v4137 = vsub.f32 %v3912, %v4075
      %v4138 = vsub.f32 %v3913, %v4082
      %v4139 = vsub.f32 %v3914, %v4089
      %v4140 = vmul.f32 %v4090, 1.442695
      %v4141 = vpow.pop %v4140
      %v4142 = vmul.f32 %v4091, 1.442695
      %v4143 = vpow.pop %v4142
      %v4144 = vmul.f32 %v4092, 1.442695
      %v4145 = vpow.pop %v4144
      %v4146 = vmul.f32 %v4093, 1.442695
      %v4147 = vpow.pop %v4146
      %v4148 = vmul.f32 %v4094, 1.442695
      %v4149 = vpow.pop %v4148
      %v4150 = vmul.f32 %v4095, 1.442695
      %v4151 = vpow.pop %v4150
      %v4152 = vmul.f32 %v4096, 1.442695
      %v4153 = vpow.pop %v4152
      %v4154 = vmul.f32 %v4097, 1.442695
      %v4155 = vpow.pop %v4154
      %v4156 = vmul.f32 %v4098, 1.442695
      %v4157 = vpow.pop %v4156
      %v4158 = vmul.f32 %v4099, 1.442695
      %v4159 = vpow.pop %v4158
      %v4160 = vmul.f32 %v4100, 1.442695
      %v4161 = vpow.pop %v4160
      %v4162 = vmul.f32 %v4101, 1.442695
      %v4163 = vpow.pop %v4162
      %v4164 = vmul.f32 %v4102, 1.442695
      %v4165 = vpow.pop %v4164
      %v4166 = vmul.f32 %v4103, 1.442695
      %v4167 = vpow.pop %v4166
      %v4168 = vmul.f32 %v4104, 1.442695
      %v4169 = vpow.pop %v4168
      %v4170 = vmul.f32 %v4105, 1.442695
      %v4171 = vpow.pop %v4170
      %v4172 = vmul.f32 %v4106, 1.442695
      %v4173 = vpow.pop %v4172
      %v4174 = vmul.f32 %v4107, 1.442695
      %v4175 = vpow.pop %v4174
      %v4176 = vmul.f32 %v4108, 1.442695
      %v4177 = vpow.pop %v4176
      %v4178 = vmul.f32 %v4109, 1.442695
      %v4179 = vpow.pop %v4178
      %v4180 = vmul.f32 %v4110, 1.442695
      %v4181 = vpow.pop %v4180
      %v4182 = vmul.f32 %v4111, 1.442695
      %v4183 = vpow.pop %v4182
      %v4184 = vmul.f32 %v4112, 1.442695
      %v4185 = vpow.pop %v4184
      %v4186 = vmul.f32 %v4113, 1.442695
      %v4187 = vpow.pop %v4186
      %v4188 = vmul.f32 %v4114, 1.442695
      %v4189 = vpow.pop %v4188
      %v4190 = vmul.f32 %v4115, 1.442695
      %v4191 = vpow.pop %v4190
      %v4192 = vmul.f32 %v4116, 1.442695
      %v4193 = vpow.pop %v4192
      %v4194 = vmul.f32 %v4117, 1.442695
      %v4195 = vpow.pop %v4194
      %v4196 = vmul.f32 %v4118, 1.442695
      %v4197 = vpow.pop %v4196
      %v4198 = vmul.f32 %v4119, 1.442695
      %v4199 = vpow.pop %v4198
      %v4200 = vmul.f32 %v4120, 1.442695
      %v4201 = vpow.pop %v4200
      %v4202 = vmul.f32 %v4121, 1.442695
      %v4203 = vpow.pop %v4202
      %v4204 = vmul.f32 %v4122, 1.442695
      %v4205 = vpow.pop %v4204
      %v4206 = vmul.f32 %v4123, 1.442695
      %v4207 = vpow.pop %v4206
      %v4208 = vmul.f32 %v4124, 1.442695
      %v4209 = vpow.pop %v4208
      %v4210 = vmul.f32 %v4125, 1.442695
      %v4211 = vpow.pop %v4210
      %v4212 = vmul.f32 %v4126, 1.442695
      %v4213 = vpow.pop %v4212
      %v4214 = vmul.f32 %v4127, 1.442695
      %v4215 = vpow.pop %v4214
      %v4216 = vmul.f32 %v4128, 1.442695
      %v4217 = vpow.pop %v4216
      %v4218 = vmul.f32 %v4129, 1.442695
      %v4219 = vpow.pop %v4218
      %v4220 = vmul.f32 %v4130, 1.442695
      %v4221 = vpow.pop %v4220
      %v4222 = vmul.f32 %v4131, 1.442695
      %v4223 = vpow.pop %v4222
      %v4224 = vmul.f32 %v4132, 1.442695
      %v4225 = vpow.pop %v4224
      %v4226 = vmul.f32 %v4133, 1.442695
      %v4227 = vpow.pop %v4226
      %v4228 = vmul.f32 %v4134, 1.442695
      %v4229 = vpow.pop %v4228
      %v4230 = vmul.f32 %v4135, 1.442695
      %v4231 = vpow.pop %v4230
      %v4232 = vmul.f32 %v4136, 1.442695
      %v4233 = vpow.pop %v4232
      %v4234 = vmul.f32 %v4137, 1.442695
      %v4235 = vpow.pop %v4234
      %v4236 = vmul.f32 %v4138, 1.442695
      %v4237 = vpow.pop %v4236
      %v4238 = vmul.f32 %v4139, 1.442695
      %v4239 = vpow.pop %v4238
      %v4240 = vadd.f32 %v4141, %v4191
      %v4241 = vrot.slane %v4240, 4
      %v4242 = vadd.f32 %v4240, %v4241
      %v4243 = vrot.slane %v4242, 2
      %v4244 = vadd.f32 %v4242, %v4243
      %v4245 = vrot.slane %v4244, 1
      %v4246 = vadd.f32 %v4244, %v4245
      %v4247 = vadd.f32 %v4143, %v4193
      %v4248 = vrot.slane %v4247, 4
      %v4249 = vadd.f32 %v4247, %v4248
      %v4250 = vrot.slane %v4249, 2
      %v4251 = vadd.f32 %v4249, %v4250
      %v4252 = vrot.slane %v4251, 1
      %v4253 = vadd.f32 %v4251, %v4252
      %v4254 = vadd.f32 %v4145, %v4195
      %v4255 = vrot.slane %v4254, 4
      %v4256 = vadd.f32 %v4254, %v4255
      %v4257 = vrot.slane %v4256, 2
      %v4258 = vadd.f32 %v4256, %v4257
      %v4259 = vrot.slane %v4258, 1
      %v4260 = vadd.f32 %v4258, %v4259
      %v4261 = vadd.f32 %v4147, %v4197
      %v4262 = vrot.slane %v4261, 4
      %v4263 = vadd.f32 %v4261, %v4262
      %v4264 = vrot.slane %v4263, 2
      %v4265 = vadd.f32 %v4263, %v4264
      %v4266 = vrot.slane %v4265, 1
      %v4267 = vadd.f32 %v4265, %v4266
      %v4268 = vadd.f32 %v4149, %v4199
      %v4269 = vrot.slane %v4268, 4
      %v4270 = vadd.f32 %v4268, %v4269
      %v4271 = vrot.slane %v4270, 2
      %v4272 = vadd.f32 %v4270, %v4271
      %v4273 = vrot.slane %v4272, 1
      %v4274 = vadd.f32 %v4272, %v4273
      %v4275 = vadd.f32 %v4151, %v4201
      %v4276 = vrot.slane %v4275, 4
      %v4277 = vadd.f32 %v4275, %v4276
      %v4278 = vrot.slane %v4277, 2
      %v4279 = vadd.f32 %v4277, %v4278
      %v4280 = vrot.slane %v4279, 1
      %v4281 = vadd.f32 %v4279, %v4280
      %v4282 = vadd.f32 %v4153, %v4203
      %v4283 = vrot.slane %v4282, 4
      %v4284 = vadd.f32 %v4282, %v4283
      %v4285 = vrot.slane %v4284, 2
      %v4286 = vadd.f32 %v4284, %v4285
      %v4287 = vrot.slane %v4286, 1
      %v4288 = vadd.f32 %v4286, %v4287
      %v4289 = vadd.f32 %v4155, %v4205
      %v4290 = vrot.slane %v4289, 4
      %v4291 = vadd.f32 %v4289, %v4290
      %v4292 = vrot.slane %v4291, 2
      %v4293 = vadd.f32 %v4291, %v4292
      %v4294 = vrot.slane %v4293, 1
      %v4295 = vadd.f32 %v4293, %v4294
      %v4296 = vadd.f32 %v4157, %v4207
      %v4297 = vrot.slane %v4296, 4
      %v4298 = vadd.f32 %v4296, %v4297
      %v4299 = vrot.slane %v4298, 2
      %v4300 = vadd.f32 %v4298, %v4299
      %v4301 = vrot.slane %v4300, 1
      %v4302 = vadd.f32 %v4300, %v4301
      %v4303 = vadd.f32 %v4159, %v4209
      %v4304 = vrot.slane %v4303, 4
      %v4305 = vadd.f32 %v4303, %v4304
      %v4306 = vrot.slane %v4305, 2
      %v4307 = vadd.f32 %v4305, %v4306
      %v4308 = vrot.slane %v4307, 1
      %v4309 = vadd.f32 %v4307, %v4308
      %v4310 = vadd.f32 %v4161, %v4211
      %v4311 = vrot.slane %v4310, 4
      %v4312 = vadd.f32 %v4310, %v4311
      %v4313 = vrot.slane %v4312, 2
      %v4314 = vadd.f32 %v4312, %v4313
      %v4315 = vrot.slane %v4314, 1
      %v4316 = vadd.f32 %v4314, %v4315
      %v4317 = vadd.f32 %v4163, %v4213
      %v4318 = vrot.slane %v4317, 4
      %v4319 = vadd.f32 %v4317, %v4318
      %v4320 = vrot.slane %v4319, 2
      %v4321 = vadd.f32 %v4319, %v4320
      %v4322 = vrot.slane %v4321, 1
      %v4323 = vadd.f32 %v4321, %v4322
      %v4324 = vadd.f32 %v4165, %v4215
      %v4325 = vrot.slane %v4324, 4
      %v4326 = vadd.f32 %v4324, %v4325
      %v4327 = vrot.slane %v4326, 2
      %v4328 = vadd.f32 %v4326, %v4327
      %v4329 = vrot.slane %v4328, 1
      %v4330 = vadd.f32 %v4328, %v4329
      %v4331 = vadd.f32 %v4167, %v4217
      %v4332 = vrot.slane %v4331, 4
      %v4333 = vadd.f32 %v4331, %v4332
      %v4334 = vrot.slane %v4333, 2
      %v4335 = vadd.f32 %v4333, %v4334
      %v4336 = vrot.slane %v4335, 1
      %v4337 = vadd.f32 %v4335, %v4336
      %v4338 = vadd.f32 %v4169, %v4219
      %v4339 = vrot.slane %v4338, 4
      %v4340 = vadd.f32 %v4338, %v4339
      %v4341 = vrot.slane %v4340, 2
      %v4342 = vadd.f32 %v4340, %v4341
      %v4343 = vrot.slane %v4342, 1
      %v4344 = vadd.f32 %v4342, %v4343
      %v4345 = vadd.f32 %v4171, %v4221
      %v4346 = vrot.slane %v4345, 4
      %v4347 = vadd.f32 %v4345, %v4346
      %v4348 = vrot.slane %v4347, 2
      %v4349 = vadd.f32 %v4347, %v4348
      %v4350 = vrot.slane %v4349, 1
      %v4351 = vadd.f32 %v4349, %v4350
      %v4352 = vadd.f32 %v4173, %v4223
      %v4353 = vrot.slane %v4352, 4
      %v4354 = vadd.f32 %v4352, %v4353
      %v4355 = vrot.slane %v4354, 2
      %v4356 = vadd.f32 %v4354, %v4355
      %v4357 = vrot.slane %v4356, 1
      %v4358 = vadd.f32 %v4356, %v4357
      %v4359 = vadd.f32 %v4175, %v4225
      %v4360 = vrot.slane %v4359, 4
      %v4361 = vadd.f32 %v4359, %v4360
      %v4362 = vrot.slane %v4361, 2
      %v4363 = vadd.f32 %v4361, %v4362
      %v4364 = vrot.slane %v4363, 1
      %v4365 = vadd.f32 %v4363, %v4364
      %v4366 = vadd.f32 %v4177, %v4227
      %v4367 = vrot.slane %v4366, 4
      %v4368 = vadd.f32 %v4366, %v4367
      %v4369 = vrot.slane %v4368, 2
      %v4370 = vadd.f32 %v4368, %v4369
      %v4371 = vrot.slane %v4370, 1
      %v4372 = vadd.f32 %v4370, %v4371
      %v4373 = vadd.f32 %v4179, %v4229
      %v4374 = vrot.slane %v4373, 4
      %v4375 = vadd.f32 %v4373, %v4374
      %v4376 = vrot.slane %v4375, 2
      %v4377 = vadd.f32 %v4375, %v4376
      %v4378 = vrot.slane %v4377, 1
      %v4379 = vadd.f32 %v4377, %v4378
      %v4380 = vadd.f32 %v4181, %v4231
      %v4381 = vrot.slane %v4380, 4
      %v4382 = vadd.f32 %v4380, %v4381
      %v4383 = vrot.slane %v4382, 2
      %v4384 = vadd.f32 %v4382, %v4383
      %v4385 = vrot.slane %v4384, 1
      %v4386 = vadd.f32 %v4384, %v4385
      %v4387 = vadd.f32 %v4183, %v4233
      %v4388 = vrot.slane %v4387, 4
      %v4389 = vadd.f32 %v4387, %v4388
      %v4390 = vrot.slane %v4389, 2
      %v4391 = vadd.f32 %v4389, %v4390
      %v4392 = vrot.slane %v4391, 1
      %v4393 = vadd.f32 %v4391, %v4392
      %v4394 = vadd.f32 %v4185, %v4235
      %v4395 = vrot.slane %v4394, 4
      %v4396 = vadd.f32 %v4394, %v4395
      %v4397 = vrot.slane %v4396, 2
      %v4398 = vadd.f32 %v4396, %v4397
      %v4399 = vrot.slane %v4398, 1
      %v4400 = vadd.f32 %v4398, %v4399
      %v4401 = vadd.f32 %v4187, %v4237
      %v4402 = vrot.slane %v4401, 4
      %v4403 = vadd.f32 %v4401, %v4402
      %v4404 = vrot.slane %v4403, 2
      %v4405 = vadd.f32 %v4403, %v4404
      %v4406 = vrot.slane %v4405, 1
      %v4407 = vadd.f32 %v4405, %v4406
      %v4408 = vadd.f32 %v4189, %v4239
      %v4409 = vrot.slane %v4408, 4
      %v4410 = vadd.f32 %v4408, %v4409
      %v4411 = vrot.slane %v4410, 2
      %v4412 = vadd.f32 %v4410, %v4411
      %v4413 = vrot.slane %v4412, 1
      %v4414 = vadd.f32 %v4412, %v4413
      %v4415 = vrcp.pop %v4246
      %v4416 = vrcp.pop %v4253
      %v4417 = vrcp.pop %v4260
      %v4418 = vrcp.pop %v4267
      %v4419 = vrcp.pop %v4274
      %v4420 = vrcp.pop %v4281
      %v4421 = vrcp.pop %v4288
      %v4422 = vrcp.pop %v4295
      %v4423 = vrcp.pop %v4302
      %v4424 = vrcp.pop %v4309
      %v4425 = vrcp.pop %v4316
      %v4426 = vrcp.pop %v4323
      %v4427 = vrcp.pop %v4330
      %v4428 = vrcp.pop %v4337
      %v4429 = vrcp.pop %v4344
      %v4430 = vrcp.pop %v4351
      %v4431 = vrcp.pop %v4358
      %v4432 = vrcp.pop %v4365
      %v4433 = vrcp.pop %v4372
      %v4434 = vrcp.pop %v4379
      %v4435 = vrcp.pop %v4386
      %v4436 = vrcp.pop %v4393
      %v4437 = vrcp.pop %v4400
      %v4438 = vrcp.pop %v4407
      %v4439 = vrcp.pop %v4414
      %v4440 = vmul.f32 %v4141, %v4415
      %v4441 = vmul.f32 %v4143, %v4416
      %v4442 = vmul.f32 %v4145, %v4417
      %v4443 = vmul.f32 %v4147, %v4418
      %v4444 = vmul.f32 %v4149, %v4419
      %v4445 = vmul.f32 %v4151, %v4420
      %v4446 = vmul.f32 %v4153, %v4421
      %v4447 = vmul.f32 %v4155, %v4422
      %v4448 = vmul.f32 %v4157, %v4423
      %v4449 = vmul.f32 %v4159, %v4424
      %v4450 = vmul.f32 %v4161, %v4425
      %v4451 = vmul.f32 %v4163, %v4426
      %v4452 = vmul.f32 %v4165, %v4427
      %v4453 = vmul.f32 %v4167, %v4428
      %v4454 = vmul.f32 %v4169, %v4429
      %v4455 = vmul.f32 %v4171, %v4430
      %v4456 = vmul.f32 %v4173, %v4431
      %v4457 = vmul.f32 %v4175, %v4432
      %v4458 = vmul.f32 %v4177, %v4433
      %v4459 = vmul.f32 %v4179, %v4434
      %v4460 = vmul.f32 %v4181, %v4435
      %v4461 = vmul.f32 %v4183, %v4436
      %v4462 = vmul.f32 %v4185, %v4437
      %v4463 = vmul.f32 %v4187, %v4438
      %v4464 = vmul.f32 %v4189, %v4439
      %v4465 = vmul.f32 %v4191, %v4415
      %v4466 = vmul.f32 %v4193, %v4416
      %v4467 = vmul.f32 %v4195, %v4417
      %v4468 = vmul.f32 %v4197, %v4418
      %v4469 = vmul.f32 %v4199, %v4419
      %v4470 = vmul.f32 %v4201, %v4420
      %v4471 = vmul.f32 %v4203, %v4421
      %v4472 = vmul.f32 %v4205, %v4422
      %v4473 = vmul.f32 %v4207, %v4423
      %v4474 = vmul.f32 %v4209, %v4424
      %v4475 = vmul.f32 %v4211, %v4425
      %v4476 = vmul.f32 %v4213, %v4426
      %v4477 = vmul.f32 %v4215, %v4427
      %v4478 = vmul.f32 %v4217, %v4428
      %v4479 = vmul.f32 %v4219, %v4429
      %v4480 = vmul.f32 %v4221, %v4430
      %v4481 = vmul.f32 %v4223, %v4431
      %v4482 = vmul.f32 %v4225, %v4432
      %v4483 = vmul.f32 %v4227, %v4433
      %v4484 = vmul.f32 %v4229, %v4434
      %v4485 = vmul.f32 %v4231, %v4435
      %v4486 = vmul.f32 %v4233, %v4436
      %v4487 = vmul.f32 %v4235, %v4437
      %v4488 = vmul.f32 %v4237, %v4438
      %v4489 = vmul.f32 %v4239, %v4439
      %4540 = vrot.lane.b32.xlu0 %v4440, 127
      %v4541 = vpop.permute.xlu0 %4540
      %4542 = vrot.lane.b32.xlu0 %v4441, 127
      %v4543 = vpop.permute.xlu0 %4542
      %4544 = vrot.lane.b32.xlu0 %v4442, 127
      %v4545 = vpop.permute.xlu0 %4544
      %4546 = vrot.lane.b32.xlu0 %v4443, 127
      %v4547 = vpop.permute.xlu0 %4546
      %4548 = vrot.lane.b32.xlu0 %v4444, 127
      %v4549 = vpop.permute.xlu0 %4548
      %4550 = vrot.lane.b32.xlu0 %v4445, 127
      %v4551 = vpop.permute.xlu0 %4550
      %4552 = vrot.lane.b32.xlu0 %v4446, 127
      %v4553 = vpop.permute.xlu0 %4552
      %4554 = vrot.lane.b32.xlu0 %v4447, 127
      %v4555 = vpop.permute.xlu0 %4554
      %4556 = vrot.lane.b32.xlu0 %v4448, 127
      %v4557 = vpop.permute.xlu0 %4556
      %4558 = vrot.lane.b32.xlu0 %v4449, 127
      %v4559 = vpop.permute.xlu0 %4558
      %4560 = vrot.lane.b32.xlu0 %v4450, 127
      %v4561 = vpop.permute.xlu0 %4560
      %4562 = vrot.lane.b32.xlu0 %v4451, 127
      %v4563 = vpop.permute.xlu0 %4562
      %4564 = vrot.lane.b32.xlu0 %v4452, 127
      %v4565 = vpop.permute.xlu0 %4564
      %4566 = vrot.lane.b32.xlu0 %v4453, 127
      %v4567 = vpop.permute.xlu0 %4566
      %4568 = vrot.lane.b32.xlu0 %v4454, 127
      %v4569 = vpop.permute.xlu0 %4568
      %4570 = vrot.lane.b32.xlu0 %v4455, 127
      %v4571 = vpop.permute.xlu0 %4570
      %4572 = vrot.lane.b32.xlu0 %v4456, 127
      %v4573 = vpop.permute.xlu0 %4572
      %4574 = vrot.lane.b32.xlu0 %v4457, 127
      %v4575 = vpop.permute.xlu0 %4574
      %4576 = vrot.lane.b32.xlu0 %v4458, 127
      %v4577 = vpop.permute.xlu0 %4576
      %4578 = vrot.lane.b32.xlu0 %v4459, 127
      %v4579 = vpop.permute.xlu0 %4578
      %4580 = vrot.lane.b32.xlu0 %v4460, 127
      %v4581 = vpop.permute.xlu0 %4580
      %4582 = vrot.lane.b32.xlu0 %v4461, 127
      %v4583 = vpop.permute.xlu0 %4582
      %4584 = vrot.lane.b32.xlu0 %v4462, 127
      %v4585 = vpop.permute.xlu0 %4584
      %4586 = vrot.lane.b32.xlu0 %v4463, 127
      %v4587 = vpop.permute.xlu0 %4586
      %4588 = vrot.lane.b32.xlu0 %v4464, 127
      %v4589 = vpop.permute.xlu0 %4588
      %4590 = vrot.lane.b32.xlu0 %v4465, 127
      %v4591 = vpop.permute.xlu0 %4590
      %4592 = vrot.lane.b32.xlu0 %v4466, 127
      %v4593 = vpop.permute.xlu0 %4592
      %4594 = vrot.lane.b32.xlu0 %v4467, 127
      %v4595 = vpop.permute.xlu0 %4594
      %4596 = vrot.lane.b32.xlu0 %v4468, 127
      %v4597 = vpop.permute.xlu0 %4596
      %4598 = vrot.lane.b32.xlu0 %v4469, 127
      %v4599 = vpop.permute.xlu0 %4598
      %4600 = vrot.lane.b32.xlu0 %v4470, 127
      %v4601 = vpop.permute.xlu0 %4600
      %4602 = vrot.lane.b32.xlu0 %v4471, 127
      %v4603 = vpop.permute.xlu0 %4602
      %4604 = vrot.lane.b32.xlu0 %v4472, 127
      %v4605 = vpop.permute.xlu0 %4604
      %4606 = vrot.lane.b32.xlu0 %v4473, 127
      %v4607 = vpop.permute.xlu0 %4606
      %4608 = vrot.lane.b32.xlu0 %v4474, 127
      %v4609 = vpop.permute.xlu0 %4608
      %4610 = vrot.lane.b32.xlu0 %v4475, 127
      %v4611 = vpop.permute.xlu0 %4610
      %4612 = vrot.lane.b32.xlu0 %v4476, 127
      %v4613 = vpop.permute.xlu0 %4612
      %4614 = vrot.lane.b32.xlu0 %v4477, 127
      %v4615 = vpop.permute.xlu0 %4614
      %4616 = vrot.lane.b32.xlu0 %v4478, 127
      %v4617 = vpop.permute.xlu0 %4616
      %4618 = vrot.lane.b32.xlu0 %v4479, 127
      %v4619 = vpop.permute.xlu0 %4618
      %4620 = vrot.lane.b32.xlu0 %v4480, 127
      %v4621 = vpop.permute.xlu0 %4620
      %4622 = vrot.lane.b32.xlu0 %v4481, 127
      %v4623 = vpop.permute.xlu0 %4622
      %4624 = vrot.lane.b32.xlu0 %v4482, 127
      %v4625 = vpop.permute.xlu0 %4624
      %4626 = vrot.lane.b32.xlu0 %v4483, 127
      %v4627 = vpop.permute.xlu0 %4626
      %4628 = vrot.lane.b32.xlu0 %v4484, 127
      %v4629 = vpop.permute.xlu0 %4628
      %4630 = vrot.lane.b32.xlu0 %v4485, 127
      %v4631 = vpop.permute.xlu0 %4630
      %4632 = vrot.lane.b32.xlu0 %v4486, 127
      %v4633 = vpop.permute.xlu0 %4632
      %4634 = vrot.lane.b32.xlu0 %v4487, 127
      %v4635 = vpop.permute.xlu0 %4634
      %4636 = vrot.lane.b32.xlu0 %v4488, 127
      %v4637 = vpop.permute.xlu0 %4636
      %4638 = vrot.lane.b32.xlu0 %v4489, 127
      %v4639 = vpop.permute.xlu0 %4638
      %v4640 = vsel %vm392, %v4541, %v4543
      %v4641 = vsel %vm392, %v4543, %v4545
      %v4642 = vsel %vm392, %v4545, %v4547
      %v4643 = vsel %vm392, %v4547, %v4549
      %v4644 = vsel %vm392, %v4549, %v4551
      %v4645 = vsel %vm392, %v4551, %v4553
      %v4646 = vsel %vm392, %v4553, %v4555
      %v4647 = vsel %vm392, %v4555, %v4557
      %v4648 = vsel %vm392, %v4557, %v4559
      %v4649 = vsel %vm392, %v4559, %v4561
      %v4650 = vsel %vm392, %v4561, %v4563
      %v4651 = vsel %vm392, %v4563, %v4565
      %v4652 = vsel %vm392, %v4565, %v4567
      %v4653 = vsel %vm392, %v4567, %v4569
      %v4654 = vsel %vm392, %v4569, %v4571
      %v4655 = vsel %vm392, %v4571, %v4573
      %v4656 = vsel %vm392, %v4573, %v4575
      %v4657 = vsel %vm392, %v4575, %v4577
      %v4658 = vsel %vm392, %v4577, %v4579
      %v4659 = vsel %vm392, %v4579, %v4581
      %v4660 = vsel %vm392, %v4581, %v4583
      %v4661 = vsel %vm392, %v4583, %v4585
      %v4662 = vsel %vm392, %v4585, %v4587
      %v4663 = vsel %vm392, %v4587, %v4589
      %v4664 = vsel %vm392, %v4591, %v4593
      %v4665 = vsel %vm392, %v4593, %v4595
      %v4666 = vsel %vm392, %v4595, %v4597
      %v4667 = vsel %vm392, %v4597, %v4599
      %v4668 = vsel %vm392, %v4599, %v4601
      %v4669 = vsel %vm392, %v4601, %v4603
      %v4670 = vsel %vm392, %v4603, %v4605
      %v4671 = vsel %vm392, %v4605, %v4607
      %v4672 = vsel %vm392, %v4607, %v4609
      %v4673 = vsel %vm392, %v4609, %v4611
      %v4674 = vsel %vm392, %v4611, %v4613
      %v4675 = vsel %vm392, %v4613, %v4615
      %v4676 = vsel %vm392, %v4615, %v4617
      %v4677 = vsel %vm392, %v4617, %v4619
      %v4678 = vsel %vm392, %v4619, %v4621
      %v4679 = vsel %vm392, %v4621, %v4623
      %v4680 = vsel %vm392, %v4623, %v4625
      %v4681 = vsel %vm392, %v4625, %v4627
      %v4682 = vsel %vm392, %v4627, %v4629
      %v4683 = vsel %vm392, %v4629, %v4631
      %v4684 = vsel %vm392, %v4631, %v4633
      %v4685 = vsel %vm392, %v4633, %v4635
      %v4686 = vsel %vm392, %v4635, %v4637
      %v4687 = vsel %vm392, %v4637, %v4639
      %v4738 = vmax.f32 %v4440, %v4640
      %v4739 = vmax.f32 %v4441, %v4641
      %v4740 = vmax.f32 %v4442, %v4642
      %v4741 = vmax.f32 %v4443, %v4643
      %v4742 = vmax.f32 %v4444, %v4644
      %v4743 = vmax.f32 %v4445, %v4645
      %v4744 = vmax.f32 %v4446, %v4646
      %v4745 = vmax.f32 %v4447, %v4647
      %v4746 = vmax.f32 %v4448, %v4648
      %v4747 = vmax.f32 %v4449, %v4649
      %v4748 = vmax.f32 %v4450, %v4650
      %v4749 = vmax.f32 %v4451, %v4651
      %v4750 = vmax.f32 %v4452, %v4652
      %v4751 = vmax.f32 %v4453, %v4653
      %v4752 = vmax.f32 %v4454, %v4654
      %v4753 = vmax.f32 %v4455, %v4655
      %v4754 = vmax.f32 %v4456, %v4656
      %v4755 = vmax.f32 %v4457, %v4657
      %v4756 = vmax.f32 %v4458, %v4658
      %v4757 = vmax.f32 %v4459, %v4659
      %v4758 = vmax.f32 %v4460, %v4660
      %v4759 = vmax.f32 %v4461, %v4661
      %v4760 = vmax.f32 %v4462, %v4662
      %v4761 = vmax.f32 %v4463, %v4663
      %v4762 = vmax.f32 %v4464, %v4589
      %v4763 = vmax.f32 %v4465, %v4664
      %v4764 = vmax.f32 %v4466, %v4665
      %v4765 = vmax.f32 %v4467, %v4666
      %v4766 = vmax.f32 %v4468, %v4667
      %v4767 = vmax.f32 %v4469, %v4668
      %v4768 = vmax.f32 %v4470, %v4669
      %v4769 = vmax.f32 %v4471, %v4670
      %v4770 = vmax.f32 %v4472, %v4671
      %v4771 = vmax.f32 %v4473, %v4672
      %v4772 = vmax.f32 %v4474, %v4673
      %v4773 = vmax.f32 %v4475, %v4674
      %v4774 = vmax.f32 %v4476, %v4675
      %v4775 = vmax.f32 %v4477, %v4676
      %v4776 = vmax.f32 %v4478, %v4677
      %v4777 = vmax.f32 %v4479, %v4678
      %v4778 = vmax.f32 %v4480, %v4679
      %v4779 = vmax.f32 %v4481, %v4680
      %v4780 = vmax.f32 %v4482, %v4681
      %v4781 = vmax.f32 %v4483, %v4682
      %v4782 = vmax.f32 %v4484, %v4683
      %v4783 = vmax.f32 %v4485, %v4684
      %v4784 = vmax.f32 %v4486, %v4685
      %v4785 = vmax.f32 %v4487, %v4686
      %v4786 = vmax.f32 %v4488, %v4687
      %v4787 = vmax.f32 %v4489, %v4639
      %4838 = vrot.lane.b32.xlu0 %v4738, 126
      %v4839 = vpop.permute.xlu0 %4838
      %4840 = vrot.lane.b32.xlu0 %v4739, 126
      %v4841 = vpop.permute.xlu0 %4840
      %4842 = vrot.lane.b32.xlu0 %v4740, 126
      %v4843 = vpop.permute.xlu0 %4842
      %4844 = vrot.lane.b32.xlu0 %v4741, 126
      %v4845 = vpop.permute.xlu0 %4844
      %4846 = vrot.lane.b32.xlu0 %v4742, 126
      %v4847 = vpop.permute.xlu0 %4846
      %4848 = vrot.lane.b32.xlu0 %v4743, 126
      %v4849 = vpop.permute.xlu0 %4848
      %4850 = vrot.lane.b32.xlu0 %v4744, 126
      %v4851 = vpop.permute.xlu0 %4850
      %4852 = vrot.lane.b32.xlu0 %v4745, 126
      %v4853 = vpop.permute.xlu0 %4852
      %4854 = vrot.lane.b32.xlu0 %v4746, 126
      %v4855 = vpop.permute.xlu0 %4854
      %4856 = vrot.lane.b32.xlu0 %v4747, 126
      %v4857 = vpop.permute.xlu0 %4856
      %4858 = vrot.lane.b32.xlu0 %v4748, 126
      %v4859 = vpop.permute.xlu0 %4858
      %4860 = vrot.lane.b32.xlu0 %v4749, 126
      %v4861 = vpop.permute.xlu0 %4860
      %4862 = vrot.lane.b32.xlu0 %v4750, 126
      %v4863 = vpop.permute.xlu0 %4862
      %4864 = vrot.lane.b32.xlu0 %v4751, 126
      %v4865 = vpop.permute.xlu0 %4864
      %4866 = vrot.lane.b32.xlu0 %v4752, 126
      %v4867 = vpop.permute.xlu0 %4866
      %4868 = vrot.lane.b32.xlu0 %v4753, 126
      %v4869 = vpop.permute.xlu0 %4868
      %4870 = vrot.lane.b32.xlu0 %v4754, 126
      %v4871 = vpop.permute.xlu0 %4870
      %4872 = vrot.lane.b32.xlu0 %v4755, 126
      %v4873 = vpop.permute.xlu0 %4872
      %4874 = vrot.lane.b32.xlu0 %v4756, 126
      %v4875 = vpop.permute.xlu0 %4874
      %4876 = vrot.lane.b32.xlu0 %v4757, 126
      %v4877 = vpop.permute.xlu0 %4876
      %4878 = vrot.lane.b32.xlu0 %v4758, 126
      %v4879 = vpop.permute.xlu0 %4878
      %4880 = vrot.lane.b32.xlu0 %v4759, 126
      %v4881 = vpop.permute.xlu0 %4880
      %4882 = vrot.lane.b32.xlu0 %v4760, 126
      %v4883 = vpop.permute.xlu0 %4882
      %4884 = vrot.lane.b32.xlu0 %v4761, 126
      %v4885 = vpop.permute.xlu0 %4884
      %4886 = vrot.lane.b32.xlu0 %v4762, 126
      %v4887 = vpop.permute.xlu0 %4886
      %4888 = vrot.lane.b32.xlu0 %v4763, 126
      %v4889 = vpop.permute.xlu0 %4888
      %4890 = vrot.lane.b32.xlu0 %v4764, 126
      %v4891 = vpop.permute.xlu0 %4890
      %4892 = vrot.lane.b32.xlu0 %v4765, 126
      %v4893 = vpop.permute.xlu0 %4892
      %4894 = vrot.lane.b32.xlu0 %v4766, 126
      %v4895 = vpop.permute.xlu0 %4894
      %4896 = vrot.lane.b32.xlu0 %v4767, 126
      %v4897 = vpop.permute.xlu0 %4896
      %4898 = vrot.lane.b32.xlu0 %v4768, 126
      %v4899 = vpop.permute.xlu0 %4898
      %4900 = vrot.lane.b32.xlu0 %v4769, 126
      %v4901 = vpop.permute.xlu0 %4900
      %4902 = vrot.lane.b32.xlu0 %v4770, 126
      %v4903 = vpop.permute.xlu0 %4902
      %4904 = vrot.lane.b32.xlu0 %v4771, 126
      %v4905 = vpop.permute.xlu0 %4904
      %4906 = vrot.lane.b32.xlu0 %v4772, 126
      %v4907 = vpop.permute.xlu0 %4906
      %4908 = vrot.lane.b32.xlu0 %v4773, 126
      %v4909 = vpop.permute.xlu0 %4908
      %4910 = vrot.lane.b32.xlu0 %v4774, 126
      %v4911 = vpop.permute.xlu0 %4910
      %4912 = vrot.lane.b32.xlu0 %v4775, 126
      %v4913 = vpop.permute.xlu0 %4912
      %4914 = vrot.lane.b32.xlu0 %v4776, 126
      %v4915 = vpop.permute.xlu0 %4914
      %4916 = vrot.lane.b32.xlu0 %v4777, 126
      %v4917 = vpop.permute.xlu0 %4916
      %4918 = vrot.lane.b32.xlu0 %v4778, 126
      %v4919 = vpop.permute.xlu0 %4918
      %4920 = vrot.lane.b32.xlu0 %v4779, 126
      %v4921 = vpop.permute.xlu0 %4920
      %4922 = vrot.lane.b32.xlu0 %v4780, 126
      %v4923 = vpop.permute.xlu0 %4922
      %4924 = vrot.lane.b32.xlu0 %v4781, 126
      %v4925 = vpop.permute.xlu0 %4924
      %4926 = vrot.lane.b32.xlu0 %v4782, 126
      %v4927 = vpop.permute.xlu0 %4926
      %4928 = vrot.lane.b32.xlu0 %v4783, 126
      %v4929 = vpop.permute.xlu0 %4928
      %4930 = vrot.lane.b32.xlu0 %v4784, 126
      %v4931 = vpop.permute.xlu0 %4930
      %4932 = vrot.lane.b32.xlu0 %v4785, 126
      %v4933 = vpop.permute.xlu0 %4932
      %4934 = vrot.lane.b32.xlu0 %v4786, 126
      %v4935 = vpop.permute.xlu0 %4934
      %4936 = vrot.lane.b32.xlu0 %v4787, 126
      %v4937 = vpop.permute.xlu0 %4936
      %v4938 = vsel %vm615, %v4839, %v4841
      %v4939 = vsel %vm615, %v4841, %v4843
      %v4940 = vsel %vm615, %v4843, %v4845
      %v4941 = vsel %vm615, %v4845, %v4847
      %v4942 = vsel %vm615, %v4847, %v4849
      %v4943 = vsel %vm615, %v4849, %v4851
      %v4944 = vsel %vm615, %v4851, %v4853
      %v4945 = vsel %vm615, %v4853, %v4855
      %v4946 = vsel %vm615, %v4855, %v4857
      %v4947 = vsel %vm615, %v4857, %v4859
      %v4948 = vsel %vm615, %v4859, %v4861
      %v4949 = vsel %vm615, %v4861, %v4863
      %v4950 = vsel %vm615, %v4863, %v4865
      %v4951 = vsel %vm615, %v4865, %v4867
      %v4952 = vsel %vm615, %v4867, %v4869
      %v4953 = vsel %vm615, %v4869, %v4871
      %v4954 = vsel %vm615, %v4871, %v4873
      %v4955 = vsel %vm615, %v4873, %v4875
      %v4956 = vsel %vm615, %v4875, %v4877
      %v4957 = vsel %vm615, %v4877, %v4879
      %v4958 = vsel %vm615, %v4879, %v4881
      %v4959 = vsel %vm615, %v4881, %v4883
      %v4960 = vsel %vm615, %v4883, %v4885
      %v4961 = vsel %vm615, %v4885, %v4887
      %v4962 = vsel %vm615, %v4889, %v4891
      %v4963 = vsel %vm615, %v4891, %v4893
      %v4964 = vsel %vm615, %v4893, %v4895
      %v4965 = vsel %vm615, %v4895, %v4897
      %v4966 = vsel %vm615, %v4897, %v4899
      %v4967 = vsel %vm615, %v4899, %v4901
      %v4968 = vsel %vm615, %v4901, %v4903
      %v4969 = vsel %vm615, %v4903, %v4905
      %v4970 = vsel %vm615, %v4905, %v4907
      %v4971 = vsel %vm615, %v4907, %v4909
      %v4972 = vsel %vm615, %v4909, %v4911
      %v4973 = vsel %vm615, %v4911, %v4913
      %v4974 = vsel %vm615, %v4913, %v4915
      %v4975 = vsel %vm615, %v4915, %v4917
      %v4976 = vsel %vm615, %v4917, %v4919
      %v4977 = vsel %vm615, %v4919, %v4921
      %v4978 = vsel %vm615, %v4921, %v4923
      %v4979 = vsel %vm615, %v4923, %v4925
      %v4980 = vsel %vm615, %v4925, %v4927
      %v4981 = vsel %vm615, %v4927, %v4929
      %v4982 = vsel %vm615, %v4929, %v4931
      %v4983 = vsel %vm615, %v4931, %v4933
      %v4984 = vsel %vm615, %v4933, %v4935
      %v4985 = vsel %vm615, %v4935, %v4937
      %v5036 = vmax.f32 %v4738, %v4938
      %v5037 = vmax.f32 %v4739, %v4939
      %v5038 = vmax.f32 %v4740, %v4940
      %v5039 = vmax.f32 %v4741, %v4941
      %v5040 = vmax.f32 %v4742, %v4942
      %v5041 = vmax.f32 %v4743, %v4943
      %v5042 = vmax.f32 %v4744, %v4944
      %v5043 = vmax.f32 %v4745, %v4945
      %v5044 = vmax.f32 %v4746, %v4946
      %v5045 = vmax.f32 %v4747, %v4947
      %v5046 = vmax.f32 %v4748, %v4948
      %v5047 = vmax.f32 %v4749, %v4949
      %v5048 = vmax.f32 %v4750, %v4950
      %v5049 = vmax.f32 %v4751, %v4951
      %v5050 = vmax.f32 %v4752, %v4952
      %v5051 = vmax.f32 %v4753, %v4953
      %v5052 = vmax.f32 %v4754, %v4954
      %v5053 = vmax.f32 %v4755, %v4955
      %v5054 = vmax.f32 %v4756, %v4956
      %v5055 = vmax.f32 %v4757, %v4957
      %v5056 = vmax.f32 %v4758, %v4958
      %v5057 = vmax.f32 %v4759, %v4959
      %v5058 = vmax.f32 %v4760, %v4960
      %v5059 = vmax.f32 %v4761, %v4961
      %v5060 = vmax.f32 %v4762, %v4887
      %v5061 = vmax.f32 %v4763, %v4962
      %v5062 = vmax.f32 %v4764, %v4963
      %v5063 = vmax.f32 %v4765, %v4964
      %v5064 = vmax.f32 %v4766, %v4965
      %v5065 = vmax.f32 %v4767, %v4966
      %v5066 = vmax.f32 %v4768, %v4967
      %v5067 = vmax.f32 %v4769, %v4968
      %v5068 = vmax.f32 %v4770, %v4969
      %v5069 = vmax.f32 %v4771, %v4970
      %v5070 = vmax.f32 %v4772, %v4971
      %v5071 = vmax.f32 %v4773, %v4972
      %v5072 = vmax.f32 %v4774, %v4973
      %v5073 = vmax.f32 %v4775, %v4974
      %v5074 = vmax.f32 %v4776, %v4975
      %v5075 = vmax.f32 %v4777, %v4976
      %v5076 = vmax.f32 %v4778, %v4977
      %v5077 = vmax.f32 %v4779, %v4978
      %v5078 = vmax.f32 %v4780, %v4979
      %v5079 = vmax.f32 %v4781, %v4980
      %v5080 = vmax.f32 %v4782, %v4981
      %v5081 = vmax.f32 %v4783, %v4982
      %v5082 = vmax.f32 %v4784, %v4983
      %v5083 = vmax.f32 %v4785, %v4984
      %v5084 = vmax.f32 %v4786, %v4985
      %v5085 = vmax.f32 %v4787, %v4937
      %5136 = vrot.lane.b32.xlu0 %v5036, 112
      %v5137 = vpop.permute.xlu0 %5136
      %5138 = vrot.lane.b32.xlu0 %v5037, 112
      %v5139 = vpop.permute.xlu0 %5138
      %5140 = vrot.lane.b32.xlu0 %v5038, 112
      %v5141 = vpop.permute.xlu0 %5140
      %5142 = vrot.lane.b32.xlu0 %v5039, 112
      %v5143 = vpop.permute.xlu0 %5142
      %5144 = vrot.lane.b32.xlu0 %v5040, 112
      %v5145 = vpop.permute.xlu0 %5144
      %5146 = vrot.lane.b32.xlu0 %v5041, 112
      %v5147 = vpop.permute.xlu0 %5146
      %5148 = vrot.lane.b32.xlu0 %v5042, 112
      %v5149 = vpop.permute.xlu0 %5148
      %5150 = vrot.lane.b32.xlu0 %v5043, 112
      %v5151 = vpop.permute.xlu0 %5150
      %5152 = vrot.lane.b32.xlu0 %v5044, 112
      %v5153 = vpop.permute.xlu0 %5152
      %5154 = vrot.lane.b32.xlu0 %v5045, 112
      %v5155 = vpop.permute.xlu0 %5154
      %5156 = vrot.lane.b32.xlu0 %v5046, 112
      %v5157 = vpop.permute.xlu0 %5156
      %5158 = vrot.lane.b32.xlu0 %v5047, 112
      %v5159 = vpop.permute.xlu0 %5158
      %5160 = vrot.lane.b32.xlu0 %v5048, 112
      %v5161 = vpop.permute.xlu0 %5160
      %5162 = vrot.lane.b32.xlu0 %v5049, 112
      %v5163 = vpop.permute.xlu0 %5162
      %5164 = vrot.lane.b32.xlu0 %v5050, 112
      %v5165 = vpop.permute.xlu0 %5164
      %5166 = vrot.lane.b32.xlu0 %v5051, 112
      %v5167 = vpop.permute.xlu0 %5166
      %5168 = vrot.lane.b32.xlu0 %v5052, 112
      %v5169 = vpop.permute.xlu0 %5168
      %5170 = vrot.lane.b32.xlu0 %v5053, 112
      %v5171 = vpop.permute.xlu0 %5170
      %5172 = vrot.lane.b32.xlu0 %v5054, 112
      %v5173 = vpop.permute.xlu0 %5172
      %5174 = vrot.lane.b32.xlu0 %v5055, 112
      %v5175 = vpop.permute.xlu0 %5174
      %5176 = vrot.lane.b32.xlu0 %v5056, 112
      %v5177 = vpop.permute.xlu0 %5176
      %5178 = vrot.lane.b32.xlu0 %v5057, 112
      %v5179 = vpop.permute.xlu0 %5178
      %5180 = vrot.lane.b32.xlu0 %v5058, 112
      %v5181 = vpop.permute.xlu0 %5180
      %5182 = vrot.lane.b32.xlu0 %v5059, 112
      %v5183 = vpop.permute.xlu0 %5182
      %5184 = vrot.lane.b32.xlu0 %v5060, 112
      %v5185 = vpop.permute.xlu0 %5184
      %5186 = vrot.lane.b32.xlu0 %v5061, 112
      %v5187 = vpop.permute.xlu0 %5186
      %5188 = vrot.lane.b32.xlu0 %v5062, 112
      %v5189 = vpop.permute.xlu0 %5188
      %5190 = vrot.lane.b32.xlu0 %v5063, 112
      %v5191 = vpop.permute.xlu0 %5190
      %5192 = vrot.lane.b32.xlu0 %v5064, 112
      %v5193 = vpop.permute.xlu0 %5192
      %5194 = vrot.lane.b32.xlu0 %v5065, 112
      %v5195 = vpop.permute.xlu0 %5194
      %5196 = vrot.lane.b32.xlu0 %v5066, 112
      %v5197 = vpop.permute.xlu0 %5196
      %5198 = vrot.lane.b32.xlu0 %v5067, 112
      %v5199 = vpop.permute.xlu0 %5198
      %5200 = vrot.lane.b32.xlu0 %v5068, 112
      %v5201 = vpop.permute.xlu0 %5200
      %5202 = vrot.lane.b32.xlu0 %v5069, 112
      %v5203 = vpop.permute.xlu0 %5202
      %5204 = vrot.lane.b32.xlu0 %v5070, 112
      %v5205 = vpop.permute.xlu0 %5204
      %5206 = vrot.lane.b32.xlu0 %v5071, 112
      %v5207 = vpop.permute.xlu0 %5206
      %5208 = vrot.lane.b32.xlu0 %v5072, 112
      %v5209 = vpop.permute.xlu0 %5208
      %5210 = vrot.lane.b32.xlu0 %v5073, 112
      %v5211 = vpop.permute.xlu0 %5210
      %5212 = vrot.lane.b32.xlu0 %v5074, 112
      %v5213 = vpop.permute.xlu0 %5212
      %5214 = vrot.lane.b32.xlu0 %v5075, 112
      %v5215 = vpop.permute.xlu0 %5214
      %5216 = vrot.lane.b32.xlu0 %v5076, 112
      %v5217 = vpop.permute.xlu0 %5216
      %5218 = vrot.lane.b32.xlu0 %v5077, 112
      %v5219 = vpop.permute.xlu0 %5218
      %5220 = vrot.lane.b32.xlu0 %v5078, 112
      %v5221 = vpop.permute.xlu0 %5220
      %5222 = vrot.lane.b32.xlu0 %v5079, 112
      %v5223 = vpop.permute.xlu0 %5222
      %5224 = vrot.lane.b32.xlu0 %v5080, 112
      %v5225 = vpop.permute.xlu0 %5224
      %5226 = vrot.lane.b32.xlu0 %v5081, 112
      %v5227 = vpop.permute.xlu0 %5226
      %5228 = vrot.lane.b32.xlu0 %v5082, 112
      %v5229 = vpop.permute.xlu0 %5228
      %5230 = vrot.lane.b32.xlu0 %v5083, 112
      %v5231 = vpop.permute.xlu0 %5230
      %5232 = vrot.lane.b32.xlu0 %v5084, 112
      %v5233 = vpop.permute.xlu0 %5232
      %5234 = vrot.lane.b32.xlu0 %v5085, 112
      %v5235 = vpop.permute.xlu0 %5234
      %v5236 = vsel %vm867, %v5137, %v5139
      %v5237 = vsel %vm867, %v5139, %v5141
      %v5238 = vsel %vm867, %v5141, %v5143
      %v5239 = vsel %vm867, %v5143, %v5145
      %v5240 = vsel %vm867, %v5145, %v5147
      %v5241 = vsel %vm867, %v5147, %v5149
      %v5242 = vsel %vm867, %v5149, %v5151
      %v5243 = vsel %vm867, %v5151, %v5153
      %v5244 = vsel %vm867, %v5153, %v5155
      %v5245 = vsel %vm867, %v5155, %v5157
      %v5246 = vsel %vm867, %v5157, %v5159
      %v5247 = vsel %vm867, %v5159, %v5161
      %v5248 = vsel %vm867, %v5161, %v5163
      %v5249 = vsel %vm867, %v5163, %v5165
      %v5250 = vsel %vm867, %v5165, %v5167
      %v5251 = vsel %vm867, %v5167, %v5169
      %v5252 = vsel %vm867, %v5169, %v5171
      %v5253 = vsel %vm867, %v5171, %v5173
      %v5254 = vsel %vm867, %v5173, %v5175
      %v5255 = vsel %vm867, %v5175, %v5177
      %v5256 = vsel %vm867, %v5177, %v5179
      %v5257 = vsel %vm867, %v5179, %v5181
      %v5258 = vsel %vm867, %v5181, %v5183
      %v5259 = vsel %vm867, %v5183, %v5185
      %v5260 = vsel %vm867, %v5187, %v5189
      %v5261 = vsel %vm867, %v5189, %v5191
      %v5262 = vsel %vm867, %v5191, %v5193
      %v5263 = vsel %vm867, %v5193, %v5195
      %v5264 = vsel %vm867, %v5195, %v5197
      %v5265 = vsel %vm867, %v5197, %v5199
      %v5266 = vsel %vm867, %v5199, %v5201
      %v5267 = vsel %vm867, %v5201, %v5203
      %v5268 = vsel %vm867, %v5203, %v5205
      %v5269 = vsel %vm867, %v5205, %v5207
      %v5270 = vsel %vm867, %v5207, %v5209
      %v5271 = vsel %vm867, %v5209, %v5211
      %v5272 = vsel %vm867, %v5211, %v5213
      %v5273 = vsel %vm867, %v5213, %v5215
      %v5274 = vsel %vm867, %v5215, %v5217
      %v5275 = vsel %vm867, %v5217, %v5219
      %v5276 = vsel %vm867, %v5219, %v5221
      %v5277 = vsel %vm867, %v5221, %v5223
      %v5278 = vsel %vm867, %v5223, %v5225
      %v5279 = vsel %vm867, %v5225, %v5227
      %v5280 = vsel %vm867, %v5227, %v5229
      %v5281 = vsel %vm867, %v5229, %v5231
      %v5282 = vsel %vm867, %v5231, %v5233
      %v5283 = vsel %vm867, %v5233, %v5235
      %v5334 = vmax.f32 %v5036, %v5236
      %v5335 = vmax.f32 %v5037, %v5237
      %v5336 = vmax.f32 %v5038, %v5238
      %v5337 = vmax.f32 %v5039, %v5239
      %v5338 = vmax.f32 %v5040, %v5240
      %v5339 = vmax.f32 %v5041, %v5241
      %v5340 = vmax.f32 %v5042, %v5242
      %v5341 = vmax.f32 %v5043, %v5243
      %v5342 = vmax.f32 %v5044, %v5244
      %v5343 = vmax.f32 %v5045, %v5245
      %v5344 = vmax.f32 %v5046, %v5246
      %v5345 = vmax.f32 %v5047, %v5247
      %v5346 = vmax.f32 %v5048, %v5248
      %v5347 = vmax.f32 %v5049, %v5249
      %v5348 = vmax.f32 %v5050, %v5250
      %v5349 = vmax.f32 %v5051, %v5251
      %v5350 = vmax.f32 %v5052, %v5252
      %v5351 = vmax.f32 %v5053, %v5253
      %v5352 = vmax.f32 %v5054, %v5254
      %v5353 = vmax.f32 %v5055, %v5255
      %v5354 = vmax.f32 %v5056, %v5256
      %v5355 = vmax.f32 %v5057, %v5257
      %v5356 = vmax.f32 %v5058, %v5258
      %v5357 = vmax.f32 %v5059, %v5259
      %v5358 = vmax.f32 %v5060, %v5185
      %v5359 = vmax.f32 %v5061, %v5260
      %v5360 = vmax.f32 %v5062, %v5261
      %v5361 = vmax.f32 %v5063, %v5262
      %v5362 = vmax.f32 %v5064, %v5263
      %v5363 = vmax.f32 %v5065, %v5264
      %v5364 = vmax.f32 %v5066, %v5265
      %v5365 = vmax.f32 %v5067, %v5266
      %v5366 = vmax.f32 %v5068, %v5267
      %v5367 = vmax.f32 %v5069, %v5268
      %v5368 = vmax.f32 %v5070, %v5269
      %v5369 = vmax.f32 %v5071, %v5270
      %v5370 = vmax.f32 %v5072, %v5271
      %v5371 = vmax.f32 %v5073, %v5272
      %v5372 = vmax.f32 %v5074, %v5273
      %v5373 = vmax.f32 %v5075, %v5274
      %v5374 = vmax.f32 %v5076, %v5275
      %v5375 = vmax.f32 %v5077, %v5276
      %v5376 = vmax.f32 %v5078, %v5277
      %v5377 = vmax.f32 %v5079, %v5278
      %v5378 = vmax.f32 %v5080, %v5279
      %v5379 = vmax.f32 %v5081, %v5280
      %v5380 = vmax.f32 %v5082, %v5281
      %v5381 = vmax.f32 %v5083, %v5282
      %v5382 = vmax.f32 %v5084, %v5283
      %v5383 = vmax.f32 %v5085, %v5235
      %5434 = vrot.lane.b32.xlu0 %v5334, 96
      %v5435 = vpop.permute.xlu0 %5434
      %5436 = vrot.lane.b32.xlu0 %v5335, 96
      %v5437 = vpop.permute.xlu0 %5436
      %5438 = vrot.lane.b32.xlu0 %v5336, 96
      %v5439 = vpop.permute.xlu0 %5438
      %5440 = vrot.lane.b32.xlu0 %v5337, 96
      %v5441 = vpop.permute.xlu0 %5440
      %5442 = vrot.lane.b32.xlu0 %v5338, 96
      %v5443 = vpop.permute.xlu0 %5442
      %5444 = vrot.lane.b32.xlu0 %v5339, 96
      %v5445 = vpop.permute.xlu0 %5444
      %5446 = vrot.lane.b32.xlu0 %v5340, 96
      %v5447 = vpop.permute.xlu0 %5446
      %5448 = vrot.lane.b32.xlu0 %v5341, 96
      %v5449 = vpop.permute.xlu0 %5448
      %5450 = vrot.lane.b32.xlu0 %v5342, 96
      %v5451 = vpop.permute.xlu0 %5450
      %5452 = vrot.lane.b32.xlu0 %v5343, 96
      %v5453 = vpop.permute.xlu0 %5452
      %5454 = vrot.lane.b32.xlu0 %v5344, 96
      %v5455 = vpop.permute.xlu0 %5454
      %5456 = vrot.lane.b32.xlu0 %v5345, 96
      %v5457 = vpop.permute.xlu0 %5456
      %5458 = vrot.lane.b32.xlu0 %v5346, 96
      %v5459 = vpop.permute.xlu0 %5458
      %5460 = vrot.lane.b32.xlu0 %v5347, 96
      %v5461 = vpop.permute.xlu0 %5460
      %5462 = vrot.lane.b32.xlu0 %v5348, 96
      %v5463 = vpop.permute.xlu0 %5462
      %5464 = vrot.lane.b32.xlu0 %v5349, 96
      %v5465 = vpop.permute.xlu0 %5464
      %5466 = vrot.lane.b32.xlu0 %v5350, 96
      %v5467 = vpop.permute.xlu0 %5466
      %5468 = vrot.lane.b32.xlu0 %v5351, 96
      %v5469 = vpop.permute.xlu0 %5468
      %5470 = vrot.lane.b32.xlu0 %v5352, 96
      %v5471 = vpop.permute.xlu0 %5470
      %5472 = vrot.lane.b32.xlu0 %v5353, 96
      %v5473 = vpop.permute.xlu0 %5472
      %5474 = vrot.lane.b32.xlu0 %v5354, 96
      %v5475 = vpop.permute.xlu0 %5474
      %5476 = vrot.lane.b32.xlu0 %v5355, 96
      %v5477 = vpop.permute.xlu0 %5476
      %5478 = vrot.lane.b32.xlu0 %v5356, 96
      %v5479 = vpop.permute.xlu0 %5478
      %5480 = vrot.lane.b32.xlu0 %v5357, 96
      %v5481 = vpop.permute.xlu0 %5480
      %5482 = vrot.lane.b32.xlu0 %v5358, 96
      %v5483 = vpop.permute.xlu0 %5482
      %5484 = vrot.lane.b32.xlu0 %v5359, 96
      %v5485 = vpop.permute.xlu0 %5484
      %5486 = vrot.lane.b32.xlu0 %v5360, 96
      %v5487 = vpop.permute.xlu0 %5486
      %5488 = vrot.lane.b32.xlu0 %v5361, 96
      %v5489 = vpop.permute.xlu0 %5488
      %5490 = vrot.lane.b32.xlu0 %v5362, 96
      %v5491 = vpop.permute.xlu0 %5490
      %5492 = vrot.lane.b32.xlu0 %v5363, 96
      %v5493 = vpop.permute.xlu0 %5492
      %5494 = vrot.lane.b32.xlu0 %v5364, 96
      %v5495 = vpop.permute.xlu0 %5494
      %5496 = vrot.lane.b32.xlu0 %v5365, 96
      %v5497 = vpop.permute.xlu0 %5496
      %5498 = vrot.lane.b32.xlu0 %v5366, 96
      %v5499 = vpop.permute.xlu0 %5498
      %5500 = vrot.lane.b32.xlu0 %v5367, 96
      %v5501 = vpop.permute.xlu0 %5500
      %5502 = vrot.lane.b32.xlu0 %v5368, 96
      %v5503 = vpop.permute.xlu0 %5502
      %5504 = vrot.lane.b32.xlu0 %v5369, 96
      %v5505 = vpop.permute.xlu0 %5504
      %5506 = vrot.lane.b32.xlu0 %v5370, 96
      %v5507 = vpop.permute.xlu0 %5506
      %5508 = vrot.lane.b32.xlu0 %v5371, 96
      %v5509 = vpop.permute.xlu0 %5508
      %5510 = vrot.lane.b32.xlu0 %v5372, 96
      %v5511 = vpop.permute.xlu0 %5510
      %5512 = vrot.lane.b32.xlu0 %v5373, 96
      %v5513 = vpop.permute.xlu0 %5512
      %5514 = vrot.lane.b32.xlu0 %v5374, 96
      %v5515 = vpop.permute.xlu0 %5514
      %5516 = vrot.lane.b32.xlu0 %v5375, 96
      %v5517 = vpop.permute.xlu0 %5516
      %5518 = vrot.lane.b32.xlu0 %v5376, 96
      %v5519 = vpop.permute.xlu0 %5518
      %5520 = vrot.lane.b32.xlu0 %v5377, 96
      %v5521 = vpop.permute.xlu0 %5520
      %5522 = vrot.lane.b32.xlu0 %v5378, 96
      %v5523 = vpop.permute.xlu0 %5522
      %5524 = vrot.lane.b32.xlu0 %v5379, 96
      %v5525 = vpop.permute.xlu0 %5524
      %5526 = vrot.lane.b32.xlu0 %v5380, 96
      %v5527 = vpop.permute.xlu0 %5526
      %5528 = vrot.lane.b32.xlu0 %v5381, 96
      %v5529 = vpop.permute.xlu0 %5528
      %5530 = vrot.lane.b32.xlu0 %v5382, 96
      %v5531 = vpop.permute.xlu0 %5530
      %5532 = vrot.lane.b32.xlu0 %v5383, 96
      %v5533 = vpop.permute.xlu0 %5532
      %v5534 = vsel %vm1535, %v5435, %v5437
      %v5535 = vsel %vm1535, %v5437, %v5439
      %v5536 = vsel %vm1535, %v5439, %v5441
      %v5537 = vsel %vm1535, %v5441, %v5443
      %v5538 = vsel %vm1535, %v5443, %v5445
      %v5539 = vsel %vm1535, %v5445, %v5447
      %v5540 = vsel %vm1535, %v5447, %v5449
      %v5541 = vsel %vm1535, %v5449, %v5451
      %v5542 = vsel %vm1535, %v5451, %v5453
      %v5543 = vsel %vm1535, %v5453, %v5455
      %v5544 = vsel %vm1535, %v5455, %v5457
      %v5545 = vsel %vm1535, %v5457, %v5459
      %v5546 = vsel %vm1535, %v5459, %v5461
      %v5547 = vsel %vm1535, %v5461, %v5463
      %v5548 = vsel %vm1535, %v5463, %v5465
      %v5549 = vsel %vm1535, %v5465, %v5467
      %v5550 = vsel %vm1535, %v5467, %v5469
      %v5551 = vsel %vm1535, %v5469, %v5471
      %v5552 = vsel %vm1535, %v5471, %v5473
      %v5553 = vsel %vm1535, %v5473, %v5475
      %v5554 = vsel %vm1535, %v5475, %v5477
      %v5555 = vsel %vm1535, %v5477, %v5479
      %v5556 = vsel %vm1535, %v5479, %v5481
      %v5557 = vsel %vm1535, %v5481, %v5483
      %v5558 = vsel %vm1535, %v5485, %v5487
      %v5559 = vsel %vm1535, %v5487, %v5489
      %v5560 = vsel %vm1535, %v5489, %v5491
      %v5561 = vsel %vm1535, %v5491, %v5493
      %v5562 = vsel %vm1535, %v5493, %v5495
      %v5563 = vsel %vm1535, %v5495, %v5497
      %v5564 = vsel %vm1535, %v5497, %v5499
      %v5565 = vsel %vm1535, %v5499, %v5501
      %v5566 = vsel %vm1535, %v5501, %v5503
      %v5567 = vsel %vm1535, %v5503, %v5505
      %v5568 = vsel %vm1535, %v5505, %v5507
      %v5569 = vsel %vm1535, %v5507, %v5509
      %v5570 = vsel %vm1535, %v5509, %v5511
      %v5571 = vsel %vm1535, %v5511, %v5513
      %v5572 = vsel %vm1535, %v5513, %v5515
      %v5573 = vsel %vm1535, %v5515, %v5517
      %v5574 = vsel %vm1535, %v5517, %v5519
      %v5575 = vsel %vm1535, %v5519, %v5521
      %v5576 = vsel %vm1535, %v5521, %v5523
      %v5577 = vsel %vm1535, %v5523, %v5525
      %v5578 = vsel %vm1535, %v5525, %v5527
      %v5579 = vsel %vm1535, %v5527, %v5529
      %v5580 = vsel %vm1535, %v5529, %v5531
      %v5581 = vsel %vm1535, %v5531, %v5533
      %v5630 = vmax.f32 %v5334, %v5534
      %v5631 = vmax.f32 %v5335, %v5535
      %v5632 = vmax.f32 %v5336, %v5536
      %v5633 = vmax.f32 %v5337, %v5537
      %v5634 = vmax.f32 %v5338, %v5538
      %v5635 = vmax.f32 %v5339, %v5539
      %v5636 = vmax.f32 %v5340, %v5540
      %v5637 = vmax.f32 %v5341, %v5541
      %v5638 = vmax.f32 %v5342, %v5542
      %v5639 = vmax.f32 %v5343, %v5543
      %v5640 = vmax.f32 %v5344, %v5544
      %v5641 = vmax.f32 %v5345, %v5545
      %v5642 = vmax.f32 %v5346, %v5546
      %v5643 = vmax.f32 %v5347, %v5547
      %v5644 = vmax.f32 %v5348, %v5548
      %v5645 = vmax.f32 %v5349, %v5549
      %v5646 = vmax.f32 %v5350, %v5550
      %v5647 = vmax.f32 %v5351, %v5551
      %v5648 = vmax.f32 %v5352, %v5552
      %v5649 = vmax.f32 %v5353, %v5553
      %v5650 = vmax.f32 %v5354, %v5554
      %v5651 = vmax.f32 %v5355, %v5555
      %v5652 = vmax.f32 %v5356, %v5556
      %v5653 = vmax.f32 %v5357, %v5557
      %v5654 = vmax.f32 %v5359, %v5558
      %v5655 = vmax.f32 %v5360, %v5559
      %v5656 = vmax.f32 %v5361, %v5560
      %v5657 = vmax.f32 %v5362, %v5561
      %v5658 = vmax.f32 %v5363, %v5562
      %v5659 = vmax.f32 %v5364, %v5563
      %v5660 = vmax.f32 %v5365, %v5564
      %v5661 = vmax.f32 %v5366, %v5565
      %v5662 = vmax.f32 %v5367, %v5566
      %v5663 = vmax.f32 %v5368, %v5567
      %v5664 = vmax.f32 %v5369, %v5568
      %v5665 = vmax.f32 %v5370, %v5569
      %v5666 = vmax.f32 %v5371, %v5570
      %v5667 = vmax.f32 %v5372, %v5571
      %v5668 = vmax.f32 %v5373, %v5572
      %v5669 = vmax.f32 %v5374, %v5573
      %v5670 = vmax.f32 %v5375, %v5574
      %v5671 = vmax.f32 %v5376, %v5575
      %v5672 = vmax.f32 %v5377, %v5576
      %v5673 = vmax.f32 %v5378, %v5577
      %v5674 = vmax.f32 %v5379, %v5578
      %v5675 = vmax.f32 %v5380, %v5579
      %v5676 = vmax.f32 %v5381, %v5580
      %v5677 = vmax.f32 %v5382, %v5581
      %v5678 = vmax.f32 %v5630, %v5632
      %v5679 = vmax.f32 %v5631, %v5633
      %v5680 = vmax.f32 %v5654, %v5656
      %v5681 = vmax.f32 %v5655, %v5657
      %v5682 = vmax.f32 %v5678, %v5634
      %v5683 = vmax.f32 %v5679, %v5635
      %v5684 = vmax.f32 %v5680, %v5658
      %v5685 = vmax.f32 %v5681, %v5659
      %v5686 = vmax.f32 %v5682, %v5636
      %v5687 = vmax.f32 %v5683, %v5637
      %v5688 = vmax.f32 %v5684, %v5660
      %v5689 = vmax.f32 %v5685, %v5661
      %5690 = vst [vmem:[%s170] sm:$0xff] %v5686
      %5691 = vst [vmem:[%s170 + $0x8] sm:$0xff] %v5687
      %5692 = vst [vmem:[%s170 + $0x10] sm:$0xff] %v5688
      %5693 = vst [vmem:[%s170 + $0x18] sm:$0xff] %v5689
      %v5694 = vmax.f32 %v5638, %v5640
      %v5695 = vmax.f32 %v5639, %v5641
      %v5696 = vmax.f32 %v5662, %v5664
      %v5697 = vmax.f32 %v5663, %v5665
      %v5698 = vmax.f32 %v5694, %v5642
      %v5699 = vmax.f32 %v5695, %v5643
      %v5700 = vmax.f32 %v5696, %v5666
      %v5701 = vmax.f32 %v5697, %v5667
      %v5702 = vmax.f32 %v5698, %v5644
      %v5703 = vmax.f32 %v5699, %v5645
      %v5704 = vmax.f32 %v5700, %v5668
      %v5705 = vmax.f32 %v5701, %v5669
      %s5706 = scalar_lea.vmem %s170, 32
      %5707 = vst [vmem:[%s5706] sm:$0xff] %v5702
      %5708 = vst [vmem:[%s5706 + $0x8] sm:$0xff] %v5703
      %5709 = vst [vmem:[%s5706 + $0x10] sm:$0xff] %v5704
      %5710 = vst [vmem:[%s5706 + $0x18] sm:$0xff] %v5705
      %v5711 = vmax.f32 %v5646, %v5648
      %v5712 = vmax.f32 %v5647, %v5649
      %v5713 = vmax.f32 %v5670, %v5672
      %v5714 = vmax.f32 %v5671, %v5673
      %v5715 = vmax.f32 %v5711, %v5650
      %v5716 = vmax.f32 %v5712, %v5651
      %v5717 = vmax.f32 %v5713, %v5674
      %v5718 = vmax.f32 %v5714, %v5675
      %v5719 = vmax.f32 %v5715, %v5652
      %v5720 = vmax.f32 %v5716, %v5653
      %v5721 = vmax.f32 %v5717, %v5676
      %v5722 = vmax.f32 %v5718, %v5677
      %s5723 = scalar_lea.vmem %s170, 64
      %5724 = vst [vmem:[%s5723] sm:$0xff] %v5719
      %5725 = vst [vmem:[%s5723 + $0x8] sm:$0xff] %v5720
      %5726 = vst [vmem:[%s5723 + $0x10] sm:$0xff] %v5721
      %5727 = vst [vmem:[%s5723 + $0x18] sm:$0xff] %v5722
      %p5728 = scmp.lt.s32.totalorder %s14, 1
      %s5729 = scalar_select %p5728, %s14, 1
      %s5730 = smul.addr %s5729, 12
      %s5731 = smul.addr %s5730, 8
      %s5732 = scalar_lea.vmem %s3, %s5731
      // Predicated region
      $region33: #{conv3d_softmax_maxpool2.1} parent=31 // pred_check
        %p5733 = pneg %p100
      $region34: #{conv3d_softmax_maxpool2.1} parent=31 // pred_check_branch
        %5735 = sbr.rel (%p5733) target = $region36
      $region35: #{conv3d_softmax_maxpool2.1} parent=31 // pred_region
        _
      $region36: #{conv3d_softmax_maxpool2.1} parent=31 // pred_fallthru
        _
    $region32: #{conv3d_softmax_maxpool2.1} parent=5 // pred_fallthru
      _
    %p5736 = scmp.le.s32.totalorder 2, %s9
    // Predicated region
    $region37: #{conv3d_softmax_maxpool2.1} parent=5 // pred_check
      %p5737 = pneg %p5736
    $region38: #{conv3d_softmax_maxpool2.1} parent=5 // pred_check_branch
      %5739 = sbr.rel (%p5737) target = $region40
    $region39: #{conv3d_softmax_maxpool2.1} parent=5 // pred_region
      %s5740 = ssub.s32 %s9, 2
      // Predicated region
      $region41: #{conv3d_softmax_maxpool2.1} parent=39 // pred_check
        %p5741 = pneg %p106
      $region42: #{conv3d_softmax_maxpool2.1} parent=39 // pred_check_branch
        %5743 = sbr.rel (%p5741) target = $region44
      $region43: #{conv3d_softmax_maxpool2.1} parent=39 // pred_region
        %p5744 = scmp.lt.s32.totalorder %s15, 1
        %s5745 = scalar_select %p5744, %s15, 1
        %s5746 = smul.addr %s5745, 12
        %s5747 = smul.addr %s5746, 8
        %s5748 = scalar_lea.vmem %s3, %s5747
      $region44: #{conv3d_softmax_maxpool2.1} parent=39 // pred_fallthru
        _
    $region40: #{conv3d_softmax_maxpool2.1} parent=5 // pred_fallthru
      _
  $region6: #{conv3d_softmax_maxpool2.1} parent=0 // loop_footer
    %s13 = sadd.s32 1, %s9
  $region7: #{conv3d_softmax_maxpool2.1} parent=0 // loop_footer_branch
    %8 = sbr.rel target = $region3
  $region8: #{conv3d_softmax_maxpool2.1} parent=0 // loop_exit
    _

</llo_original>
